<compile_context>
chip_gen: v6e
topology: v6e:2x2x1
jax: 0.10.0
libtpu: 0.0.40
codegen_flags: <defaults>
</compile_context>

<pallas_src>
import functools

import jax
import jax.numpy as jnp
from jax.experimental import pallas as pl
from jax.experimental.pallas import tpu as pltpu

# Layer sizes (in_features, out_features) in forward order.
LAYER_DIMS = [
    (28 * 28, 128), (128, 64), (64, 12), (12, 3),      # encoder
    (3, 12), (12, 64), (64, 128), (128, 28 * 28),      # decoder
]
NUM_LAYERS = len(LAYER_DIMS)

D_IN = 28 * 28           # 784
D_OUT = 28 * 28          # 784
D_OUT_PAD = 7 * 128      # 896  (lane-dense output slab)
TB = 256                 # batch tile (rows per grid step)


def _autoencoder_kernel(x_ref, *refs):
    """refs = (w1, b1, w2, b2, ..., w8, b8, out_ref).

    Weights are bf16 [in, out] (last one padded to 896 cols), biases are f32
    [1, out].  Activations stay f32; only the MXU operands are cast to bf16.
    """
    param_refs = refs[:-1]
    out_ref = refs[-1]

    h = x_ref[...]  # f32 [TB, 784]
    for layer in range(NUM_LAYERS):
        w = param_refs[2 * layer][...]          # bf16 [din, dout]
        b = param_refs[2 * layer + 1][...]      # f32  [1, dout]
        h = jnp.dot(h.astype(jnp.bfloat16), w,
                    preferred_element_type=jnp.float32) + b
        if layer == NUM_LAYERS - 1:
            h = jax.nn.sigmoid(h)               # final decoder layer
        elif layer != 3:
            h = jnp.maximum(h, 0.0)             # ReLU (none after Linear(12->3))
    out_ref[...] = h.astype(out_ref.dtype)


def make_params(key):
    """Deterministic init matching nn.Linear shapes.

    PyTorch stores W as [out, in]; we keep the transpose [in, out].
    Init ~ U(-1/sqrt(in), 1/sqrt(in)), like torch's default."""
    params = []
    for (din, dout) in LAYER_DIMS:
        key, kw, kb = jax.random.split(key, 3)
        bound = 1.0 / float(din) ** 0.5
        w = jax.random.uniform(kw, (din, dout), jnp.float32, -bound, bound)
        b = jax.random.uniform(kb, (1, dout), jnp.float32, -bound, bound)
        params.append((w, b))
    return params


def pack_kernel_params(params):
    """bf16 weights, f32 biases; final layer padded from 784 -> 896 columns."""
    flat = []
    for idx, (w, b) in enumerate(params):
        if idx == NUM_LAYERS - 1:
            w = jnp.pad(w, ((0, 0), (0, D_OUT_PAD - w.shape[1])))
            b = jnp.pad(b, ((0, 0), (0, D_OUT_PAD - b.shape[1])))
        flat.append(w.astype(jnp.bfloat16))
        flat.append(b.astype(jnp.float32))
    return flat


@functools.partial(jax.jit, static_argnames=("tb",))
def autoencoder_forward(x, flat_params, tb=TB):
    B, D = x.shape
    assert D == D_IN

    # Pad the batch up to a multiple of the batch tile.
    n_tiles = pl.cdiv(B, tb)
    B_pad = n_tiles * tb
    if B_pad != B:
        x = jnp.pad(x, ((0, B_pad - B), (0, 0)))

    # Activations: one tile per grid step.  Params: constant index_map, so each
    # weight/bias is DMA'd once and stays VMEM-resident across all batch tiles.
    x_spec = pl.BlockSpec((tb, D_IN), lambda i: (i, 0))
    out_spec = pl.BlockSpec((tb, D_OUT_PAD), lambda i: (i, 0))
    param_specs = [pl.BlockSpec(p.shape, lambda i: (0, 0)) for p in flat_params]

    # Advisory cost estimate for XLA scheduling around the custom call.
    padded_dims = LAYER_DIMS[:-1] + [(128, D_OUT_PAD)]
    flops = 2 * B_pad * sum(din * dout for din, dout in padded_dims)
    transcendentals = B_pad * D_OUT_PAD                       # sigmoid
    bytes_accessed = (sum(p.size * p.dtype.itemsize for p in flat_params)
                      + B_pad * D_IN * 4 + B_pad * D_OUT_PAD * 4)
    cost = pl.CostEstimate(flops=flops, transcendentals=transcendentals,
                           bytes_accessed=bytes_accessed)

    out = pl.pallas_call(
        _autoencoder_kernel,
        out_shape=jax.ShapeDtypeStruct((B_pad, D_OUT_PAD), jnp.float32),
        grid=(n_tiles,),
        in_specs=[x_spec] + param_specs,
        out_specs=out_spec,
        compiler_params=pltpu.CompilerParams(
            dimension_semantics=("parallel",),   # megacore / v7x 2-TC sharding
        ),
        cost_estimate=cost,
    )(x, *flat_params)

    # Strip batch + lane padding.
    return out[:B, :D_OUT]


def reference_forward(x, params):
    """Pure-JAX reference with the same bf16-operand / f32-accumulate numerics."""
    h = x
    for layer, (w, b) in enumerate(params):
        h = jnp.dot(h.astype(jnp.bfloat16), w.astype(jnp.bfloat16),
                    preferred_element_type=jnp.float32) + b
        if layer == NUM_LAYERS - 1:
            h = jax.nn.sigmoid(h)
        elif layer != 3:
            h = jnp.maximum(h, 0.0)
    return h


if __name__ == "__main__":
    key = jax.random.PRNGKey(0)
    key, kx = jax.random.split(key)

    # Small demo shape; exercises both batch padding (384 -> 512) and a 2-step grid.
    B = 384
    x = jax.random.uniform(kx, (B, D_IN), jnp.float32)

    params = make_params(key)
    flat_params = pack_kernel_params(params)

    out = autoencoder_forward(x, flat_params)
    out = jax.block_until_ready(out)

    ref = reference_forward(x, params)
    assert out.shape == (B, D_OUT)
    assert jnp.allclose(out, ref, atol=2e-3, rtol=2e-3), "mismatch vs JAX reference"

    print("KERNEL_OK")
</pallas_src>

<mosaic_0001>
module attributes {stable_mosaic.version = 11 : i64} {
  func.func @_autoencoder_kernel(%arg0: i32, %arg1: memref<256x784xf32, #tpu.memory_space<vmem>>, %arg2: memref<784x128xbf16, #tpu.memory_space<vmem>>, %arg3: memref<1x128xf32, #tpu.memory_space<vmem>>, %arg4: memref<128x64xbf16, #tpu.memory_space<vmem>>, %arg5: memref<1x64xf32, #tpu.memory_space<vmem>>, %arg6: memref<64x12xbf16, #tpu.memory_space<vmem>>, %arg7: memref<1x12xf32, #tpu.memory_space<vmem>>, %arg8: memref<12x3xbf16, #tpu.memory_space<vmem>>, %arg9: memref<1x3xf32, #tpu.memory_space<vmem>>, %arg10: memref<3x12xbf16, #tpu.memory_space<vmem>>, %arg11: memref<1x12xf32, #tpu.memory_space<vmem>>, %arg12: memref<12x64xbf16, #tpu.memory_space<vmem>>, %arg13: memref<1x64xf32, #tpu.memory_space<vmem>>, %arg14: memref<64x128xbf16, #tpu.memory_space<vmem>>, %arg15: memref<1x128xf32, #tpu.memory_space<vmem>>, %arg16: memref<128x896xbf16, #tpu.memory_space<vmem>>, %arg17: memref<1x896xf32, #tpu.memory_space<vmem>>, %arg18: memref<256x896xf32, #tpu.memory_space<vmem>>) attributes {dimension_semantics = [#tpu.dimension_semantics<parallel>], iteration_bounds = array<i64: 2>, scalar_prefetch = 0 : i64, scratch_operands = 0 : i64, tpu.core_type = #tpu.core_type<tc>, window_params = [{transform_indices = @transform_0, window_bounds = array<i64: 256, 784>}, {pipeline_mode = #tpu.pipeline_mode<synchronous>, transform_indices = @transform_1, window_bounds = array<i64: 784, 128>}, {pipeline_mode = #tpu.pipeline_mode<synchronous>, transform_indices = @transform_2, window_bounds = array<i64: 1, 128>}, {pipeline_mode = #tpu.pipeline_mode<synchronous>, transform_indices = @transform_3, window_bounds = array<i64: 128, 64>}, {pipeline_mode = #tpu.pipeline_mode<synchronous>, transform_indices = @transform_4, window_bounds = array<i64: 1, 64>}, {pipeline_mode = #tpu.pipeline_mode<synchronous>, transform_indices = @transform_5, window_bounds = array<i64: 64, 12>}, {pipeline_mode = #tpu.pipeline_mode<synchronous>, transform_indices = @transform_6, window_bounds = array<i64: 1, 12>}, {pipeline_mode = #tpu.pipeline_mode<synchronous>, transform_indices = @transform_7, window_bounds = array<i64: 12, 3>}, {pipeline_mode = #tpu.pipeline_mode<synchronous>, transform_indices = @transform_8, window_bounds = array<i64: 1, 3>}, {pipeline_mode = #tpu.pipeline_mode<synchronous>, transform_indices = @transform_9, window_bounds = array<i64: 3, 12>}, {pipeline_mode = #tpu.pipeline_mode<synchronous>, transform_indices = @transform_10, window_bounds = array<i64: 1, 12>}, {pipeline_mode = #tpu.pipeline_mode<synchronous>, transform_indices = @transform_11, window_bounds = array<i64: 12, 64>}, {pipeline_mode = #tpu.pipeline_mode<synchronous>, transform_indices = @transform_12, window_bounds = array<i64: 1, 64>}, {pipeline_mode = #tpu.pipeline_mode<synchronous>, transform_indices = @transform_13, window_bounds = array<i64: 64, 128>}, {pipeline_mode = #tpu.pipeline_mode<synchronous>, transform_indices = @transform_14, window_bounds = array<i64: 1, 128>}, {pipeline_mode = #tpu.pipeline_mode<synchronous>, transform_indices = @transform_15, window_bounds = array<i64: 128, 896>}, {pipeline_mode = #tpu.pipeline_mode<synchronous>, transform_indices = @transform_16, window_bounds = array<i64: 1, 896>}, {transform_indices = @transform_17, window_bounds = array<i64: 256, 896>}]} {
    %c0 = arith.constant 0 : index
    %c0_0 = arith.constant 0 : index
    %0 = vector.load %arg1[%c0, %c0_0] : memref<256x784xf32, #tpu.memory_space<vmem>>, vector<256x784xf32>
    %c0_1 = arith.constant 0 : index
    %c0_2 = arith.constant 0 : index
    %1 = vector.load %arg2[%c0_1, %c0_2] : memref<784x128xbf16, #tpu.memory_space<vmem>>, vector<784x128xbf16>
    %c0_3 = arith.constant 0 : index
    %c0_4 = arith.constant 0 : index
    %2 = vector.load %arg3[%c0_3, %c0_4] : memref<1x128xf32, #tpu.memory_space<vmem>>, vector<1x128xf32>
    %3 = arith.truncf %0 : vector<256x784xf32> to vector<256x784xbf16>
    %cst = arith.constant dense<0.000000e+00> : vector<256x128xf32>
    %4 = tpu.matmul %3, %1, %cst {dimension_numbers = #tpu.dot_dimension_numbers<[1], [0], [0], [1], [0, 0, 1, 1], [], []>} : vector<256x784xbf16>, vector<784x128xbf16>, vector<256x128xf32> -> vector<256x128xf32>
    %5 = vector.broadcast %2 : vector<1x128xf32> to vector<256x128xf32>
    %6 = arith.addf %4, %5 : vector<256x128xf32>
    %cst_5 = arith.constant 0.000000e+00 : f32
    %7 = vector.broadcast %cst_5 : f32 to vector<256x128xf32>
    %8 = arith.maximumf %6, %7 : vector<256x128xf32>
    %c0_6 = arith.constant 0 : index
    %c0_7 = arith.constant 0 : index
    %9 = vector.load %arg4[%c0_6, %c0_7] : memref<128x64xbf16, #tpu.memory_space<vmem>>, vector<128x64xbf16>
    %c0_8 = arith.constant 0 : index
    %c0_9 = arith.constant 0 : index
    %10 = vector.load %arg5[%c0_8, %c0_9] : memref<1x64xf32, #tpu.memory_space<vmem>>, vector<1x64xf32>
    %11 = arith.truncf %8 : vector<256x128xf32> to vector<256x128xbf16>
    %cst_10 = arith.constant dense<0.000000e+00> : vector<256x64xf32>
    %12 = tpu.matmul %11, %9, %cst_10 {dimension_numbers = #tpu.dot_dimension_numbers<[1], [0], [0], [1], [0, 0, 1, 1], [], []>} : vector<256x128xbf16>, vector<128x64xbf16>, vector<256x64xf32> -> vector<256x64xf32>
    %13 = vector.broadcast %10 : vector<1x64xf32> to vector<256x64xf32>
    %14 = arith.addf %12, %13 : vector<256x64xf32>
    %cst_11 = arith.constant 0.000000e+00 : f32
    %15 = vector.broadcast %cst_11 : f32 to vector<256x64xf32>
    %16 = arith.maximumf %14, %15 : vector<256x64xf32>
    %c0_12 = arith.constant 0 : index
    %c0_13 = arith.constant 0 : index
    %17 = vector.load %arg6[%c0_12, %c0_13] : memref<64x12xbf16, #tpu.memory_space<vmem>>, vector<64x12xbf16>
    %c0_14 = arith.constant 0 : index
    %c0_15 = arith.constant 0 : index
    %18 = vector.load %arg7[%c0_14, %c0_15] : memref<1x12xf32, #tpu.memory_space<vmem>>, vector<1x12xf32>
    %19 = arith.truncf %16 : vector<256x64xf32> to vector<256x64xbf16>
    %cst_16 = arith.constant dense<0.000000e+00> : vector<256x12xf32>
    %20 = tpu.matmul %19, %17, %cst_16 {dimension_numbers = #tpu.dot_dimension_numbers<[1], [0], [0], [1], [0, 0, 1, 1], [], []>} : vector<256x64xbf16>, vector<64x12xbf16>, vector<256x12xf32> -> vector<256x12xf32>
    %21 = vector.broadcast %18 : vector<1x12xf32> to vector<256x12xf32>
    %22 = arith.addf %20, %21 : vector<256x12xf32>
    %cst_17 = arith.constant 0.000000e+00 : f32
    %23 = vector.broadcast %cst_17 : f32 to vector<256x12xf32>
    %24 = arith.maximumf %22, %23 : vector<256x12xf32>
    %c0_18 = arith.constant 0 : index
    %c0_19 = arith.constant 0 : index
    %25 = vector.load %arg8[%c0_18, %c0_19] : memref<12x3xbf16, #tpu.memory_space<vmem>>, vector<12x3xbf16>
    %c0_20 = arith.constant 0 : index
    %c0_21 = arith.constant 0 : index
    %26 = vector.load %arg9[%c0_20, %c0_21] : memref<1x3xf32, #tpu.memory_space<vmem>>, vector<1x3xf32>
    %27 = arith.truncf %24 : vector<256x12xf32> to vector<256x12xbf16>
    %cst_22 = arith.constant dense<0.000000e+00> : vector<256x3xf32>
    %28 = tpu.matmul %27, %25, %cst_22 {dimension_numbers = #tpu.dot_dimension_numbers<[1], [0], [0], [1], [0, 0, 1, 1], [], []>} : vector<256x12xbf16>, vector<12x3xbf16>, vector<256x3xf32> -> vector<256x3xf32>
    %29 = vector.broadcast %26 : vector<1x3xf32> to vector<256x3xf32>
    %30 = arith.addf %28, %29 : vector<256x3xf32>
    %c0_23 = arith.constant 0 : index
    %c0_24 = arith.constant 0 : index
    %31 = vector.load %arg10[%c0_23, %c0_24] : memref<3x12xbf16, #tpu.memory_space<vmem>>, vector<3x12xbf16>
    %c0_25 = arith.constant 0 : index
    %c0_26 = arith.constant 0 : index
    %32 = vector.load %arg11[%c0_25, %c0_26] : memref<1x12xf32, #tpu.memory_space<vmem>>, vector<1x12xf32>
    %33 = arith.truncf %30 : vector<256x3xf32> to vector<256x3xbf16>
    %cst_27 = arith.constant dense<0.000000e+00> : vector<256x12xf32>
    %34 = tpu.matmul %33, %31, %cst_27 {dimension_numbers = #tpu.dot_dimension_numbers<[1], [0], [0], [1], [0, 0, 1, 1], [], []>} : vector<256x3xbf16>, vector<3x12xbf16>, vector<256x12xf32> -> vector<256x12xf32>
    %35 = vector.broadcast %32 : vector<1x12xf32> to vector<256x12xf32>
    %36 = arith.addf %34, %35 : vector<256x12xf32>
    %cst_28 = arith.constant 0.000000e+00 : f32
    %37 = vector.broadcast %cst_28 : f32 to vector<256x12xf32>
    %38 = arith.maximumf %36, %37 : vector<256x12xf32>
    %c0_29 = arith.constant 0 : index
    %c0_30 = arith.constant 0 : index
    %39 = vector.load %arg12[%c0_29, %c0_30] : memref<12x64xbf16, #tpu.memory_space<vmem>>, vector<12x64xbf16>
    %c0_31 = arith.constant 0 : index
    %c0_32 = arith.constant 0 : index
    %40 = vector.load %arg13[%c0_31, %c0_32] : memref<1x64xf32, #tpu.memory_space<vmem>>, vector<1x64xf32>
    %41 = arith.truncf %38 : vector<256x12xf32> to vector<256x12xbf16>
    %cst_33 = arith.constant dense<0.000000e+00> : vector<256x64xf32>
    %42 = tpu.matmul %41, %39, %cst_33 {dimension_numbers = #tpu.dot_dimension_numbers<[1], [0], [0], [1], [0, 0, 1, 1], [], []>} : vector<256x12xbf16>, vector<12x64xbf16>, vector<256x64xf32> -> vector<256x64xf32>
    %43 = vector.broadcast %40 : vector<1x64xf32> to vector<256x64xf32>
    %44 = arith.addf %42, %43 : vector<256x64xf32>
    %cst_34 = arith.constant 0.000000e+00 : f32
    %45 = vector.broadcast %cst_34 : f32 to vector<256x64xf32>
    %46 = arith.maximumf %44, %45 : vector<256x64xf32>
    %c0_35 = arith.constant 0 : index
    %c0_36 = arith.constant 0 : index
    %47 = vector.load %arg14[%c0_35, %c0_36] : memref<64x128xbf16, #tpu.memory_space<vmem>>, vector<64x128xbf16>
    %c0_37 = arith.constant 0 : index
    %c0_38 = arith.constant 0 : index
    %48 = vector.load %arg15[%c0_37, %c0_38] : memref<1x128xf32, #tpu.memory_space<vmem>>, vector<1x128xf32>
    %49 = arith.truncf %46 : vector<256x64xf32> to vector<256x64xbf16>
    %cst_39 = arith.constant dense<0.000000e+00> : vector<256x128xf32>
    %50 = tpu.matmul %49, %47, %cst_39 {dimension_numbers = #tpu.dot_dimension_numbers<[1], [0], [0], [1], [0, 0, 1, 1], [], []>} : vector<256x64xbf16>, vector<64x128xbf16>, vector<256x128xf32> -> vector<256x128xf32>
    %51 = vector.broadcast %48 : vector<1x128xf32> to vector<256x128xf32>
    %52 = arith.addf %50, %51 : vector<256x128xf32>
    %cst_40 = arith.constant 0.000000e+00 : f32
    %53 = vector.broadcast %cst_40 : f32 to vector<256x128xf32>
    %54 = arith.maximumf %52, %53 : vector<256x128xf32>
    %c0_41 = arith.constant 0 : index
    %c0_42 = arith.constant 0 : index
    %55 = vector.load %arg16[%c0_41, %c0_42] : memref<128x896xbf16, #tpu.memory_space<vmem>>, vector<128x896xbf16>
    %c0_43 = arith.constant 0 : index
    %c0_44 = arith.constant 0 : index
    %56 = vector.load %arg17[%c0_43, %c0_44] : memref<1x896xf32, #tpu.memory_space<vmem>>, vector<1x896xf32>
    %57 = arith.truncf %54 : vector<256x128xf32> to vector<256x128xbf16>
    %cst_45 = arith.constant dense<0.000000e+00> : vector<256x896xf32>
    %58 = tpu.matmul %57, %55, %cst_45 {dimension_numbers = #tpu.dot_dimension_numbers<[1], [0], [0], [1], [0, 0, 1, 1], [], []>} : vector<256x128xbf16>, vector<128x896xbf16>, vector<256x896xf32> -> vector<256x896xf32>
    %59 = vector.broadcast %56 : vector<1x896xf32> to vector<256x896xf32>
    %60 = arith.addf %58, %59 : vector<256x896xf32>
    %61 = arith.negf %60 : vector<256x896xf32>
    %62 = math.exp %61 : vector<256x896xf32>
    %cst_46 = arith.constant 1.000000e+00 : f32
    %63 = vector.broadcast %cst_46 : f32 to vector<256x896xf32>
    %64 = arith.addf %63, %62 : vector<256x896xf32>
    %65 = arith.divf %63, %64 : vector<256x896xf32>
    %c0_47 = arith.constant 0 : index
    %c0_48 = arith.constant 0 : index
    %66 = vector.load %arg18[%c0_47, %c0_48] : memref<256x896xf32, #tpu.memory_space<vmem>>, vector<256x896xf32>
    tpu.vector_store %arg18[%c0_47, %c0_48], %65 {strides = array<i32>} : memref<256x896xf32, #tpu.memory_space<vmem>>, vector<256x896xf32>,
    return
  }
  func.func @transform_0(%arg0: i32) -> (i32, i32) {
    %c0_i32 = arith.constant 0 : i32
    %c0_i32_0 = arith.constant 0 : i32
    return %arg0, %c0_i32 : i32, i32
  }
  func.func @transform_1(%arg0: i32) -> (i32, i32) {
    %c0_i32 = arith.constant 0 : i32
    %c0_i32_0 = arith.constant 0 : i32
    %c0_i32_1 = arith.constant 0 : i32
    return %c0_i32, %c0_i32_0 : i32, i32
  }
  func.func @transform_2(%arg0: i32) -> (i32, i32) {
    %c0_i32 = arith.constant 0 : i32
    %c0_i32_0 = arith.constant 0 : i32
    %c0_i32_1 = arith.constant 0 : i32
    return %c0_i32, %c0_i32_0 : i32, i32
  }
  func.func @transform_3(%arg0: i32) -> (i32, i32) {
    %c0_i32 = arith.constant 0 : i32
    %c0_i32_0 = arith.constant 0 : i32
    %c0_i32_1 = arith.constant 0 : i32
    return %c0_i32, %c0_i32_0 : i32, i32
  }
  func.func @transform_4(%arg0: i32) -> (i32, i32) {
    %c0_i32 = arith.constant 0 : i32
    %c0_i32_0 = arith.constant 0 : i32
    %c0_i32_1 = arith.constant 0 : i32
    return %c0_i32, %c0_i32_0 : i32, i32
  }
  func.func @transform_5(%arg0: i32) -> (i32, i32) {
    %c0_i32 = arith.constant 0 : i32
    %c0_i32_0 = arith.constant 0 : i32
    %c0_i32_1 = arith.constant 0 : i32
    return %c0_i32, %c0_i32_0 : i32, i32
  }
  func.func @transform_6(%arg0: i32) -> (i32, i32) {
    %c0_i32 = arith.constant 0 : i32
    %c0_i32_0 = arith.constant 0 : i32
    %c0_i32_1 = arith.constant 0 : i32
    return %c0_i32, %c0_i32_0 : i32, i32
  }
  func.func @transform_7(%arg0: i32) -> (i32, i32) {
    %c0_i32 = arith.constant 0 : i32
    %c0_i32_0 = arith.constant 0 : i32
    %c0_i32_1 = arith.constant 0 : i32
    return %c0_i32, %c0_i32_0 : i32, i32
  }
  func.func @transform_8(%arg0: i32) -> (i32, i32) {
    %c0_i32 = arith.constant 0 : i32
    %c0_i32_0 = arith.constant 0 : i32
    %c0_i32_1 = arith.constant 0 : i32
    return %c0_i32, %c0_i32_0 : i32, i32
  }
  func.func @transform_9(%arg0: i32) -> (i32, i32) {
    %c0_i32 = arith.constant 0 : i32
    %c0_i32_0 = arith.constant 0 : i32
    %c0_i32_1 = arith.constant 0 : i32
    return %c0_i32, %c0_i32_0 : i32, i32
  }
  func.func @transform_10(%arg0: i32) -> (i32, i32) {
    %c0_i32 = arith.constant 0 : i32
    %c0_i32_0 = arith.constant 0 : i32
    %c0_i32_1 = arith.constant 0 : i32
    return %c0_i32, %c0_i32_0 : i32, i32
  }
  func.func @transform_11(%arg0: i32) -> (i32, i32) {
    %c0_i32 = arith.constant 0 : i32
    %c0_i32_0 = arith.constant 0 : i32
    %c0_i32_1 = arith.constant 0 : i32
    return %c0_i32, %c0_i32_0 : i32, i32
  }
  func.func @transform_12(%arg0: i32) -> (i32, i32) {
    %c0_i32 = arith.constant 0 : i32
    %c0_i32_0 = arith.constant 0 : i32
    %c0_i32_1 = arith.constant 0 : i32
    return %c0_i32, %c0_i32_0 : i32, i32
  }
  func.func @transform_13(%arg0: i32) -> (i32, i32) {
    %c0_i32 = arith.constant 0 : i32
    %c0_i32_0 = arith.constant 0 : i32
    %c0_i32_1 = arith.constant 0 : i32
    return %c0_i32, %c0_i32_0 : i32, i32
  }
  func.func @transform_14(%arg0: i32) -> (i32, i32) {
    %c0_i32 = arith.constant 0 : i32
    %c0_i32_0 = arith.constant 0 : i32
    %c0_i32_1 = arith.constant 0 : i32
    return %c0_i32, %c0_i32_0 : i32, i32
  }
  func.func @transform_15(%arg0: i32) -> (i32, i32) {
    %c0_i32 = arith.constant 0 : i32
    %c0_i32_0 = arith.constant 0 : i32
    %c0_i32_1 = arith.constant 0 : i32
    return %c0_i32, %c0_i32_0 : i32, i32
  }
  func.func @transform_16(%arg0: i32) -> (i32, i32) {
    %c0_i32 = arith.constant 0 : i32
    %c0_i32_0 = arith.constant 0 : i32
    %c0_i32_1 = arith.constant 0 : i32
    return %c0_i32, %c0_i32_0 : i32, i32
  }
  func.func @transform_17(%arg0: i32) -> (i32, i32) {
    %c0_i32 = arith.constant 0 : i32
    %c0_i32_0 = arith.constant 0 : i32
    return %arg0, %c0_i32 : i32, i32
  }
}

</mosaic_0001>

<llo_original>
// kernel: autoencoder_forward.1
$region0: #{autoencoder_forward.1}
  #allocation0 [shape = 'u32[]', space=smem, size = 0x4, offset = 0x4, fixed_abs, tag = 'smem constant byte address 0x4 - core index']
  #allocation1 [shape = 'u32[144,128]{1,0:T(1,128)}', space=vmem, size = 0x12000, scoped, tag = 'internal scratch']
  %s0 = inlined_call_operand.vmem [shape: f32[512,784], index: 0, kind: input, shape index: {}]
  %s1 = inlined_call_operand.vmem [shape: bf16[784,128], index: 1, kind: input, shape index: {}]
  %s2 = inlined_call_operand.vmem [shape: f32[1,128], index: 2, kind: input, shape index: {}]
  %s3 = inlined_call_operand.vmem [shape: bf16[128,64], index: 3, kind: input, shape index: {}]
  %s4 = inlined_call_operand.vmem [shape: f32[1,64], index: 4, kind: input, shape index: {}]
  %s5 = inlined_call_operand.vmem [shape: bf16[64,12], index: 5, kind: input, shape index: {}]
  %s6 = inlined_call_operand.vmem [shape: f32[1,12], index: 6, kind: input, shape index: {}]
  %s7 = inlined_call_operand.vmem [shape: bf16[12,3], index: 7, kind: input, shape index: {}]
  %s8 = inlined_call_operand.vmem [shape: f32[1,3], index: 8, kind: input, shape index: {}]
  %s9 = inlined_call_operand.vmem [shape: bf16[3,12], index: 9, kind: input, shape index: {}]
  %s10 = inlined_call_operand.vmem [shape: f32[1,12], index: 10, kind: input, shape index: {}]
  %s11 = inlined_call_operand.vmem [shape: bf16[12,64], index: 11, kind: input, shape index: {}]
  %s12 = inlined_call_operand.vmem [shape: f32[1,64], index: 12, kind: input, shape index: {}]
  %s13 = inlined_call_operand.vmem [shape: bf16[64,128], index: 13, kind: input, shape index: {}]
  %s14 = inlined_call_operand.vmem [shape: f32[1,128], index: 14, kind: input, shape index: {}]
  %s15 = inlined_call_operand.vmem [shape: bf16[128,896], index: 15, kind: input, shape index: {}]
  %s16 = inlined_call_operand.vmem [shape: f32[1,896], index: 16, kind: input, shape index: {}]
  %s17 = inlined_call_operand.vmem [shape: f32[512,896], index: 17, kind: output, shape index: {}]
  %s18 = sld [smem:[#allocation0]]
  $region101: #{autoencoder_forward.1} parent=0
    _
  %s20 = ssub.s32 1, %s18
  %s21 = scalar_select 0, %s20, %s18
  loop: start=0, step=1, limit=4
  $region2: #{autoencoder_forward.1} parent=0 // loop_pre_header
    _
  $region3: #{autoencoder_forward.1} parent=0 // loop_header
    %s23 = sphi 0, %s27
    %p24 = scmp.ge.s32.totalorder %s23, 4
    %s33 = sphi 0, %s35
    %s36 = sphi 0, %s33
    %s37 = sphi 0, %s36
    %s53 = sphi 0, %s37
    %s57 = sphi 0, %s57
    %s59 = sphi 0, %s57
    %s60 = sphi 0, %s59
    %s74 = sphi 0, %s60
    %s78 = sphi 0, %s78
    %s80 = sphi 0, %s78
    %s81 = sphi 0, %s80
    %s95 = sphi 0, %s81
    %s99 = sphi 0, %s99
    %s101 = sphi 0, %s99
    %s102 = sphi 0, %s101
    %s116 = sphi 0, %s102
    %s120 = sphi 0, %s120
    %s122 = sphi 0, %s120
    %s123 = sphi 0, %s122
    %s137 = sphi 0, %s123
    %s141 = sphi 0, %s141
    %s143 = sphi 0, %s141
    %s144 = sphi 0, %s143
    %s158 = sphi 0, %s144
    %s162 = sphi 0, %s162
    %s164 = sphi 0, %s162
    %s165 = sphi 0, %s164
    %s179 = sphi 0, %s165
    %s183 = sphi 0, %s183
    %s185 = sphi 0, %s183
    %s186 = sphi 0, %s185
    %s200 = sphi 0, %s186
    %s204 = sphi 0, %s204
    %s206 = sphi 0, %s204
    %s207 = sphi 0, %s206
    %s221 = sphi 0, %s207
    %s225 = sphi 0, %s225
    %s227 = sphi 0, %s225
    %s228 = sphi 0, %s227
    %s242 = sphi 0, %s228
    %s246 = sphi 0, %s246
    %s248 = sphi 0, %s246
    %s249 = sphi 0, %s248
    %s263 = sphi 0, %s249
    %s267 = sphi 0, %s267
    %s269 = sphi 0, %s267
    %s270 = sphi 0, %s269
    %s284 = sphi 0, %s270
    %s288 = sphi 0, %s288
    %s290 = sphi 0, %s288
    %s291 = sphi 0, %s290
    %s305 = sphi 0, %s291
    %s309 = sphi 0, %s309
    %s311 = sphi 0, %s309
    %s312 = sphi 0, %s311
    %s326 = sphi 0, %s312
    %s330 = sphi 0, %s330
    %s332 = sphi 0, %s330
    %s333 = sphi 0, %s332
    %s347 = sphi 0, %s333
    %s351 = sphi 0, %s351
    %s353 = sphi 0, %s351
    %s354 = sphi 0, %s353
    %s368 = sphi 0, %s354
    %s372 = sphi 0, %s372
    %s374 = sphi 0, %s372
    %s375 = sphi 0, %s374
    %s389 = sphi 0, %s375
    %s395 = sphi 0, %s397
    %s398 = sphi 0, %s395
    %s399 = sphi 0, %s398
    %s415 = sphi 0, %s399
  $region4: #{autoencoder_forward.1} parent=0 // loop_header_branch
    %26 = sbr.rel (%p24) target = $region8
  $region5: #{autoencoder_forward.1} parent=0 // loop_body
    %s28 = ssub.s32 %s23, 1
    %s29 = ssub.s32 %s23, 2
    %s30 = sadd.s32 %s23, 1
    %s31 = ssub.s32 %s23, %s30
    %p32 = scmp.eq.s32.totalorder %s31, 0
    %s34 = sadd.s32 %s33, 1
    %s35 = scalar_select %p32, %s33, %s34
    %p38 = pneg %p32
    %p39 = scmp.eq.s32.totalorder %s23, 1
    %p40 = por %p38, %p39
    %p41 = scmp.ne.s32.totalorder %s33, %s36
    %p42 = scmp.eq.s32.totalorder %s23, 0
    %p43 = por %p41, %p42
    %p44 = scmp.ne.s32.totalorder %s33, %s36
    %p45 = scmp.eq.s32.totalorder %s28, 1
    %p46 = por %p44, %p45
    %p47 = scmp.ne.s32.totalorder %s36, %s37
    %p48 = scmp.eq.s32.totalorder %s28, 0
    %p49 = por %p47, %p48
    %p50 = scmp.ne.s32.totalorder %s36, %s37
    %p51 = scmp.eq.s32.totalorder %s29, 1
    %p52 = por %p50, %p51
    %p54 = scmp.ne.s32.totalorder %s37, %s53
    %p55 = scmp.eq.s32.totalorder %s29, 0
    %p56 = por %p54, %p55
    %s58 = sadd.s32 %s57, 1
    %p61 = scmp.eq.s32.totalorder %s23, 1
    %p62 = scmp.ne.s32.totalorder %s57, %s59
    %p63 = scmp.eq.s32.totalorder %s23, 0
    %p64 = por %p62, %p63
    %p65 = scmp.ne.s32.totalorder %s57, %s59
    %p66 = scmp.eq.s32.totalorder %s28, 1
    %p67 = por %p65, %p66
    %p68 = scmp.ne.s32.totalorder %s59, %s60
    %p69 = scmp.eq.s32.totalorder %s28, 0
    %p70 = por %p68, %p69
    %p71 = scmp.ne.s32.totalorder %s59, %s60
    %p72 = scmp.eq.s32.totalorder %s29, 1
    %p73 = por %p71, %p72
    %p75 = scmp.ne.s32.totalorder %s60, %s74
    %p76 = scmp.eq.s32.totalorder %s29, 0
    %p77 = por %p75, %p76
    %s79 = sadd.s32 %s78, 1
    %p82 = scmp.eq.s32.totalorder %s23, 1
    %p83 = scmp.ne.s32.totalorder %s78, %s80
    %p84 = scmp.eq.s32.totalorder %s23, 0
    %p85 = por %p83, %p84
    %p86 = scmp.ne.s32.totalorder %s78, %s80
    %p87 = scmp.eq.s32.totalorder %s28, 1
    %p88 = por %p86, %p87
    %p89 = scmp.ne.s32.totalorder %s80, %s81
    %p90 = scmp.eq.s32.totalorder %s28, 0
    %p91 = por %p89, %p90
    %p92 = scmp.ne.s32.totalorder %s80, %s81
    %p93 = scmp.eq.s32.totalorder %s29, 1
    %p94 = por %p92, %p93
    %p96 = scmp.ne.s32.totalorder %s81, %s95
    %p97 = scmp.eq.s32.totalorder %s29, 0
    %p98 = por %p96, %p97
    %s100 = sadd.s32 %s99, 1
    %p103 = scmp.eq.s32.totalorder %s23, 1
    %p104 = scmp.ne.s32.totalorder %s99, %s101
    %p105 = scmp.eq.s32.totalorder %s23, 0
    %p106 = por %p104, %p105
    %p107 = scmp.ne.s32.totalorder %s99, %s101
    %p108 = scmp.eq.s32.totalorder %s28, 1
    %p109 = por %p107, %p108
    %p110 = scmp.ne.s32.totalorder %s101, %s102
    %p111 = scmp.eq.s32.totalorder %s28, 0
    %p112 = por %p110, %p111
    %p113 = scmp.ne.s32.totalorder %s101, %s102
    %p114 = scmp.eq.s32.totalorder %s29, 1
    %p115 = por %p113, %p114
    %p117 = scmp.ne.s32.totalorder %s102, %s116
    %p118 = scmp.eq.s32.totalorder %s29, 0
    %p119 = por %p117, %p118
    %s121 = sadd.s32 %s120, 1
    %p124 = scmp.eq.s32.totalorder %s23, 1
    %p125 = scmp.ne.s32.totalorder %s120, %s122
    %p126 = scmp.eq.s32.totalorder %s23, 0
    %p127 = por %p125, %p126
    %p128 = scmp.ne.s32.totalorder %s120, %s122
    %p129 = scmp.eq.s32.totalorder %s28, 1
    %p130 = por %p128, %p129
    %p131 = scmp.ne.s32.totalorder %s122, %s123
    %p132 = scmp.eq.s32.totalorder %s28, 0
    %p133 = por %p131, %p132
    %p134 = scmp.ne.s32.totalorder %s122, %s123
    %p135 = scmp.eq.s32.totalorder %s29, 1
    %p136 = por %p134, %p135
    %p138 = scmp.ne.s32.totalorder %s123, %s137
    %p139 = scmp.eq.s32.totalorder %s29, 0
    %p140 = por %p138, %p139
    %s142 = sadd.s32 %s141, 1
    %p145 = scmp.eq.s32.totalorder %s23, 1
    %p146 = scmp.ne.s32.totalorder %s141, %s143
    %p147 = scmp.eq.s32.totalorder %s23, 0
    %p148 = por %p146, %p147
    %p149 = scmp.ne.s32.totalorder %s141, %s143
    %p150 = scmp.eq.s32.totalorder %s28, 1
    %p151 = por %p149, %p150
    %p152 = scmp.ne.s32.totalorder %s143, %s144
    %p153 = scmp.eq.s32.totalorder %s28, 0
    %p154 = por %p152, %p153
    %p155 = scmp.ne.s32.totalorder %s143, %s144
    %p156 = scmp.eq.s32.totalorder %s29, 1
    %p157 = por %p155, %p156
    %p159 = scmp.ne.s32.totalorder %s144, %s158
    %p160 = scmp.eq.s32.totalorder %s29, 0
    %p161 = por %p159, %p160
    %s163 = sadd.s32 %s162, 1
    %p166 = scmp.eq.s32.totalorder %s23, 1
    %p167 = scmp.ne.s32.totalorder %s162, %s164
    %p168 = scmp.eq.s32.totalorder %s23, 0
    %p169 = por %p167, %p168
    %p170 = scmp.ne.s32.totalorder %s162, %s164
    %p171 = scmp.eq.s32.totalorder %s28, 1
    %p172 = por %p170, %p171
    %p173 = scmp.ne.s32.totalorder %s164, %s165
    %p174 = scmp.eq.s32.totalorder %s28, 0
    %p175 = por %p173, %p174
    %p176 = scmp.ne.s32.totalorder %s164, %s165
    %p177 = scmp.eq.s32.totalorder %s29, 1
    %p178 = por %p176, %p177
    %p180 = scmp.ne.s32.totalorder %s165, %s179
    %p181 = scmp.eq.s32.totalorder %s29, 0
    %p182 = por %p180, %p181
    %s184 = sadd.s32 %s183, 1
    %p187 = scmp.eq.s32.totalorder %s23, 1
    %p188 = scmp.ne.s32.totalorder %s183, %s185
    %p189 = scmp.eq.s32.totalorder %s23, 0
    %p190 = por %p188, %p189
    %p191 = scmp.ne.s32.totalorder %s183, %s185
    %p192 = scmp.eq.s32.totalorder %s28, 1
    %p193 = por %p191, %p192
    %p194 = scmp.ne.s32.totalorder %s185, %s186
    %p195 = scmp.eq.s32.totalorder %s28, 0
    %p196 = por %p194, %p195
    %p197 = scmp.ne.s32.totalorder %s185, %s186
    %p198 = scmp.eq.s32.totalorder %s29, 1
    %p199 = por %p197, %p198
    %p201 = scmp.ne.s32.totalorder %s186, %s200
    %p202 = scmp.eq.s32.totalorder %s29, 0
    %p203 = por %p201, %p202
    %s205 = sadd.s32 %s204, 1
    %p208 = scmp.eq.s32.totalorder %s23, 1
    %p209 = scmp.ne.s32.totalorder %s204, %s206
    %p210 = scmp.eq.s32.totalorder %s23, 0
    %p211 = por %p209, %p210
    %p212 = scmp.ne.s32.totalorder %s204, %s206
    %p213 = scmp.eq.s32.totalorder %s28, 1
    %p214 = por %p212, %p213
    %p215 = scmp.ne.s32.totalorder %s206, %s207
    %p216 = scmp.eq.s32.totalorder %s28, 0
    %p217 = por %p215, %p216
    %p218 = scmp.ne.s32.totalorder %s206, %s207
    %p219 = scmp.eq.s32.totalorder %s29, 1
    %p220 = por %p218, %p219
    %p222 = scmp.ne.s32.totalorder %s207, %s221
    %p223 = scmp.eq.s32.totalorder %s29, 0
    %p224 = por %p222, %p223
    %s226 = sadd.s32 %s225, 1
    %p229 = scmp.eq.s32.totalorder %s23, 1
    %p230 = scmp.ne.s32.totalorder %s225, %s227
    %p231 = scmp.eq.s32.totalorder %s23, 0
    %p232 = por %p230, %p231
    %p233 = scmp.ne.s32.totalorder %s225, %s227
    %p234 = scmp.eq.s32.totalorder %s28, 1
    %p235 = por %p233, %p234
    %p236 = scmp.ne.s32.totalorder %s227, %s228
    %p237 = scmp.eq.s32.totalorder %s28, 0
    %p238 = por %p236, %p237
    %p239 = scmp.ne.s32.totalorder %s227, %s228
    %p240 = scmp.eq.s32.totalorder %s29, 1
    %p241 = por %p239, %p240
    %p243 = scmp.ne.s32.totalorder %s228, %s242
    %p244 = scmp.eq.s32.totalorder %s29, 0
    %p245 = por %p243, %p244
    %s247 = sadd.s32 %s246, 1
    %p250 = scmp.eq.s32.totalorder %s23, 1
    %p251 = scmp.ne.s32.totalorder %s246, %s248
    %p252 = scmp.eq.s32.totalorder %s23, 0
    %p253 = por %p251, %p252
    %p254 = scmp.ne.s32.totalorder %s246, %s248
    %p255 = scmp.eq.s32.totalorder %s28, 1
    %p256 = por %p254, %p255
    %p257 = scmp.ne.s32.totalorder %s248, %s249
    %p258 = scmp.eq.s32.totalorder %s28, 0
    %p259 = por %p257, %p258
    %p260 = scmp.ne.s32.totalorder %s248, %s249
    %p261 = scmp.eq.s32.totalorder %s29, 1
    %p262 = por %p260, %p261
    %p264 = scmp.ne.s32.totalorder %s249, %s263
    %p265 = scmp.eq.s32.totalorder %s29, 0
    %p266 = por %p264, %p265
    %s268 = sadd.s32 %s267, 1
    %p271 = scmp.eq.s32.totalorder %s23, 1
    %p272 = scmp.ne.s32.totalorder %s267, %s269
    %p273 = scmp.eq.s32.totalorder %s23, 0
    %p274 = por %p272, %p273
    %p275 = scmp.ne.s32.totalorder %s267, %s269
    %p276 = scmp.eq.s32.totalorder %s28, 1
    %p277 = por %p275, %p276
    %p278 = scmp.ne.s32.totalorder %s269, %s270
    %p279 = scmp.eq.s32.totalorder %s28, 0
    %p280 = por %p278, %p279
    %p281 = scmp.ne.s32.totalorder %s269, %s270
    %p282 = scmp.eq.s32.totalorder %s29, 1
    %p283 = por %p281, %p282
    %p285 = scmp.ne.s32.totalorder %s270, %s284
    %p286 = scmp.eq.s32.totalorder %s29, 0
    %p287 = por %p285, %p286
    %s289 = sadd.s32 %s288, 1
    %p292 = scmp.eq.s32.totalorder %s23, 1
    %p293 = scmp.ne.s32.totalorder %s288, %s290
    %p294 = scmp.eq.s32.totalorder %s23, 0
    %p295 = por %p293, %p294
    %p296 = scmp.ne.s32.totalorder %s288, %s290
    %p297 = scmp.eq.s32.totalorder %s28, 1
    %p298 = por %p296, %p297
    %p299 = scmp.ne.s32.totalorder %s290, %s291
    %p300 = scmp.eq.s32.totalorder %s28, 0
    %p301 = por %p299, %p300
    %p302 = scmp.ne.s32.totalorder %s290, %s291
    %p303 = scmp.eq.s32.totalorder %s29, 1
    %p304 = por %p302, %p303
    %p306 = scmp.ne.s32.totalorder %s291, %s305
    %p307 = scmp.eq.s32.totalorder %s29, 0
    %p308 = por %p306, %p307
    %s310 = sadd.s32 %s309, 1
    %p313 = scmp.eq.s32.totalorder %s23, 1
    %p314 = scmp.ne.s32.totalorder %s309, %s311
    %p315 = scmp.eq.s32.totalorder %s23, 0
    %p316 = por %p314, %p315
    %p317 = scmp.ne.s32.totalorder %s309, %s311
    %p318 = scmp.eq.s32.totalorder %s28, 1
    %p319 = por %p317, %p318
    %p320 = scmp.ne.s32.totalorder %s311, %s312
    %p321 = scmp.eq.s32.totalorder %s28, 0
    %p322 = por %p320, %p321
    %p323 = scmp.ne.s32.totalorder %s311, %s312
    %p324 = scmp.eq.s32.totalorder %s29, 1
    %p325 = por %p323, %p324
    %p327 = scmp.ne.s32.totalorder %s312, %s326
    %p328 = scmp.eq.s32.totalorder %s29, 0
    %p329 = por %p327, %p328
    %s331 = sadd.s32 %s330, 1
    %p334 = scmp.eq.s32.totalorder %s23, 1
    %p335 = scmp.ne.s32.totalorder %s330, %s332
    %p336 = scmp.eq.s32.totalorder %s23, 0
    %p337 = por %p335, %p336
    %p338 = scmp.ne.s32.totalorder %s330, %s332
    %p339 = scmp.eq.s32.totalorder %s28, 1
    %p340 = por %p338, %p339
    %p341 = scmp.ne.s32.totalorder %s332, %s333
    %p342 = scmp.eq.s32.totalorder %s28, 0
    %p343 = por %p341, %p342
    %p344 = scmp.ne.s32.totalorder %s332, %s333
    %p345 = scmp.eq.s32.totalorder %s29, 1
    %p346 = por %p344, %p345
    %p348 = scmp.ne.s32.totalorder %s333, %s347
    %p349 = scmp.eq.s32.totalorder %s29, 0
    %p350 = por %p348, %p349
    %s352 = sadd.s32 %s351, 1
    %p355 = scmp.eq.s32.totalorder %s23, 1
    %p356 = scmp.ne.s32.totalorder %s351, %s353
    %p357 = scmp.eq.s32.totalorder %s23, 0
    %p358 = por %p356, %p357
    %p359 = scmp.ne.s32.totalorder %s351, %s353
    %p360 = scmp.eq.s32.totalorder %s28, 1
    %p361 = por %p359, %p360
    %p362 = scmp.ne.s32.totalorder %s353, %s354
    %p363 = scmp.eq.s32.totalorder %s28, 0
    %p364 = por %p362, %p363
    %p365 = scmp.ne.s32.totalorder %s353, %s354
    %p366 = scmp.eq.s32.totalorder %s29, 1
    %p367 = por %p365, %p366
    %p369 = scmp.ne.s32.totalorder %s354, %s368
    %p370 = scmp.eq.s32.totalorder %s29, 0
    %p371 = por %p369, %p370
    %s373 = sadd.s32 %s372, 1
    %p376 = scmp.eq.s32.totalorder %s23, 1
    %p377 = scmp.ne.s32.totalorder %s372, %s374
    %p378 = scmp.eq.s32.totalorder %s23, 0
    %p379 = por %p377, %p378
    %p380 = scmp.ne.s32.totalorder %s372, %s374
    %p381 = scmp.eq.s32.totalorder %s28, 1
    %p382 = por %p380, %p381
    %p383 = scmp.ne.s32.totalorder %s374, %s375
    %p384 = scmp.eq.s32.totalorder %s28, 0
    %p385 = por %p383, %p384
    %p386 = scmp.ne.s32.totalorder %s374, %s375
    %p387 = scmp.eq.s32.totalorder %s29, 1
    %p388 = por %p386, %p387
    %p390 = scmp.ne.s32.totalorder %s375, %s389
    %p391 = scmp.eq.s32.totalorder %s29, 0
    %p392 = por %p390, %p391
    %s393 = ssub.s32 %s23, %s30
    %p394 = scmp.eq.s32.totalorder %s393, 0
    %s396 = sadd.s32 %s395, 1
    %s397 = scalar_select %p394, %s395, %s396
    %p400 = pneg %p394
    %p401 = scmp.eq.s32.totalorder %s23, 1
    %p402 = por %p400, %p401
    %p403 = scmp.ne.s32.totalorder %s395, %s398
    %p404 = scmp.eq.s32.totalorder %s23, 0
    %p405 = por %p403, %p404
    %p406 = scmp.ne.s32.totalorder %s395, %s398
    %p407 = scmp.eq.s32.totalorder %s28, 1
    %p408 = por %p406, %p407
    %p409 = scmp.ne.s32.totalorder %s398, %s399
    %p410 = scmp.eq.s32.totalorder %s28, 0
    %p411 = por %p409, %p410
    %p412 = scmp.ne.s32.totalorder %s398, %s399
    %p413 = scmp.eq.s32.totalorder %s29, 1
    %p414 = por %p412, %p413
    %p416 = scmp.ne.s32.totalorder %s399, %s415
    %p417 = scmp.eq.s32.totalorder %s29, 0
    %p418 = por %p416, %p417
    %p419 = scmp.le.s32.totalorder 1, %s23
    %p420 = scmp.lt.s32.totalorder %s23, 3
    %p421 = pnand %p419, %p420
    %p422 = pneg %p421
    // Predicated region
    $region9: #{autoencoder_forward.1} parent=5 // pred_check
      _
    $region10: #{autoencoder_forward.1} parent=5 // pred_check_branch
      %424 = sbr.rel (%p421) target = $region12
    $region11: #{autoencoder_forward.1} parent=5 // pred_region
      %s425 = ssub.s32 %s23, 1
      // Predicated region
      $region13: #{autoencoder_forward.1} parent=11 // pred_check
        %p426 = pneg %p70
      $region14: #{autoencoder_forward.1} parent=11 // pred_check_branch
        %428 = sbr.rel (%p426) target = $region16
      $region15: #{autoencoder_forward.1} parent=11 // pred_region
        _
      $region16: #{autoencoder_forward.1} parent=11 // pred_fallthru
        _
      // Predicated region
      $region17: #{autoencoder_forward.1} parent=11 // pred_check
        %p429 = pneg %p91
      $region18: #{autoencoder_forward.1} parent=11 // pred_check_branch
        %431 = sbr.rel (%p429) target = $region20
      $region19: #{autoencoder_forward.1} parent=11 // pred_region
        _
      $region20: #{autoencoder_forward.1} parent=11 // pred_fallthru
        _
      // Predicated region
      $region21: #{autoencoder_forward.1} parent=11 // pred_check
        %p432 = pneg %p112
      $region22: #{autoencoder_forward.1} parent=11 // pred_check_branch
        %434 = sbr.rel (%p432) target = $region24
      $region23: #{autoencoder_forward.1} parent=11 // pred_region
        _
      $region24: #{autoencoder_forward.1} parent=11 // pred_fallthru
        _
      // Predicated region
      $region25: #{autoencoder_forward.1} parent=11 // pred_check
        %p435 = pneg %p133
      $region26: #{autoencoder_forward.1} parent=11 // pred_check_branch
        %437 = sbr.rel (%p435) target = $region28
      $region27: #{autoencoder_forward.1} parent=11 // pred_region
        _
      $region28: #{autoencoder_forward.1} parent=11 // pred_fallthru
        _
      // Predicated region
      $region29: #{autoencoder_forward.1} parent=11 // pred_check
        %p438 = pneg %p154
      $region30: #{autoencoder_forward.1} parent=11 // pred_check_branch
        %440 = sbr.rel (%p438) target = $region32
      $region31: #{autoencoder_forward.1} parent=11 // pred_region
        _
      $region32: #{autoencoder_forward.1} parent=11 // pred_fallthru
        _
      // Predicated region
      $region33: #{autoencoder_forward.1} parent=11 // pred_check
        %p441 = pneg %p175
      $region34: #{autoencoder_forward.1} parent=11 // pred_check_branch
        %443 = sbr.rel (%p441) target = $region36
      $region35: #{autoencoder_forward.1} parent=11 // pred_region
        _
      $region36: #{autoencoder_forward.1} parent=11 // pred_fallthru
        _
      // Predicated region
      $region37: #{autoencoder_forward.1} parent=11 // pred_check
        %p444 = pneg %p196
      $region38: #{autoencoder_forward.1} parent=11 // pred_check_branch
        %446 = sbr.rel (%p444) target = $region40
      $region39: #{autoencoder_forward.1} parent=11 // pred_region
        _
      $region40: #{autoencoder_forward.1} parent=11 // pred_fallthru
        _
      // Predicated region
      $region41: #{autoencoder_forward.1} parent=11 // pred_check
        %p447 = pneg %p217
      $region42: #{autoencoder_forward.1} parent=11 // pred_check_branch
        %449 = sbr.rel (%p447) target = $region44
      $region43: #{autoencoder_forward.1} parent=11 // pred_region
        _
      $region44: #{autoencoder_forward.1} parent=11 // pred_fallthru
        _
      // Predicated region
      $region45: #{autoencoder_forward.1} parent=11 // pred_check
        %p450 = pneg %p238
      $region46: #{autoencoder_forward.1} parent=11 // pred_check_branch
        %452 = sbr.rel (%p450) target = $region48
      $region47: #{autoencoder_forward.1} parent=11 // pred_region
        _
      $region48: #{autoencoder_forward.1} parent=11 // pred_fallthru
        _
      // Predicated region
      $region49: #{autoencoder_forward.1} parent=11 // pred_check
        %p453 = pneg %p259
      $region50: #{autoencoder_forward.1} parent=11 // pred_check_branch
        %455 = sbr.rel (%p453) target = $region52
      $region51: #{autoencoder_forward.1} parent=11 // pred_region
        _
      $region52: #{autoencoder_forward.1} parent=11 // pred_fallthru
        _
      // Predicated region
      $region53: #{autoencoder_forward.1} parent=11 // pred_check
        %p456 = pneg %p280
      $region54: #{autoencoder_forward.1} parent=11 // pred_check_branch
        %458 = sbr.rel (%p456) target = $region56
      $region55: #{autoencoder_forward.1} parent=11 // pred_region
        _
      $region56: #{autoencoder_forward.1} parent=11 // pred_fallthru
        _
      // Predicated region
      $region57: #{autoencoder_forward.1} parent=11 // pred_check
        %p459 = pneg %p301
      $region58: #{autoencoder_forward.1} parent=11 // pred_check_branch
        %461 = sbr.rel (%p459) target = $region60
      $region59: #{autoencoder_forward.1} parent=11 // pred_region
        _
      $region60: #{autoencoder_forward.1} parent=11 // pred_fallthru
        _
      // Predicated region
      $region61: #{autoencoder_forward.1} parent=11 // pred_check
        %p462 = pneg %p322
      $region62: #{autoencoder_forward.1} parent=11 // pred_check_branch
        %464 = sbr.rel (%p462) target = $region64
      $region63: #{autoencoder_forward.1} parent=11 // pred_region
        _
      $region64: #{autoencoder_forward.1} parent=11 // pred_fallthru
        _
      // Predicated region
      $region65: #{autoencoder_forward.1} parent=11 // pred_check
        %p465 = pneg %p343
      $region66: #{autoencoder_forward.1} parent=11 // pred_check_branch
        %467 = sbr.rel (%p465) target = $region68
      $region67: #{autoencoder_forward.1} parent=11 // pred_region
        _
      $region68: #{autoencoder_forward.1} parent=11 // pred_fallthru
        _
      // Predicated region
      $region69: #{autoencoder_forward.1} parent=11 // pred_check
        %p468 = pneg %p364
      $region70: #{autoencoder_forward.1} parent=11 // pred_check_branch
        %470 = sbr.rel (%p468) target = $region72
      $region71: #{autoencoder_forward.1} parent=11 // pred_region
        _
      $region72: #{autoencoder_forward.1} parent=11 // pred_fallthru
        _
      // Predicated region
      $region73: #{autoencoder_forward.1} parent=11 // pred_check
        %p471 = pneg %p385
      $region74: #{autoencoder_forward.1} parent=11 // pred_check_branch
        %473 = sbr.rel (%p471) target = $region76
      $region75: #{autoencoder_forward.1} parent=11 // pred_region
        _
      $region76: #{autoencoder_forward.1} parent=11 // pred_fallthru
        _
    $region12: #{autoencoder_forward.1} parent=5 // pred_fallthru
      _
    %p474 = scmp.lt.s32.totalorder %s23, 2
    // Predicated region
    $region77: #{autoencoder_forward.1} parent=5 // pred_check
      %p475 = pneg %p474
    $region78: #{autoencoder_forward.1} parent=5 // pred_check_branch
      %477 = sbr.rel (%p475) target = $region80
    $region79: #{autoencoder_forward.1} parent=5 // pred_region
      // Predicated region
      $region81: #{autoencoder_forward.1} parent=79 // pred_check
        %p478 = pneg %p43
      $region82: #{autoencoder_forward.1} parent=79 // pred_check_branch
        %480 = sbr.rel (%p478) target = $region84
      $region83: #{autoencoder_forward.1} parent=79 // pred_region
        %s481 = smul.u32 32, %s23
        %p482 = scmp.lt.s32.totalorder %s481, 63
        %s483 = scalar_select %p482, %s481, 63
        %s484 = smul.addr %s483, 7
        %s485 = smul.addr %s484, 8
        %s486 = scalar_lea.vmem %s0, %s485
        %s487 = smul.u32 32, %s23
      $region84: #{autoencoder_forward.1} parent=79 // pred_fallthru
        _
    $region80: #{autoencoder_forward.1} parent=5 // pred_fallthru
      _
    %p488 = scmp.le.s32.totalorder 1, %s23
    %p489 = scmp.lt.s32.totalorder %s23, 3
    %p490 = pnand %p488, %p489
    %p491 = pneg %p490
    // Predicated region
    $region85: #{autoencoder_forward.1} parent=5 // pred_check
      _
    $region86: #{autoencoder_forward.1} parent=5 // pred_check_branch
      %493 = sbr.rel (%p490) target = $region88
    $region87: #{autoencoder_forward.1} parent=5 // pred_region
      %s494 = ssub.s32 %s23, 1
      %s495 = smul.u32 32, %s28
      %p496 = scmp.lt.s32.totalorder %s495, 63
      %s497 = scalar_select %p496, %s495, 63
      %s498 = smul.addr %s497, 7
      %s499 = smul.addr %s498, 8
      %s500 = scalar_lea.vmem %s0, %s499
      %p501 = pneg %p49
      %p502 = pneg %p46
      %p503 = pneg %p70
      %p504 = pneg %p67
      %p505 = pneg %p91
      %p506 = pneg %p88
      %p507 = pneg %p112
      %p508 = pneg %p109
      %p509 = pneg %p133
      %p510 = pneg %p130
      %p511 = pneg %p154
      %p512 = pneg %p151
      %p513 = pneg %p175
      %p514 = pneg %p172
      %p515 = pneg %p196
      %p516 = pneg %p193
      %p517 = pneg %p217
      %p518 = pneg %p214
      %p519 = pneg %p238
      %p520 = pneg %p235
      %p521 = pneg %p259
      %p522 = pneg %p256
      %p523 = pneg %p280
      %p524 = pneg %p277
      %p525 = pneg %p301
      %p526 = pneg %p298
      %p527 = pneg %p322
      %p528 = pneg %p319
      %p529 = pneg %p343
      %p530 = pneg %p340
      %p531 = pneg %p364
      %p532 = pneg %p361
      %p533 = pneg %p385
      %p534 = pneg %p382
      %p535 = pneg %p411
      %p536 = pneg %p408
      %s537 = smul.u32 32, %s28
      %p538 = scmp.lt.s32.totalorder %s537, 63
      %s539 = scalar_select %p538, %s537, 63
      %s540 = smul.addr %s539, 7
      %s541 = smul.addr %s540, 8
      %s542 = scalar_lea.vmem %s17, %s541
      %s543 = smul.u32 32, %s28
      %p544 = scmp.lt.s32.totalorder %s543, 63
      %s545 = scalar_select %p544, %s543, 63
      %s546 = smul.addr %s545, 7
      %s547 = smul.addr %s546, 8
      %s548 = scalar_lea.vmem %s0, %s547
      %s549 = smul.u32 32, %s28
      %s550 = smul.u32 32, %s28
      %p551 = scmp.lt.s32.totalorder %s550, 63
      %s552 = scalar_select %p551, %s550, 63
      %s553 = smul.addr %s552, 7
      %s554 = smul.addr %s553, 8
      %s555 = scalar_lea.vmem %s17, %s554
      %s556 = smul.u32 32, %s28
      %v558 = vld [vmem:[%s548] sm:$0xff]
      %v559 = vld [vmem:[%s548 + $0x8] sm:$0xff]
      %v560 = vld [vmem:[%s548 + $0x10] sm:$0xff]
      %v561 = vld [vmem:[%s548 + $0x18] sm:$0xff]
      %v562 = vld [vmem:[%s548 + $0x20] sm:$0xff]
      %v563 = vld [vmem:[%s548 + $0x28] sm:$0xff]
      %v564 = vld [vmem:[%s548 + $0x30] sm:$0xff]
      %v565 = vld [vmem:[%s548 + $0x38] sm:$0xff]
      %v566 = vld [vmem:[%s548 + $0x40] sm:$0xff]
      %v567 = vld [vmem:[%s548 + $0x48] sm:$0xff]
      %v568 = vld [vmem:[%s548 + $0x50] sm:$0xff]
      %v569 = vld [vmem:[%s548 + $0x58] sm:$0xff]
      %v570 = vld [vmem:[%s548 + $0x60] sm:$0xff]
      %v571 = vld [vmem:[%s548 + $0x68] sm:$0xff]
      %v572 = vld [vmem:[%s548 + $0x70] sm:$0xff]
      %v573 = vld [vmem:[%s548 + $0x78] sm:$0xff]
      %v574 = vld [vmem:[%s548 + $0x80] sm:$0xff]
      %v575 = vld [vmem:[%s548 + $0x88] sm:$0xff]
      %v576 = vld [vmem:[%s548 + $0x90] sm:$0xff]
      %v577 = vld [vmem:[%s548 + $0x98] sm:$0xff]
      %v578 = vld [vmem:[%s548 + $0xa0] sm:$0xff]
      %v579 = vld [vmem:[%s548 + $0xa8] sm:$0xff]
      %v580 = vld [vmem:[%s548 + $0xb0] sm:$0xff]
      %v581 = vld [vmem:[%s548 + $0xb8] sm:$0xff]
      %v582 = vld [vmem:[%s548 + $0xc0] sm:$0xff]
      %v583 = vld [vmem:[%s548 + $0xc8] sm:$0xff]
      %v584 = vld [vmem:[%s548 + $0xd0] sm:$0xff]
      %v585 = vld [vmem:[%s548 + $0xd8] sm:$0xff]
      %v586 = vld [vmem:[%s548 + $0xe0] sm:$0xff]
      %v587 = vld [vmem:[%s548 + $0xe8] sm:$0xff]
      %v588 = vld [vmem:[%s548 + $0xf0] sm:$0xff]
      %v589 = vld [vmem:[%s548 + $0xf8] sm:$0xff]
      %v590 = vld [vmem:[%s548 + $0x100] sm:$0xff]
      %v591 = vld [vmem:[%s548 + $0x108] sm:$0xff]
      %v592 = vld [vmem:[%s548 + $0x110] sm:$0xff]
      %v593 = vld [vmem:[%s548 + $0x118] sm:$0xff]
      %v594 = vld [vmem:[%s548 + $0x120] sm:$0xff]
      %v595 = vld [vmem:[%s548 + $0x128] sm:$0xff]
      %v596 = vld [vmem:[%s548 + $0x130] sm:$0xff]
      %v597 = vld [vmem:[%s548 + $0x138] sm:$0xff]
      %v598 = vld [vmem:[%s548 + $0x140] sm:$0xff]
      %v599 = vld [vmem:[%s548 + $0x148] sm:$0xff]
      %v600 = vld [vmem:[%s548 + $0x150] sm:$0xff]
      %v601 = vld [vmem:[%s548 + $0x158] sm:$0xff]
      %v602 = vld [vmem:[%s548 + $0x160] sm:$0xff]
      %v603 = vld [vmem:[%s548 + $0x168] sm:$0xff]
      %v604 = vld [vmem:[%s548 + $0x170] sm:$0xff]
      %v605 = vld [vmem:[%s548 + $0x178] sm:$0xff]
      %v606 = vld [vmem:[%s548 + $0x180] sm:$0xff]
      %v607 = vld [vmem:[%s548 + $0x188] sm:$0xff]
      %v608 = vld [vmem:[%s548 + $0x190] sm:$0xff]
      %v609 = vld [vmem:[%s548 + $0x198] sm:$0xff]
      %v610 = vld [vmem:[%s548 + $0x1a0] sm:$0xff]
      %v611 = vld [vmem:[%s548 + $0x1a8] sm:$0xff]
      %v612 = vld [vmem:[%s548 + $0x1b0] sm:$0xff]
      %v613 = vld [vmem:[%s548 + $0x1b8] sm:$0xff]
      %v614 = vld [vmem:[%s548 + $0x1c0] sm:$0xff]
      %v615 = vld [vmem:[%s548 + $0x1c8] sm:$0xff]
      %v616 = vld [vmem:[%s548 + $0x1d0] sm:$0xff]
      %v617 = vld [vmem:[%s548 + $0x1d8] sm:$0xff]
      %v618 = vld [vmem:[%s548 + $0x1e0] sm:$0xff]
      %v619 = vld [vmem:[%s548 + $0x1e8] sm:$0xff]
      %v620 = vld [vmem:[%s548 + $0x1f0] sm:$0xff]
      %v621 = vld [vmem:[%s548 + $0x1f8] sm:$0xff]
      %v622 = vld [vmem:[%s548 + $0x200] sm:$0xff]
      %v623 = vld [vmem:[%s548 + $0x208] sm:$0xff]
      %v624 = vld [vmem:[%s548 + $0x210] sm:$0xff]
      %v625 = vld [vmem:[%s548 + $0x218] sm:$0xff]
      %v626 = vld [vmem:[%s548 + $0x220] sm:$0xff]
      %v627 = vld [vmem:[%s548 + $0x228] sm:$0xff]
      %v628 = vld [vmem:[%s548 + $0x230] sm:$0xff]
      %v629 = vld [vmem:[%s548 + $0x238] sm:$0xff]
      %v630 = vld [vmem:[%s548 + $0x240] sm:$0xff]
      %v631 = vld [vmem:[%s548 + $0x248] sm:$0xff]
      %v632 = vld [vmem:[%s548 + $0x250] sm:$0xff]
      %v633 = vld [vmem:[%s548 + $0x258] sm:$0xff]
      %v634 = vld [vmem:[%s548 + $0x260] sm:$0xff]
      %v635 = vld [vmem:[%s548 + $0x268] sm:$0xff]
      %v636 = vld [vmem:[%s548 + $0x270] sm:$0xff]
      %v637 = vld [vmem:[%s548 + $0x278] sm:$0xff]
      %v638 = vld [vmem:[%s548 + $0x280] sm:$0xff]
      %v639 = vld [vmem:[%s548 + $0x288] sm:$0xff]
      %v640 = vld [vmem:[%s548 + $0x290] sm:$0xff]
      %v641 = vld [vmem:[%s548 + $0x298] sm:$0xff]
      %v642 = vld [vmem:[%s548 + $0x2a0] sm:$0xff]
      %v643 = vld [vmem:[%s548 + $0x2a8] sm:$0xff]
      %v644 = vld [vmem:[%s548 + $0x2b0] sm:$0xff]
      %v645 = vld [vmem:[%s548 + $0x2b8] sm:$0xff]
      %v646 = vld [vmem:[%s548 + $0x2c0] sm:$0xff]
      %v647 = vld [vmem:[%s548 + $0x2c8] sm:$0xff]
      %v648 = vld [vmem:[%s548 + $0x2d0] sm:$0xff]
      %v649 = vld [vmem:[%s548 + $0x2d8] sm:$0xff]
      %v650 = vld [vmem:[%s548 + $0x2e0] sm:$0xff]
      %v651 = vld [vmem:[%s548 + $0x2e8] sm:$0xff]
      %v652 = vld [vmem:[%s548 + $0x2f0] sm:$0xff]
      %v653 = vld [vmem:[%s548 + $0x2f8] sm:$0xff]
      %v654 = vld [vmem:[%s548 + $0x300] sm:$0xff]
      %v655 = vld [vmem:[%s548 + $0x308] sm:$0xff]
      %v656 = vld [vmem:[%s548 + $0x310] sm:$0xff]
      %v657 = vld [vmem:[%s548 + $0x318] sm:$0xff]
      %v658 = vld [vmem:[%s548 + $0x320] sm:$0xff]
      %v659 = vld [vmem:[%s548 + $0x328] sm:$0xff]
      %v660 = vld [vmem:[%s548 + $0x330] sm:$0xff]
      %v661 = vld [vmem:[%s548 + $0x338] sm:$0xff]
      %v662 = vld [vmem:[%s548 + $0x340] sm:$0xff]
      %v663 = vld [vmem:[%s548 + $0x348] sm:$0xff]
      %v664 = vld [vmem:[%s548 + $0x350] sm:$0xff]
      %v665 = vld [vmem:[%s548 + $0x358] sm:$0xff]
      %v666 = vld [vmem:[%s548 + $0x360] sm:$0xff]
      %v667 = vld [vmem:[%s548 + $0x368] sm:$0xff]
      %v668 = vld [vmem:[%s548 + $0x370] sm:$0xff]
      %v669 = vld [vmem:[%s548 + $0x378] sm:$0xff]
      %v670 = vld [vmem:[%s548 + $0x380] sm:$0xff]
      %v671 = vld [vmem:[%s548 + $0x388] sm:$0xff]
      %v672 = vld [vmem:[%s548 + $0x390] sm:$0xff]
      %v673 = vld [vmem:[%s548 + $0x398] sm:$0xff]
      %v674 = vld [vmem:[%s548 + $0x3a0] sm:$0xff]
      %v675 = vld [vmem:[%s548 + $0x3a8] sm:$0xff]
      %v676 = vld [vmem:[%s548 + $0x3b0] sm:$0xff]
      %v677 = vld [vmem:[%s548 + $0x3b8] sm:$0xff]
      %v678 = vld [vmem:[%s548 + $0x3c0] sm:$0xff]
      %v679 = vld [vmem:[%s548 + $0x3c8] sm:$0xff]
      %v680 = vld [vmem:[%s548 + $0x3d0] sm:$0xff]
      %v681 = vld [vmem:[%s548 + $0x3d8] sm:$0xff]
      %v682 = vld [vmem:[%s548 + $0x3e0] sm:$0xff]
      %v683 = vld [vmem:[%s548 + $0x3e8] sm:$0xff]
      %v684 = vld [vmem:[%s548 + $0x3f0] sm:$0xff]
      %v685 = vld [vmem:[%s548 + $0x3f8] sm:$0xff]
      %v686 = vld [vmem:[%s548 + $0x400] sm:$0xff]
      %v687 = vld [vmem:[%s548 + $0x408] sm:$0xff]
      %v688 = vld [vmem:[%s548 + $0x410] sm:$0xff]
      %v689 = vld [vmem:[%s548 + $0x418] sm:$0xff]
      %v690 = vld [vmem:[%s548 + $0x420] sm:$0xff]
      %v691 = vld [vmem:[%s548 + $0x428] sm:$0xff]
      %v692 = vld [vmem:[%s548 + $0x430] sm:$0xff]
      %v693 = vld [vmem:[%s548 + $0x438] sm:$0xff]
      %v694 = vld [vmem:[%s548 + $0x440] sm:$0xff]
      %v695 = vld [vmem:[%s548 + $0x448] sm:$0xff]
      %v696 = vld [vmem:[%s548 + $0x450] sm:$0xff]
      %v697 = vld [vmem:[%s548 + $0x458] sm:$0xff]
      %v698 = vld [vmem:[%s548 + $0x460] sm:$0xff]
      %v699 = vld [vmem:[%s548 + $0x468] sm:$0xff]
      %v700 = vld [vmem:[%s548 + $0x470] sm:$0xff]
      %v701 = vld [vmem:[%s548 + $0x478] sm:$0xff]
      %v702 = vld [vmem:[%s548 + $0x480] sm:$0xff]
      %v703 = vld [vmem:[%s548 + $0x488] sm:$0xff]
      %v704 = vld [vmem:[%s548 + $0x490] sm:$0xff]
      %v705 = vld [vmem:[%s548 + $0x498] sm:$0xff]
      %v706 = vld [vmem:[%s548 + $0x4a0] sm:$0xff]
      %v707 = vld [vmem:[%s548 + $0x4a8] sm:$0xff]
      %v708 = vld [vmem:[%s548 + $0x4b0] sm:$0xff]
      %v709 = vld [vmem:[%s548 + $0x4b8] sm:$0xff]
      %v710 = vld [vmem:[%s548 + $0x4c0] sm:$0xff]
      %v711 = vld [vmem:[%s548 + $0x4c8] sm:$0xff]
      %v712 = vld [vmem:[%s548 + $0x4d0] sm:$0xff]
      %v713 = vld [vmem:[%s548 + $0x4d8] sm:$0xff]
      %v714 = vld [vmem:[%s548 + $0x4e0] sm:$0xff]
      %v715 = vld [vmem:[%s548 + $0x4e8] sm:$0xff]
      %v716 = vld [vmem:[%s548 + $0x4f0] sm:$0xff]
      %v717 = vld [vmem:[%s548 + $0x4f8] sm:$0xff]
      %v718 = vld [vmem:[%s548 + $0x500] sm:$0xff]
      %v719 = vld [vmem:[%s548 + $0x508] sm:$0xff]
      %v720 = vld [vmem:[%s548 + $0x510] sm:$0xff]
      %v721 = vld [vmem:[%s548 + $0x518] sm:$0xff]
      %v722 = vld [vmem:[%s548 + $0x520] sm:$0xff]
      %v723 = vld [vmem:[%s548 + $0x528] sm:$0xff]
      %v724 = vld [vmem:[%s548 + $0x530] sm:$0xff]
      %v725 = vld [vmem:[%s548 + $0x538] sm:$0xff]
      %v726 = vld [vmem:[%s548 + $0x540] sm:$0xff]
      %v727 = vld [vmem:[%s548 + $0x548] sm:$0xff]
      %v728 = vld [vmem:[%s548 + $0x550] sm:$0xff]
      %v729 = vld [vmem:[%s548 + $0x558] sm:$0xff]
      %v730 = vld [vmem:[%s548 + $0x560] sm:$0xff]
      %v731 = vld [vmem:[%s548 + $0x568] sm:$0xff]
      %v732 = vld [vmem:[%s548 + $0x570] sm:$0xff]
      %v733 = vld [vmem:[%s548 + $0x578] sm:$0xff]
      %v734 = vld [vmem:[%s548 + $0x580] sm:$0xff]
      %v735 = vld [vmem:[%s548 + $0x588] sm:$0xff]
      %v736 = vld [vmem:[%s548 + $0x590] sm:$0xff]
      %v737 = vld [vmem:[%s548 + $0x598] sm:$0xff]
      %v738 = vld [vmem:[%s548 + $0x5a0] sm:$0xff]
      %v739 = vld [vmem:[%s548 + $0x5a8] sm:$0xff]
      %v740 = vld [vmem:[%s548 + $0x5b0] sm:$0xff]
      %v741 = vld [vmem:[%s548 + $0x5b8] sm:$0xff]
      %v742 = vld [vmem:[%s548 + $0x5c0] sm:$0xff]
      %v743 = vld [vmem:[%s548 + $0x5c8] sm:$0xff]
      %v744 = vld [vmem:[%s548 + $0x5d0] sm:$0xff]
      %v745 = vld [vmem:[%s548 + $0x5d8] sm:$0xff]
      %v746 = vld [vmem:[%s548 + $0x5e0] sm:$0xff]
      %v747 = vld [vmem:[%s548 + $0x5e8] sm:$0xff]
      %v748 = vld [vmem:[%s548 + $0x5f0] sm:$0xff]
      %v749 = vld [vmem:[%s548 + $0x5f8] sm:$0xff]
      %v750 = vld [vmem:[%s548 + $0x600] sm:$0xff]
      %v751 = vld [vmem:[%s548 + $0x608] sm:$0xff]
      %v752 = vld [vmem:[%s548 + $0x610] sm:$0xff]
      %v753 = vld [vmem:[%s548 + $0x618] sm:$0xff]
      %v754 = vld [vmem:[%s548 + $0x620] sm:$0xff]
      %v755 = vld [vmem:[%s548 + $0x628] sm:$0xff]
      %v756 = vld [vmem:[%s548 + $0x630] sm:$0xff]
      %v757 = vld [vmem:[%s548 + $0x638] sm:$0xff]
      %v758 = vld [vmem:[%s548 + $0x640] sm:$0xff]
      %v759 = vld [vmem:[%s548 + $0x648] sm:$0xff]
      %v760 = vld [vmem:[%s548 + $0x650] sm:$0xff]
      %v761 = vld [vmem:[%s548 + $0x658] sm:$0xff]
      %v762 = vld [vmem:[%s548 + $0x660] sm:$0xff]
      %v763 = vld [vmem:[%s548 + $0x668] sm:$0xff]
      %v764 = vld [vmem:[%s548 + $0x670] sm:$0xff]
      %v765 = vld [vmem:[%s548 + $0x678] sm:$0xff]
      %v766 = vld [vmem:[%s548 + $0x680] sm:$0xff]
      %v767 = vld [vmem:[%s548 + $0x688] sm:$0xff]
      %v768 = vld [vmem:[%s548 + $0x690] sm:$0xff]
      %v769 = vld [vmem:[%s548 + $0x698] sm:$0xff]
      %v770 = vld [vmem:[%s548 + $0x6a0] sm:$0xff]
      %v771 = vld [vmem:[%s548 + $0x6a8] sm:$0xff]
      %v772 = vld [vmem:[%s548 + $0x6b0] sm:$0xff]
      %v773 = vld [vmem:[%s548 + $0x6b8] sm:$0xff]
      %v774 = vld [vmem:[%s548 + $0x6c0] sm:$0xff]
      %v775 = vld [vmem:[%s548 + $0x6c8] sm:$0xff]
      %v776 = vld [vmem:[%s548 + $0x6d0] sm:$0xff]
      %v777 = vld [vmem:[%s548 + $0x6d8] sm:$0xff]
      %v778 = vld [vmem:[%s548 + $0x6e0] sm:$0xff]
      %v779 = vld [vmem:[%s548 + $0x6e8] sm:$0xff]
      %v780 = vld [vmem:[%s548 + $0x6f0] sm:$0xff]
      %v781 = vld [vmem:[%s548 + $0x6f8] sm:$0xff]
      %v782 = vld [vmem:[%s1] sm:$0xf]
      %v783 = vld [vmem:[%s1 + $0x4] sm:$0xf]
      %v784 = vld [vmem:[%s1 + $0x8] sm:$0xf]
      %v785 = vld [vmem:[%s1 + $0xc] sm:$0xf]
      %v786 = vld [vmem:[%s1 + $0x10] sm:$0xf]
      %v787 = vld [vmem:[%s1 + $0x14] sm:$0xf]
      %v788 = vld [vmem:[%s1 + $0x18] sm:$0xf]
      %v789 = vld [vmem:[%s1 + $0x1c] sm:$0xf]
      %v790 = vld [vmem:[%s1 + $0x20] sm:$0xf]
      %v791 = vld [vmem:[%s1 + $0x24] sm:$0xf]
      %v792 = vld [vmem:[%s1 + $0x28] sm:$0xf]
      %v793 = vld [vmem:[%s1 + $0x2c] sm:$0xf]
      %v794 = vld [vmem:[%s1 + $0x30] sm:$0xf]
      %v795 = vld [vmem:[%s1 + $0x34] sm:$0xf]
      %v796 = vld [vmem:[%s1 + $0x38] sm:$0xf]
      %v797 = vld [vmem:[%s1 + $0x3c] sm:$0xf]
      %v798 = vld [vmem:[%s1 + $0x40] sm:$0xf]
      %v799 = vld [vmem:[%s1 + $0x44] sm:$0xf]
      %v800 = vld [vmem:[%s1 + $0x48] sm:$0xf]
      %v801 = vld [vmem:[%s1 + $0x4c] sm:$0xf]
      %v802 = vld [vmem:[%s1 + $0x50] sm:$0xf]
      %v803 = vld [vmem:[%s1 + $0x54] sm:$0xf]
      %v804 = vld [vmem:[%s1 + $0x58] sm:$0xf]
      %v805 = vld [vmem:[%s1 + $0x5c] sm:$0xf]
      %v806 = vld [vmem:[%s1 + $0x60] sm:$0xf]
      %v807 = vld [vmem:[%s1 + $0x64] sm:$0xf]
      %v808 = vld [vmem:[%s1 + $0x68] sm:$0xf]
      %v809 = vld [vmem:[%s1 + $0x6c] sm:$0xf]
      %v810 = vld [vmem:[%s1 + $0x70] sm:$0xf]
      %v811 = vld [vmem:[%s1 + $0x74] sm:$0xf]
      %v812 = vld [vmem:[%s1 + $0x78] sm:$0xf]
      %v813 = vld [vmem:[%s1 + $0x7c] sm:$0xf]
      %v814 = vld [vmem:[%s1 + $0x80] sm:$0xf]
      %v815 = vld [vmem:[%s1 + $0x84] sm:$0xf]
      %v816 = vld [vmem:[%s1 + $0x88] sm:$0xf]
      %v817 = vld [vmem:[%s1 + $0x8c] sm:$0xf]
      %v818 = vld [vmem:[%s1 + $0x90] sm:$0xf]
      %v819 = vld [vmem:[%s1 + $0x94] sm:$0xf]
      %v820 = vld [vmem:[%s1 + $0x98] sm:$0xf]
      %v821 = vld [vmem:[%s1 + $0x9c] sm:$0xf]
      %v822 = vld [vmem:[%s1 + $0xa0] sm:$0xf]
      %v823 = vld [vmem:[%s1 + $0xa4] sm:$0xf]
      %v824 = vld [vmem:[%s1 + $0xa8] sm:$0xf]
      %v825 = vld [vmem:[%s1 + $0xac] sm:$0xf]
      %v826 = vld [vmem:[%s1 + $0xb0] sm:$0xf]
      %v827 = vld [vmem:[%s1 + $0xb4] sm:$0xf]
      %v828 = vld [vmem:[%s1 + $0xb8] sm:$0xf]
      %v829 = vld [vmem:[%s1 + $0xbc] sm:$0xf]
      %v830 = vld [vmem:[%s1 + $0xc0] sm:$0xf]
      %v831 = vld [vmem:[%s1 + $0xc4] sm:$0xf]
      %v832 = vld [vmem:[%s1 + $0xc8] sm:$0xf]
      %v833 = vld [vmem:[%s1 + $0xcc] sm:$0xf]
      %v834 = vld [vmem:[%s1 + $0xd0] sm:$0xf]
      %v835 = vld [vmem:[%s1 + $0xd4] sm:$0xf]
      %v836 = vld [vmem:[%s1 + $0xd8] sm:$0xf]
      %v837 = vld [vmem:[%s1 + $0xdc] sm:$0xf]
      %v838 = vld [vmem:[%s1 + $0xe0] sm:$0xf]
      %v839 = vld [vmem:[%s1 + $0xe4] sm:$0xf]
      %v840 = vld [vmem:[%s1 + $0xe8] sm:$0xf]
      %v841 = vld [vmem:[%s1 + $0xec] sm:$0xf]
      %v842 = vld [vmem:[%s1 + $0xf0] sm:$0xf]
      %v843 = vld [vmem:[%s1 + $0xf4] sm:$0xf]
      %v844 = vld [vmem:[%s1 + $0xf8] sm:$0xf]
      %v845 = vld [vmem:[%s1 + $0xfc] sm:$0xf]
      %v846 = vld [vmem:[%s1 + $0x100] sm:$0xf]
      %v847 = vld [vmem:[%s1 + $0x104] sm:$0xf]
      %v848 = vld [vmem:[%s1 + $0x108] sm:$0xf]
      %v849 = vld [vmem:[%s1 + $0x10c] sm:$0xf]
      %v850 = vld [vmem:[%s1 + $0x110] sm:$0xf]
      %v851 = vld [vmem:[%s1 + $0x114] sm:$0xf]
      %v852 = vld [vmem:[%s1 + $0x118] sm:$0xf]
      %v853 = vld [vmem:[%s1 + $0x11c] sm:$0xf]
      %v854 = vld [vmem:[%s1 + $0x120] sm:$0xf]
      %v855 = vld [vmem:[%s1 + $0x124] sm:$0xf]
      %v856 = vld [vmem:[%s1 + $0x128] sm:$0xf]
      %v857 = vld [vmem:[%s1 + $0x12c] sm:$0xf]
      %v858 = vld [vmem:[%s1 + $0x130] sm:$0xf]
      %v859 = vld [vmem:[%s1 + $0x134] sm:$0xf]
      %v860 = vld [vmem:[%s1 + $0x138] sm:$0xf]
      %v861 = vld [vmem:[%s1 + $0x13c] sm:$0xf]
      %v862 = vld [vmem:[%s1 + $0x140] sm:$0xf]
      %v863 = vld [vmem:[%s1 + $0x144] sm:$0xf]
      %v864 = vld [vmem:[%s1 + $0x148] sm:$0xf]
      %v865 = vld [vmem:[%s1 + $0x14c] sm:$0xf]
      %v866 = vld [vmem:[%s1 + $0x150] sm:$0xf]
      %v867 = vld [vmem:[%s1 + $0x154] sm:$0xf]
      %v868 = vld [vmem:[%s1 + $0x158] sm:$0xf]
      %v869 = vld [vmem:[%s1 + $0x15c] sm:$0xf]
      %v870 = vld [vmem:[%s1 + $0x160] sm:$0xf]
      %v871 = vld [vmem:[%s1 + $0x164] sm:$0xf]
      %v872 = vld [vmem:[%s1 + $0x168] sm:$0xf]
      %v873 = vld [vmem:[%s1 + $0x16c] sm:$0xf]
      %v874 = vld [vmem:[%s1 + $0x170] sm:$0xf]
      %v875 = vld [vmem:[%s1 + $0x174] sm:$0xf]
      %v876 = vld [vmem:[%s1 + $0x178] sm:$0xf]
      %v877 = vld [vmem:[%s1 + $0x17c] sm:$0xf]
      %v878 = vld [vmem:[%s1 + $0x180] sm:$0xf]
      %v879 = vld [vmem:[%s1 + $0x184] sm:$0xf]
      %v880 = vld [vmem:[%s2] sm:$0x1]
      %v881 = vpack.c.bf16 %v565, %v558
      %v882 = vpack.c.bf16 %v566, %v559
      %v883 = vpack.c.bf16 %v567, %v560
      %v884 = vpack.c.bf16 %v568, %v561
      %v885 = vpack.c.bf16 %v569, %v562
      %v886 = vpack.c.bf16 %v570, %v563
      %v887 = vpack.c.bf16 %v571, %v564
      %v888 = vpack.c.bf16 %v579, %v572
      %v889 = vpack.c.bf16 %v580, %v573
      %v890 = vpack.c.bf16 %v581, %v574
      %v891 = vpack.c.bf16 %v582, %v575
      %v892 = vpack.c.bf16 %v583, %v576
      %v893 = vpack.c.bf16 %v584, %v577
      %v894 = vpack.c.bf16 %v585, %v578
      %v895 = vpack.c.bf16 %v593, %v586
      %v896 = vpack.c.bf16 %v594, %v587
      %v897 = vpack.c.bf16 %v595, %v588
      %v898 = vpack.c.bf16 %v596, %v589
      %v899 = vpack.c.bf16 %v597, %v590
      %v900 = vpack.c.bf16 %v598, %v591
      %v901 = vpack.c.bf16 %v599, %v592
      %v902 = vpack.c.bf16 %v607, %v600
      %v903 = vpack.c.bf16 %v608, %v601
      %v904 = vpack.c.bf16 %v609, %v602
      %v905 = vpack.c.bf16 %v610, %v603
      %v906 = vpack.c.bf16 %v611, %v604
      %v907 = vpack.c.bf16 %v612, %v605
      %v908 = vpack.c.bf16 %v613, %v606
      %v909 = vpack.c.bf16 %v621, %v614
      %v910 = vpack.c.bf16 %v622, %v615
      %v911 = vpack.c.bf16 %v623, %v616
      %v912 = vpack.c.bf16 %v624, %v617
      %v913 = vpack.c.bf16 %v625, %v618
      %v914 = vpack.c.bf16 %v626, %v619
      %v915 = vpack.c.bf16 %v627, %v620
      %v916 = vpack.c.bf16 %v635, %v628
      %v917 = vpack.c.bf16 %v636, %v629
      %v918 = vpack.c.bf16 %v637, %v630
      %v919 = vpack.c.bf16 %v638, %v631
      %v920 = vpack.c.bf16 %v639, %v632
      %v921 = vpack.c.bf16 %v640, %v633
      %v922 = vpack.c.bf16 %v641, %v634
      %v923 = vpack.c.bf16 %v649, %v642
      %v924 = vpack.c.bf16 %v650, %v643
      %v925 = vpack.c.bf16 %v651, %v644
      %v926 = vpack.c.bf16 %v652, %v645
      %v927 = vpack.c.bf16 %v653, %v646
      %v928 = vpack.c.bf16 %v654, %v647
      %v929 = vpack.c.bf16 %v655, %v648
      %v930 = vpack.c.bf16 %v663, %v656
      %v931 = vpack.c.bf16 %v664, %v657
      %v932 = vpack.c.bf16 %v665, %v658
      %v933 = vpack.c.bf16 %v666, %v659
      %v934 = vpack.c.bf16 %v667, %v660
      %v935 = vpack.c.bf16 %v668, %v661
      %v936 = vpack.c.bf16 %v669, %v662
      %v937 = vpack.c.bf16 %v677, %v670
      %v938 = vpack.c.bf16 %v678, %v671
      %v939 = vpack.c.bf16 %v679, %v672
      %v940 = vpack.c.bf16 %v680, %v673
      %v941 = vpack.c.bf16 %v681, %v674
      %v942 = vpack.c.bf16 %v682, %v675
      %v943 = vpack.c.bf16 %v683, %v676
      %v944 = vpack.c.bf16 %v691, %v684
      %v945 = vpack.c.bf16 %v692, %v685
      %v946 = vpack.c.bf16 %v693, %v686
      %v947 = vpack.c.bf16 %v694, %v687
      %v948 = vpack.c.bf16 %v695, %v688
      %v949 = vpack.c.bf16 %v696, %v689
      %v950 = vpack.c.bf16 %v697, %v690
      %v951 = vpack.c.bf16 %v705, %v698
      %v952 = vpack.c.bf16 %v706, %v699
      %v953 = vpack.c.bf16 %v707, %v700
      %v954 = vpack.c.bf16 %v708, %v701
      %v955 = vpack.c.bf16 %v709, %v702
      %v956 = vpack.c.bf16 %v710, %v703
      %v957 = vpack.c.bf16 %v711, %v704
      %v958 = vpack.c.bf16 %v719, %v712
      %v959 = vpack.c.bf16 %v720, %v713
      %v960 = vpack.c.bf16 %v721, %v714
      %v961 = vpack.c.bf16 %v722, %v715
      %v962 = vpack.c.bf16 %v723, %v716
      %v963 = vpack.c.bf16 %v724, %v717
      %v964 = vpack.c.bf16 %v725, %v718
      %v965 = vpack.c.bf16 %v733, %v726
      %v966 = vpack.c.bf16 %v734, %v727
      %v967 = vpack.c.bf16 %v735, %v728
      %v968 = vpack.c.bf16 %v736, %v729
      %v969 = vpack.c.bf16 %v737, %v730
      %v970 = vpack.c.bf16 %v738, %v731
      %v971 = vpack.c.bf16 %v739, %v732
      %v972 = vpack.c.bf16 %v747, %v740
      %v973 = vpack.c.bf16 %v748, %v741
      %v974 = vpack.c.bf16 %v749, %v742
      %v975 = vpack.c.bf16 %v750, %v743
      %v976 = vpack.c.bf16 %v751, %v744
      %v977 = vpack.c.bf16 %v752, %v745
      %v978 = vpack.c.bf16 %v753, %v746
      %v979 = vpack.c.bf16 %v761, %v754
      %v980 = vpack.c.bf16 %v762, %v755
      %v981 = vpack.c.bf16 %v763, %v756
      %v982 = vpack.c.bf16 %v764, %v757
      %v983 = vpack.c.bf16 %v765, %v758
      %v984 = vpack.c.bf16 %v766, %v759
      %v985 = vpack.c.bf16 %v767, %v760
      %v986 = vpack.c.bf16 %v775, %v768
      %v987 = vpack.c.bf16 %v776, %v769
      %v988 = vpack.c.bf16 %v777, %v770
      %v989 = vpack.c.bf16 %v778, %v771
      %v990 = vpack.c.bf16 %v779, %v772
      %v991 = vpack.c.bf16 %v780, %v773
      %v992 = vpack.c.bf16 %v781, %v774
      %v994 = vlaneseq
      %v995 = vshrl.u32 %v994, 7
      %v996 = vsub.s32 0, %v995
      %v997 = vrot.slane %v880, %v996
      %v1097 = vunpack.c.l.b16 %v782
      %v1098 = vunpack.c.l.b16 %v783
      %v1099 = vunpack.c.l.b16 %v784
      %v1100 = vunpack.c.l.b16 %v785
      %v1101 = vunpack.c.l.b16 %v786
      %v1102 = vunpack.c.l.b16 %v787
      %v1103 = vunpack.c.l.b16 %v788
      %v1104 = vunpack.c.l.b16 %v789
      %v1105 = vunpack.c.l.b16 %v790
      %v1106 = vunpack.c.l.b16 %v791
      %v1107 = vunpack.c.l.b16 %v792
      %v1108 = vunpack.c.l.b16 %v793
      %v1109 = vunpack.c.l.b16 %v794
      %v1110 = vunpack.c.l.b16 %v795
      %v1111 = vunpack.c.l.b16 %v796
      %v1112 = vunpack.c.l.b16 %v797
      %v1113 = vunpack.c.l.b16 %v798
      %v1114 = vunpack.c.l.b16 %v799
      %v1115 = vunpack.c.l.b16 %v800
      %v1116 = vunpack.c.l.b16 %v801
      %v1117 = vunpack.c.l.b16 %v802
      %v1118 = vunpack.c.l.b16 %v803
      %v1119 = vunpack.c.l.b16 %v804
      %v1120 = vunpack.c.l.b16 %v805
      %v1121 = vunpack.c.l.b16 %v806
      %v1122 = vunpack.c.l.b16 %v807
      %v1123 = vunpack.c.l.b16 %v808
      %v1124 = vunpack.c.l.b16 %v809
      %v1125 = vunpack.c.l.b16 %v810
      %v1126 = vunpack.c.l.b16 %v811
      %v1127 = vunpack.c.l.b16 %v812
      %v1128 = vunpack.c.l.b16 %v813
      %v1129 = vunpack.c.l.b16 %v814
      %v1130 = vunpack.c.l.b16 %v815
      %v1131 = vunpack.c.l.b16 %v816
      %v1132 = vunpack.c.l.b16 %v817
      %v1133 = vunpack.c.l.b16 %v818
      %v1134 = vunpack.c.l.b16 %v819
      %v1135 = vunpack.c.l.b16 %v820
      %v1136 = vunpack.c.l.b16 %v821
      %v1137 = vunpack.c.l.b16 %v822
      %v1138 = vunpack.c.l.b16 %v823
      %v1139 = vunpack.c.l.b16 %v824
      %v1140 = vunpack.c.l.b16 %v825
      %v1141 = vunpack.c.l.b16 %v826
      %v1142 = vunpack.c.l.b16 %v827
      %v1143 = vunpack.c.l.b16 %v828
      %v1144 = vunpack.c.l.b16 %v829
      %v1145 = vunpack.c.l.b16 %v830
      %v1146 = vunpack.c.l.b16 %v831
      %v1147 = vunpack.c.l.b16 %v832
      %v1148 = vunpack.c.l.b16 %v833
      %v1149 = vunpack.c.l.b16 %v834
      %v1150 = vunpack.c.l.b16 %v835
      %v1151 = vunpack.c.l.b16 %v836
      %v1152 = vunpack.c.l.b16 %v837
      %v1153 = vunpack.c.l.b16 %v838
      %v1154 = vunpack.c.l.b16 %v839
      %v1155 = vunpack.c.l.b16 %v840
      %v1156 = vunpack.c.l.b16 %v841
      %v1157 = vunpack.c.l.b16 %v842
      %v1158 = vunpack.c.l.b16 %v843
      %v1159 = vunpack.c.l.b16 %v844
      %v1160 = vunpack.c.l.b16 %v845
      %v1161 = vunpack.c.l.b16 %v846
      %v1162 = vunpack.c.l.b16 %v847
      %v1163 = vunpack.c.l.b16 %v848
      %v1164 = vunpack.c.l.b16 %v849
      %v1165 = vunpack.c.l.b16 %v850
      %v1166 = vunpack.c.l.b16 %v851
      %v1167 = vunpack.c.l.b16 %v852
      %v1168 = vunpack.c.l.b16 %v853
      %v1169 = vunpack.c.l.b16 %v854
      %v1170 = vunpack.c.l.b16 %v855
      %v1171 = vunpack.c.l.b16 %v856
      %v1172 = vunpack.c.l.b16 %v857
      %v1173 = vunpack.c.l.b16 %v858
      %v1174 = vunpack.c.l.b16 %v859
      %v1175 = vunpack.c.l.b16 %v860
      %v1176 = vunpack.c.l.b16 %v861
      %v1177 = vunpack.c.l.b16 %v862
      %v1178 = vunpack.c.l.b16 %v863
      %v1179 = vunpack.c.l.b16 %v864
      %v1180 = vunpack.c.l.b16 %v865
      %v1181 = vunpack.c.l.b16 %v866
      %v1182 = vunpack.c.l.b16 %v867
      %v1183 = vunpack.c.l.b16 %v868
      %v1184 = vunpack.c.l.b16 %v869
      %v1185 = vunpack.c.l.b16 %v870
      %v1186 = vunpack.c.l.b16 %v871
      %v1187 = vunpack.c.l.b16 %v872
      %v1188 = vunpack.c.l.b16 %v873
      %v1189 = vunpack.c.l.b16 %v874
      %v1190 = vunpack.c.l.b16 %v875
      %v1191 = vunpack.c.l.b16 %v876
      %v1192 = vunpack.c.l.b16 %v877
      %v1193 = vunpack.c.l.b16 %v878
      %v1194 = vunpack.c.l.b16 %v879
      %v1195 = vpack.c.b16 %v1098, %v1097
      %v1196 = vpack.c.b16 %v1100, %v1099
      %v1197 = vpack.c.b16 %v1102, %v1101
      %v1198 = vpack.c.b16 %v1104, %v1103
      %v1199 = vpack.c.b16 %v1106, %v1105
      %v1200 = vpack.c.b16 %v1108, %v1107
      %v1201 = vpack.c.b16 %v1110, %v1109
      %v1202 = vpack.c.b16 %v1112, %v1111
      %v1203 = vpack.c.b16 %v1114, %v1113
      %v1204 = vpack.c.b16 %v1116, %v1115
      %v1205 = vpack.c.b16 %v1118, %v1117
      %v1206 = vpack.c.b16 %v1120, %v1119
      %v1207 = vpack.c.b16 %v1122, %v1121
      %v1208 = vpack.c.b16 %v1124, %v1123
      %v1209 = vpack.c.b16 %v1126, %v1125
      %v1210 = vpack.c.b16 %v1128, %v1127
      %v1211 = vpack.c.b16 %v1130, %v1129
      %v1212 = vpack.c.b16 %v1132, %v1131
      %v1213 = vpack.c.b16 %v1134, %v1133
      %v1214 = vpack.c.b16 %v1136, %v1135
      %v1215 = vpack.c.b16 %v1138, %v1137
      %v1216 = vpack.c.b16 %v1140, %v1139
      %v1217 = vpack.c.b16 %v1142, %v1141
      %v1218 = vpack.c.b16 %v1144, %v1143
      %v1219 = vpack.c.b16 %v1146, %v1145
      %v1220 = vpack.c.b16 %v1148, %v1147
      %v1221 = vpack.c.b16 %v1150, %v1149
      %v1222 = vpack.c.b16 %v1152, %v1151
      %v1223 = vpack.c.b16 %v1154, %v1153
      %v1224 = vpack.c.b16 %v1156, %v1155
      %v1225 = vpack.c.b16 %v1158, %v1157
      %v1226 = vpack.c.b16 %v1160, %v1159
      %v1227 = vpack.c.b16 %v1162, %v1161
      %v1228 = vpack.c.b16 %v1164, %v1163
      %v1229 = vpack.c.b16 %v1166, %v1165
      %v1230 = vpack.c.b16 %v1168, %v1167
      %v1231 = vpack.c.b16 %v1170, %v1169
      %v1232 = vpack.c.b16 %v1172, %v1171
      %v1233 = vpack.c.b16 %v1174, %v1173
      %v1234 = vpack.c.b16 %v1176, %v1175
      %v1235 = vpack.c.b16 %v1178, %v1177
      %v1236 = vpack.c.b16 %v1180, %v1179
      %v1237 = vpack.c.b16 %v1182, %v1181
      %v1238 = vpack.c.b16 %v1184, %v1183
      %v1239 = vpack.c.b16 %v1186, %v1185
      %v1240 = vpack.c.b16 %v1188, %v1187
      %v1241 = vpack.c.b16 %v1190, %v1189
      %v1242 = vpack.c.b16 %v1192, %v1191
      %v1243 = vpack.c.b16 %v1194, %v1193
      %vm1293 = vcmask 130048
      %v1295 = vsel %vm1293, %v887, 0
      %v1298 = vsel %vm1293, %v894, 0
      %v1301 = vsel %vm1293, %v901, 0
      %v1304 = vsel %vm1293, %v908, 0
      %v1307 = vsel %vm1293, %v915, 0
      %v1310 = vsel %vm1293, %v922, 0
      %v1313 = vsel %vm1293, %v929, 0
      %v1316 = vsel %vm1293, %v936, 0
      %v1319 = vsel %vm1293, %v943, 0
      %v1322 = vsel %vm1293, %v950, 0
      %v1325 = vsel %vm1293, %v957, 0
      %v1328 = vsel %vm1293, %v964, 0
      %v1331 = vsel %vm1293, %v971, 0
      %v1334 = vsel %vm1293, %v978, 0
      %v1337 = vsel %vm1293, %v985, 0
      %v1340 = vsel %vm1293, %v992, 0
      %1342 = vmatprep.subr.bf16.mxu0 0
      %1343 = vmatpush1.bf16.msra.mxu0 %v1202
      %1344 = vmatprep.subr.bf16.mxu0 0
      %1345 = vmatpush1.bf16.msra.mxu0 %v1201
      %1346 = vmatprep.subr.bf16.mxu0 0
      %1347 = vmatpush1.bf16.msra.mxu0 %v1200
      %1348 = vmatprep.subr.bf16.mxu0 0
      %1349 = vmatpush1.bf16.msra.mxu0 %v1199
      %1350 = vmatprep.subr.bf16.mxu0 0
      %1351 = vmatpush1.bf16.msra.mxu0 %v1198
      %1352 = vmatprep.subr.bf16.mxu0 0
      %1353 = vmatpush1.bf16.msra.mxu0 %v1197
      %1354 = vmatprep.subr.bf16.mxu0 0
      %1355 = vmatpush1.bf16.msra.mxu0 %v1196
      %1356 = vmatprep.subr.bf16.mxu0 0
      %1357 = vmatpush1.bf16.msra.mxu0 %v1195
      %1358 = vmatprep.subr.bf16.mxu0 0
      %1359 = vmatpush2.bf16.msra.mxu0 %v1210
      %1360 = vmatprep.subr.bf16.mxu0 0
      %1361 = vmatpush2.bf16.msra.mxu0 %v1209
      %1362 = vmatprep.subr.bf16.mxu0 0
      %1363 = vmatpush2.bf16.msra.mxu0 %v1208
      %1364 = vmatprep.subr.bf16.mxu0 0
      %1365 = vmatpush2.bf16.msra.mxu0 %v1207
      %1366 = vmatprep.subr.bf16.mxu0 0
      %1367 = vmatpush2.bf16.msra.mxu0 %v1206
      %1368 = vmatprep.subr.bf16.mxu0 0
      %1369 = vmatpush2.bf16.msra.mxu0 %v1205
      %1370 = vmatprep.subr.bf16.mxu0 0
      %1371 = vmatpush2.bf16.msra.mxu0 %v1204
      %1372 = vmatprep.subr.bf16.mxu0 0
      %1373 = vmatpush2.bf16.msra.mxu0 %v1203
      %1374 = vmatprep.mubr.bf16.mxu0 %v882
      %1375 = vmatmul.mubr.bf16.gmra.mxu0 %v881
      %v1376 = vpop.f32.mrf.mxu0
      %v1377 = vadd.f32 %v997, %v1376
      %v1378 = vpop.f32.mrf.mxu0
      %v1379 = vpop.f32.mrf.mxu0
      %v1380 = vadd.f32 %v997, %v1379
      %v1381 = vpop.f32.mrf.mxu0
      %1382 = vmatprep.mubr.bf16.mxu0 %v889
      %1383 = vmatmul.mubr.bf16.gmra.mxu0 %v888
      %v1384 = vpop.f32.mrf.mxu0
      %v1385 = vadd.f32 %v997, %v1384
      %v1386 = vpop.f32.mrf.mxu0
      %v1387 = vpop.f32.mrf.mxu0
      %v1388 = vadd.f32 %v997, %v1387
      %v1389 = vpop.f32.mrf.mxu0
      %1390 = vmatprep.mubr.bf16.mxu0 %v896
      %1391 = vmatmul.mubr.bf16.gmra.mxu0 %v895
      %v1392 = vpop.f32.mrf.mxu0
      %v1393 = vadd.f32 %v997, %v1392
      %v1394 = vpop.f32.mrf.mxu0
      %v1395 = vpop.f32.mrf.mxu0
      %v1396 = vadd.f32 %v997, %v1395
      %v1397 = vpop.f32.mrf.mxu0
      %1398 = vmatprep.mubr.bf16.mxu0 %v903
      %1399 = vmatmul.mubr.bf16.gmra.mxu0 %v902
      %v1400 = vpop.f32.mrf.mxu0
      %v1401 = vadd.f32 %v997, %v1400
      %v1402 = vpop.f32.mrf.mxu0
      %v1403 = vpop.f32.mrf.mxu0
      %v1404 = vadd.f32 %v997, %v1403
      %v1405 = vpop.f32.mrf.mxu0
      %1406 = vmatprep.mubr.bf16.mxu0 %v910
      %1407 = vmatmul.mubr.bf16.gmra.mxu0 %v909
      %v1408 = vpop.f32.mrf.mxu0
      %v1409 = vadd.f32 %v997, %v1408
      %v1410 = vpop.f32.mrf.mxu0
      %v1411 = vpop.f32.mrf.mxu0
      %v1412 = vadd.f32 %v997, %v1411
      %v1413 = vpop.f32.mrf.mxu0
      %1414 = vmatprep.mubr.bf16.mxu0 %v917
      %1415 = vmatmul.mubr.bf16.gmra.mxu0 %v916
      %v1416 = vpop.f32.mrf.mxu0
      %v1417 = vadd.f32 %v997, %v1416
      %v1418 = vpop.f32.mrf.mxu0
      %v1419 = vpop.f32.mrf.mxu0
      %v1420 = vadd.f32 %v997, %v1419
      %v1421 = vpop.f32.mrf.mxu0
      %1422 = vmatprep.mubr.bf16.mxu0 %v924
      %1423 = vmatmul.mubr.bf16.gmra.mxu0 %v923
      %v1424 = vpop.f32.mrf.mxu0
      %v1425 = vadd.f32 %v997, %v1424
      %v1426 = vpop.f32.mrf.mxu0
      %v1427 = vpop.f32.mrf.mxu0
      %v1428 = vadd.f32 %v997, %v1427
      %v1429 = vpop.f32.mrf.mxu0
      %1430 = vmatprep.mubr.bf16.mxu0 %v931
      %1431 = vmatmul.mubr.bf16.gmra.mxu0 %v930
      %v1432 = vpop.f32.mrf.mxu0
      %v1433 = vadd.f32 %v997, %v1432
      %v1434 = vpop.f32.mrf.mxu0
      %v1435 = vpop.f32.mrf.mxu0
      %v1436 = vadd.f32 %v997, %v1435
      %v1437 = vpop.f32.mrf.mxu0
      %1438 = vmatprep.mubr.bf16.mxu0 %v938
      %1439 = vmatmul.mubr.bf16.gmra.mxu0 %v937
      %v1440 = vpop.f32.mrf.mxu0
      %v1441 = vadd.f32 %v997, %v1440
      %v1442 = vpop.f32.mrf.mxu0
      %v1443 = vpop.f32.mrf.mxu0
      %v1444 = vadd.f32 %v997, %v1443
      %v1445 = vpop.f32.mrf.mxu0
      %1446 = vmatprep.mubr.bf16.mxu0 %v945
      %1447 = vmatmul.mubr.bf16.gmra.mxu0 %v944
      %v1448 = vpop.f32.mrf.mxu0
      %v1449 = vadd.f32 %v997, %v1448
      %v1450 = vpop.f32.mrf.mxu0
      %v1451 = vpop.f32.mrf.mxu0
      %v1452 = vadd.f32 %v997, %v1451
      %v1453 = vpop.f32.mrf.mxu0
      %1454 = vmatprep.mubr.bf16.mxu0 %v952
      %1455 = vmatmul.mubr.bf16.gmra.mxu0 %v951
      %v1456 = vpop.f32.mrf.mxu0
      %v1457 = vadd.f32 %v997, %v1456
      %v1458 = vpop.f32.mrf.mxu0
      %v1459 = vpop.f32.mrf.mxu0
      %v1460 = vadd.f32 %v997, %v1459
      %v1461 = vpop.f32.mrf.mxu0
      %1462 = vmatprep.mubr.bf16.mxu0 %v959
      %1463 = vmatmul.mubr.bf16.gmra.mxu0 %v958
      %v1464 = vpop.f32.mrf.mxu0
      %v1465 = vadd.f32 %v997, %v1464
      %v1466 = vpop.f32.mrf.mxu0
      %v1467 = vpop.f32.mrf.mxu0
      %v1468 = vadd.f32 %v997, %v1467
      %v1469 = vpop.f32.mrf.mxu0
      %1470 = vmatprep.mubr.bf16.mxu0 %v966
      %1471 = vmatmul.mubr.bf16.gmra.mxu0 %v965
      %v1472 = vpop.f32.mrf.mxu0
      %v1473 = vadd.f32 %v997, %v1472
      %v1474 = vpop.f32.mrf.mxu0
      %v1475 = vpop.f32.mrf.mxu0
      %v1476 = vadd.f32 %v997, %v1475
      %v1477 = vpop.f32.mrf.mxu0
      %1478 = vmatprep.mubr.bf16.mxu0 %v973
      %1479 = vmatmul.mubr.bf16.gmra.mxu0 %v972
      %v1480 = vpop.f32.mrf.mxu0
      %v1481 = vadd.f32 %v997, %v1480
      %v1482 = vpop.f32.mrf.mxu0
      %v1483 = vpop.f32.mrf.mxu0
      %v1484 = vadd.f32 %v997, %v1483
      %v1485 = vpop.f32.mrf.mxu0
      %1486 = vmatprep.mubr.bf16.mxu0 %v980
      %1487 = vmatmul.mubr.bf16.gmra.mxu0 %v979
      %v1488 = vpop.f32.mrf.mxu0
      %v1489 = vadd.f32 %v997, %v1488
      %v1490 = vpop.f32.mrf.mxu0
      %v1491 = vpop.f32.mrf.mxu0
      %v1492 = vadd.f32 %v997, %v1491
      %v1493 = vpop.f32.mrf.mxu0
      %1494 = vmatprep.mubr.bf16.mxu0 %v987
      %1495 = vmatmul.mubr.bf16.gmra.mxu0 %v986
      %v1496 = vpop.f32.mrf.mxu0
      %v1497 = vadd.f32 %v997, %v1496
      %v1498 = vpop.f32.mrf.mxu0
      %v1499 = vpop.f32.mrf.mxu0
      %v1500 = vadd.f32 %v997, %v1499
      %v1501 = vpop.f32.mrf.mxu0
      %1502 = vdwg.mxu0
      %1503 = vmatprep.subr.bf16.mxu0 0
      %1504 = vmatpush1.bf16.msra.mxu0 %v1218
      %1505 = vmatprep.subr.bf16.mxu0 0
      %1506 = vmatpush1.bf16.msra.mxu0 %v1217
      %1507 = vmatprep.subr.bf16.mxu0 0
      %1508 = vmatpush1.bf16.msra.mxu0 %v1216
      %1509 = vmatprep.subr.bf16.mxu0 0
      %1510 = vmatpush1.bf16.msra.mxu0 %v1215
      %1511 = vmatprep.subr.bf16.mxu0 0
      %1512 = vmatpush1.bf16.msra.mxu0 %v1214
      %1513 = vmatprep.subr.bf16.mxu0 0
      %1514 = vmatpush1.bf16.msra.mxu0 %v1213
      %1515 = vmatprep.subr.bf16.mxu0 0
      %1516 = vmatpush1.bf16.msra.mxu0 %v1212
      %1517 = vmatprep.subr.bf16.mxu0 0
      %1518 = vmatpush1.bf16.msra.mxu0 %v1211
      %1519 = vmatprep.subr.bf16.mxu0 0
      %1520 = vmatpush2.bf16.msra.mxu0 %v1226
      %1521 = vmatprep.subr.bf16.mxu0 0
      %1522 = vmatpush2.bf16.msra.mxu0 %v1225
      %1523 = vmatprep.subr.bf16.mxu0 0
      %1524 = vmatpush2.bf16.msra.mxu0 %v1224
      %1525 = vmatprep.subr.bf16.mxu0 0
      %1526 = vmatpush2.bf16.msra.mxu0 %v1223
      %1527 = vmatprep.subr.bf16.mxu0 0
      %1528 = vmatpush2.bf16.msra.mxu0 %v1222
      %1529 = vmatprep.subr.bf16.mxu0 0
      %1530 = vmatpush2.bf16.msra.mxu0 %v1221
      %1531 = vmatprep.subr.bf16.mxu0 0
      %1532 = vmatpush2.bf16.msra.mxu0 %v1220
      %1533 = vmatprep.subr.bf16.mxu0 0
      %1534 = vmatpush2.bf16.msra.mxu0 %v1219
      %1535 = vmatprep.mubr.bf16.mxu0 %v884
      %1536 = vmatmul.mubr.bf16.gmra.mxu0 %v883
      %v1537 = vpop.f32.mrf.mxu0
      %v1538 = vadd.f32 %v1377, %v1537
      %v1539 = vpop.f32.mrf.mxu0
      %v1540 = vpop.f32.mrf.mxu0
      %v1541 = vadd.f32 %v1380, %v1540
      %v1542 = vpop.f32.mrf.mxu0
      %1543 = vmatprep.mubr.bf16.mxu0 %v891
      %1544 = vmatmul.mubr.bf16.gmra.mxu0 %v890
      %v1545 = vpop.f32.mrf.mxu0
      %v1546 = vadd.f32 %v1385, %v1545
      %v1547 = vpop.f32.mrf.mxu0
      %v1548 = vpop.f32.mrf.mxu0
      %v1549 = vadd.f32 %v1388, %v1548
      %v1550 = vpop.f32.mrf.mxu0
      %1551 = vmatprep.mubr.bf16.mxu0 %v898
      %1552 = vmatmul.mubr.bf16.gmra.mxu0 %v897
      %v1553 = vpop.f32.mrf.mxu0
      %v1554 = vadd.f32 %v1393, %v1553
      %v1555 = vpop.f32.mrf.mxu0
      %v1556 = vpop.f32.mrf.mxu0
      %v1557 = vadd.f32 %v1396, %v1556
      %v1558 = vpop.f32.mrf.mxu0
      %1559 = vmatprep.mubr.bf16.mxu0 %v905
      %1560 = vmatmul.mubr.bf16.gmra.mxu0 %v904
      %v1561 = vpop.f32.mrf.mxu0
      %v1562 = vadd.f32 %v1401, %v1561
      %v1563 = vpop.f32.mrf.mxu0
      %v1564 = vpop.f32.mrf.mxu0
      %v1565 = vadd.f32 %v1404, %v1564
      %v1566 = vpop.f32.mrf.mxu0
      %1567 = vmatprep.mubr.bf16.mxu0 %v912
      %1568 = vmatmul.mubr.bf16.gmra.mxu0 %v911
      %v1569 = vpop.f32.mrf.mxu0
      %v1570 = vadd.f32 %v1409, %v1569
      %v1571 = vpop.f32.mrf.mxu0
      %v1572 = vpop.f32.mrf.mxu0
      %v1573 = vadd.f32 %v1412, %v1572
      %v1574 = vpop.f32.mrf.mxu0
      %1575 = vmatprep.mubr.bf16.mxu0 %v919
      %1576 = vmatmul.mubr.bf16.gmra.mxu0 %v918
      %v1577 = vpop.f32.mrf.mxu0
      %v1578 = vadd.f32 %v1417, %v1577
      %v1579 = vpop.f32.mrf.mxu0
      %v1580 = vpop.f32.mrf.mxu0
      %v1581 = vadd.f32 %v1420, %v1580
      %v1582 = vpop.f32.mrf.mxu0
      %1583 = vmatprep.mubr.bf16.mxu0 %v926
      %1584 = vmatmul.mubr.bf16.gmra.mxu0 %v925
      %v1585 = vpop.f32.mrf.mxu0
      %v1586 = vadd.f32 %v1425, %v1585
      %v1587 = vpop.f32.mrf.mxu0
      %v1588 = vpop.f32.mrf.mxu0
      %v1589 = vadd.f32 %v1428, %v1588
      %v1590 = vpop.f32.mrf.mxu0
      %1591 = vmatprep.mubr.bf16.mxu0 %v933
      %1592 = vmatmul.mubr.bf16.gmra.mxu0 %v932
      %v1593 = vpop.f32.mrf.mxu0
      %v1594 = vadd.f32 %v1433, %v1593
      %v1595 = vpop.f32.mrf.mxu0
      %v1596 = vpop.f32.mrf.mxu0
      %v1597 = vadd.f32 %v1436, %v1596
      %v1598 = vpop.f32.mrf.mxu0
      %1599 = vmatprep.mubr.bf16.mxu0 %v940
      %1600 = vmatmul.mubr.bf16.gmra.mxu0 %v939
      %v1601 = vpop.f32.mrf.mxu0
      %v1602 = vadd.f32 %v1441, %v1601
      %v1603 = vpop.f32.mrf.mxu0
      %v1604 = vpop.f32.mrf.mxu0
      %v1605 = vadd.f32 %v1444, %v1604
      %v1606 = vpop.f32.mrf.mxu0
      %1607 = vmatprep.mubr.bf16.mxu0 %v947
      %1608 = vmatmul.mubr.bf16.gmra.mxu0 %v946
      %v1609 = vpop.f32.mrf.mxu0
      %v1610 = vadd.f32 %v1449, %v1609
      %v1611 = vpop.f32.mrf.mxu0
      %v1612 = vpop.f32.mrf.mxu0
      %v1613 = vadd.f32 %v1452, %v1612
      %v1614 = vpop.f32.mrf.mxu0
      %1615 = vmatprep.mubr.bf16.mxu0 %v954
      %1616 = vmatmul.mubr.bf16.gmra.mxu0 %v953
      %v1617 = vpop.f32.mrf.mxu0
      %v1618 = vadd.f32 %v1457, %v1617
      %v1619 = vpop.f32.mrf.mxu0
      %v1620 = vpop.f32.mrf.mxu0
      %v1621 = vadd.f32 %v1460, %v1620
      %v1622 = vpop.f32.mrf.mxu0
      %1623 = vmatprep.mubr.bf16.mxu0 %v961
      %1624 = vmatmul.mubr.bf16.gmra.mxu0 %v960
      %v1625 = vpop.f32.mrf.mxu0
      %v1626 = vadd.f32 %v1465, %v1625
      %v1627 = vpop.f32.mrf.mxu0
      %v1628 = vpop.f32.mrf.mxu0
      %v1629 = vadd.f32 %v1468, %v1628
      %v1630 = vpop.f32.mrf.mxu0
      %1631 = vmatprep.mubr.bf16.mxu0 %v968
      %1632 = vmatmul.mubr.bf16.gmra.mxu0 %v967
      %v1633 = vpop.f32.mrf.mxu0
      %v1634 = vadd.f32 %v1473, %v1633
      %v1635 = vpop.f32.mrf.mxu0
      %v1636 = vpop.f32.mrf.mxu0
      %v1637 = vadd.f32 %v1476, %v1636
      %v1638 = vpop.f32.mrf.mxu0
      %1639 = vmatprep.mubr.bf16.mxu0 %v975
      %1640 = vmatmul.mubr.bf16.gmra.mxu0 %v974
      %v1641 = vpop.f32.mrf.mxu0
      %v1642 = vadd.f32 %v1481, %v1641
      %v1643 = vpop.f32.mrf.mxu0
      %v1644 = vpop.f32.mrf.mxu0
      %v1645 = vadd.f32 %v1484, %v1644
      %v1646 = vpop.f32.mrf.mxu0
      %1647 = vmatprep.mubr.bf16.mxu0 %v982
      %1648 = vmatmul.mubr.bf16.gmra.mxu0 %v981
      %v1649 = vpop.f32.mrf.mxu0
      %v1650 = vadd.f32 %v1489, %v1649
      %v1651 = vpop.f32.mrf.mxu0
      %v1652 = vpop.f32.mrf.mxu0
      %v1653 = vadd.f32 %v1492, %v1652
      %v1654 = vpop.f32.mrf.mxu0
      %1655 = vmatprep.mubr.bf16.mxu0 %v989
      %1656 = vmatmul.mubr.bf16.gmra.mxu0 %v988
      %v1657 = vpop.f32.mrf.mxu0
      %v1658 = vadd.f32 %v1497, %v1657
      %v1659 = vpop.f32.mrf.mxu0
      %v1660 = vpop.f32.mrf.mxu0
      %v1661 = vadd.f32 %v1500, %v1660
      %v1662 = vpop.f32.mrf.mxu0
      %1663 = vdwg.mxu0
      %1664 = vmatprep.subr.bf16.mxu0 0
      %1665 = vmatpush1.bf16.msra.mxu0 %v1234
      %1666 = vmatprep.subr.bf16.mxu0 0
      %1667 = vmatpush1.bf16.msra.mxu0 %v1233
      %1668 = vmatprep.subr.bf16.mxu0 0
      %1669 = vmatpush1.bf16.msra.mxu0 %v1232
      %1670 = vmatprep.subr.bf16.mxu0 0
      %1671 = vmatpush1.bf16.msra.mxu0 %v1231
      %1672 = vmatprep.subr.bf16.mxu0 0
      %1673 = vmatpush1.bf16.msra.mxu0 %v1230
      %1674 = vmatprep.subr.bf16.mxu0 0
      %1675 = vmatpush1.bf16.msra.mxu0 %v1229
      %1676 = vmatprep.subr.bf16.mxu0 0
      %1677 = vmatpush1.bf16.msra.mxu0 %v1228
      %1678 = vmatprep.subr.bf16.mxu0 0
      %1679 = vmatpush1.bf16.msra.mxu0 %v1227
      %1680 = vmatprep.subr.bf16.mxu0 0
      %1681 = vmatpush2.bf16.msra.mxu0 %v1242
      %1682 = vmatprep.subr.bf16.mxu0 0
      %1683 = vmatpush2.bf16.msra.mxu0 %v1241
      %1684 = vmatprep.subr.bf16.mxu0 0
      %1685 = vmatpush2.bf16.msra.mxu0 %v1240
      %1686 = vmatprep.subr.bf16.mxu0 0
      %1687 = vmatpush2.bf16.msra.mxu0 %v1239
      %1688 = vmatprep.subr.bf16.mxu0 0
      %1689 = vmatpush2.bf16.msra.mxu0 %v1238
      %1690 = vmatprep.subr.bf16.mxu0 0
      %1691 = vmatpush2.bf16.msra.mxu0 %v1237
      %1692 = vmatprep.subr.bf16.mxu0 0
      %1693 = vmatpush2.bf16.msra.mxu0 %v1236
      %1694 = vmatprep.subr.bf16.mxu0 0
      %1695 = vmatpush2.bf16.msra.mxu0 %v1235
      %1696 = vmatprep.mubr.bf16.mxu0 %v886
      %1697 = vmatmul.mubr.bf16.gmra.mxu0 %v885
      %v1698 = vpop.f32.mrf.mxu0
      %v1699 = vadd.f32 %v1538, %v1698
      %v1700 = vpop.f32.mrf.mxu0
      %v1701 = vpop.f32.mrf.mxu0
      %v1702 = vadd.f32 %v1541, %v1701
      %v1703 = vpop.f32.mrf.mxu0
      %1704 = vmatprep.mubr.bf16.mxu0 %v893
      %1705 = vmatmul.mubr.bf16.gmra.mxu0 %v892
      %v1706 = vpop.f32.mrf.mxu0
      %v1707 = vadd.f32 %v1546, %v1706
      %v1708 = vpop.f32.mrf.mxu0
      %v1709 = vpop.f32.mrf.mxu0
      %v1710 = vadd.f32 %v1549, %v1709
      %v1711 = vpop.f32.mrf.mxu0
      %1712 = vmatprep.mubr.bf16.mxu0 %v900
      %1713 = vmatmul.mubr.bf16.gmra.mxu0 %v899
      %v1714 = vpop.f32.mrf.mxu0
      %v1715 = vadd.f32 %v1554, %v1714
      %v1716 = vpop.f32.mrf.mxu0
      %v1717 = vpop.f32.mrf.mxu0
      %v1718 = vadd.f32 %v1557, %v1717
      %v1719 = vpop.f32.mrf.mxu0
      %1720 = vmatprep.mubr.bf16.mxu0 %v907
      %1721 = vmatmul.mubr.bf16.gmra.mxu0 %v906
      %v1722 = vpop.f32.mrf.mxu0
      %v1723 = vadd.f32 %v1562, %v1722
      %v1724 = vpop.f32.mrf.mxu0
      %v1725 = vpop.f32.mrf.mxu0
      %v1726 = vadd.f32 %v1565, %v1725
      %v1727 = vpop.f32.mrf.mxu0
      %1728 = vmatprep.mubr.bf16.mxu0 %v914
      %1729 = vmatmul.mubr.bf16.gmra.mxu0 %v913
      %v1730 = vpop.f32.mrf.mxu0
      %v1731 = vadd.f32 %v1570, %v1730
      %v1732 = vpop.f32.mrf.mxu0
      %v1733 = vpop.f32.mrf.mxu0
      %v1734 = vadd.f32 %v1573, %v1733
      %v1735 = vpop.f32.mrf.mxu0
      %1736 = vmatprep.mubr.bf16.mxu0 %v921
      %1737 = vmatmul.mubr.bf16.gmra.mxu0 %v920
      %v1738 = vpop.f32.mrf.mxu0
      %v1739 = vadd.f32 %v1578, %v1738
      %v1740 = vpop.f32.mrf.mxu0
      %v1741 = vpop.f32.mrf.mxu0
      %v1742 = vadd.f32 %v1581, %v1741
      %v1743 = vpop.f32.mrf.mxu0
      %1744 = vmatprep.mubr.bf16.mxu0 %v928
      %1745 = vmatmul.mubr.bf16.gmra.mxu0 %v927
      %v1746 = vpop.f32.mrf.mxu0
      %v1747 = vadd.f32 %v1586, %v1746
      %v1748 = vpop.f32.mrf.mxu0
      %v1749 = vpop.f32.mrf.mxu0
      %v1750 = vadd.f32 %v1589, %v1749
      %v1751 = vpop.f32.mrf.mxu0
      %1752 = vmatprep.mubr.bf16.mxu0 %v935
      %1753 = vmatmul.mubr.bf16.gmra.mxu0 %v934
      %v1754 = vpop.f32.mrf.mxu0
      %v1755 = vadd.f32 %v1594, %v1754
      %v1756 = vpop.f32.mrf.mxu0
      %v1757 = vpop.f32.mrf.mxu0
      %v1758 = vadd.f32 %v1597, %v1757
      %v1759 = vpop.f32.mrf.mxu0
      %1760 = vmatprep.mubr.bf16.mxu0 %v942
      %1761 = vmatmul.mubr.bf16.gmra.mxu0 %v941
      %v1762 = vpop.f32.mrf.mxu0
      %v1763 = vadd.f32 %v1602, %v1762
      %v1764 = vpop.f32.mrf.mxu0
      %v1765 = vpop.f32.mrf.mxu0
      %v1766 = vadd.f32 %v1605, %v1765
      %v1767 = vpop.f32.mrf.mxu0
      %1768 = vmatprep.mubr.bf16.mxu0 %v949
      %1769 = vmatmul.mubr.bf16.gmra.mxu0 %v948
      %v1770 = vpop.f32.mrf.mxu0
      %v1771 = vadd.f32 %v1610, %v1770
      %v1772 = vpop.f32.mrf.mxu0
      %v1773 = vpop.f32.mrf.mxu0
      %v1774 = vadd.f32 %v1613, %v1773
      %v1775 = vpop.f32.mrf.mxu0
      %1776 = vmatprep.mubr.bf16.mxu0 %v956
      %1777 = vmatmul.mubr.bf16.gmra.mxu0 %v955
      %v1778 = vpop.f32.mrf.mxu0
      %v1779 = vadd.f32 %v1618, %v1778
      %v1780 = vpop.f32.mrf.mxu0
      %v1781 = vpop.f32.mrf.mxu0
      %v1782 = vadd.f32 %v1621, %v1781
      %v1783 = vpop.f32.mrf.mxu0
      %1784 = vmatprep.mubr.bf16.mxu0 %v963
      %1785 = vmatmul.mubr.bf16.gmra.mxu0 %v962
      %v1786 = vpop.f32.mrf.mxu0
      %v1787 = vadd.f32 %v1626, %v1786
      %v1788 = vpop.f32.mrf.mxu0
      %v1789 = vpop.f32.mrf.mxu0
      %v1790 = vadd.f32 %v1629, %v1789
      %v1791 = vpop.f32.mrf.mxu0
      %1792 = vmatprep.mubr.bf16.mxu0 %v970
      %1793 = vmatmul.mubr.bf16.gmra.mxu0 %v969
      %v1794 = vpop.f32.mrf.mxu0
      %v1795 = vadd.f32 %v1634, %v1794
      %v1796 = vpop.f32.mrf.mxu0
      %v1797 = vpop.f32.mrf.mxu0
      %v1798 = vadd.f32 %v1637, %v1797
      %v1799 = vpop.f32.mrf.mxu0
      %1800 = vmatprep.mubr.bf16.mxu0 %v977
      %1801 = vmatmul.mubr.bf16.gmra.mxu0 %v976
      %v1802 = vpop.f32.mrf.mxu0
      %v1803 = vadd.f32 %v1642, %v1802
      %v1804 = vpop.f32.mrf.mxu0
      %v1805 = vpop.f32.mrf.mxu0
      %v1806 = vadd.f32 %v1645, %v1805
      %v1807 = vpop.f32.mrf.mxu0
      %1808 = vmatprep.mubr.bf16.mxu0 %v984
      %1809 = vmatmul.mubr.bf16.gmra.mxu0 %v983
      %v1810 = vpop.f32.mrf.mxu0
      %v1811 = vadd.f32 %v1650, %v1810
      %v1812 = vpop.f32.mrf.mxu0
      %v1813 = vpop.f32.mrf.mxu0
      %v1814 = vadd.f32 %v1653, %v1813
      %v1815 = vpop.f32.mrf.mxu0
      %1816 = vmatprep.mubr.bf16.mxu0 %v991
      %1817 = vmatmul.mubr.bf16.gmra.mxu0 %v990
      %v1818 = vpop.f32.mrf.mxu0
      %v1819 = vadd.f32 %v1658, %v1818
      %v1820 = vpop.f32.mrf.mxu0
      %v1821 = vpop.f32.mrf.mxu0
      %v1822 = vadd.f32 %v1661, %v1821
      %v1823 = vpop.f32.mrf.mxu0
      %1824 = vdwg.mxu0
      %1825 = vmatprep.subr.bf16.mxu0 0
      %1826 = vmatpush1.bf16.msra.mxu0 0
      %1827 = vmatprep.subr.bf16.mxu0 0
      %1828 = vmatpush1.bf16.msra.mxu0 0
      %1829 = vmatprep.subr.bf16.mxu0 0
      %1830 = vmatpush1.bf16.msra.mxu0 0
      %1831 = vmatprep.subr.bf16.mxu0 0
      %1832 = vmatpush1.bf16.msra.mxu0 0
      %1833 = vmatprep.subr.bf16.mxu0 0
      %1834 = vmatpush1.bf16.msra.mxu0 0
      %1835 = vmatprep.subr.bf16.mxu0 0
      %1836 = vmatpush1.bf16.msra.mxu0 0
      %1837 = vmatprep.subr.bf16.mxu0 0
      %1838 = vmatpush1.bf16.msra.mxu0 0
      %1839 = vmatprep.subr.bf16.mxu0 0
      %1840 = vmatpush1.bf16.msra.mxu0 %v1243
      %1841 = vmatprep.subr.bf16.mxu0 0
      %1842 = vmatpush2.bf16.msra.mxu0 0
      %1843 = vmatprep.subr.bf16.mxu0 0
      %1844 = vmatpush2.bf16.msra.mxu0 0
      %1845 = vmatprep.subr.bf16.mxu0 0
      %1846 = vmatpush2.bf16.msra.mxu0 0
      %1847 = vmatprep.subr.bf16.mxu0 0
      %1848 = vmatpush2.bf16.msra.mxu0 0
      %1849 = vmatprep.subr.bf16.mxu0 0
      %1850 = vmatpush2.bf16.msra.mxu0 0
      %1851 = vmatprep.subr.bf16.mxu0 0
      %1852 = vmatpush2.bf16.msra.mxu0 0
      %1853 = vmatprep.subr.bf16.mxu0 0
      %1854 = vmatpush2.bf16.msra.mxu0 0
      %1855 = vmatprep.subr.bf16.mxu0 0
      %1856 = vmatpush2.bf16.msra.mxu0 0
      %1857 = vmatprep.mubr.bf16.mxu0 0
      %1858 = vmatmul.mubr.bf16.gmra.mxu0 %v1295
      %v1859 = vpop.f32.mrf.mxu0
      %v1860 = vadd.f32 %v1699, %v1859
      %v1861 = vpop.f32.mrf.mxu0
      %v1862 = vpop.f32.mrf.mxu0
      %v1863 = vadd.f32 %v1702, %v1862
      %v1864 = vpop.f32.mrf.mxu0
      %1865 = vmatprep.mubr.bf16.mxu0 0
      %1866 = vmatmul.mubr.bf16.gmra.mxu0 %v1298
      %v1867 = vpop.f32.mrf.mxu0
      %v1868 = vadd.f32 %v1707, %v1867
      %v1869 = vpop.f32.mrf.mxu0
      %v1870 = vpop.f32.mrf.mxu0
      %v1871 = vadd.f32 %v1710, %v1870
      %v1872 = vpop.f32.mrf.mxu0
      %1873 = vmatprep.mubr.bf16.mxu0 0
      %1874 = vmatmul.mubr.bf16.gmra.mxu0 %v1301
      %v1875 = vpop.f32.mrf.mxu0
      %v1876 = vadd.f32 %v1715, %v1875
      %v1877 = vpop.f32.mrf.mxu0
      %v1878 = vpop.f32.mrf.mxu0
      %v1879 = vadd.f32 %v1718, %v1878
      %v1880 = vpop.f32.mrf.mxu0
      %1881 = vmatprep.mubr.bf16.mxu0 0
      %1882 = vmatmul.mubr.bf16.gmra.mxu0 %v1304
      %v1883 = vpop.f32.mrf.mxu0
      %v1884 = vadd.f32 %v1723, %v1883
      %v1885 = vpop.f32.mrf.mxu0
      %v1886 = vpop.f32.mrf.mxu0
      %v1887 = vadd.f32 %v1726, %v1886
      %v1888 = vpop.f32.mrf.mxu0
      %1889 = vmatprep.mubr.bf16.mxu0 0
      %1890 = vmatmul.mubr.bf16.gmra.mxu0 %v1307
      %v1891 = vpop.f32.mrf.mxu0
      %v1892 = vadd.f32 %v1731, %v1891
      %v1893 = vpop.f32.mrf.mxu0
      %v1894 = vpop.f32.mrf.mxu0
      %v1895 = vadd.f32 %v1734, %v1894
      %v1896 = vpop.f32.mrf.mxu0
      %1897 = vmatprep.mubr.bf16.mxu0 0
      %1898 = vmatmul.mubr.bf16.gmra.mxu0 %v1310
      %v1899 = vpop.f32.mrf.mxu0
      %v1900 = vadd.f32 %v1739, %v1899
      %v1901 = vpop.f32.mrf.mxu0
      %v1902 = vpop.f32.mrf.mxu0
      %v1903 = vadd.f32 %v1742, %v1902
      %v1904 = vpop.f32.mrf.mxu0
      %1905 = vmatprep.mubr.bf16.mxu0 0
      %1906 = vmatmul.mubr.bf16.gmra.mxu0 %v1313
      %v1907 = vpop.f32.mrf.mxu0
      %v1908 = vadd.f32 %v1747, %v1907
      %v1909 = vpop.f32.mrf.mxu0
      %v1910 = vpop.f32.mrf.mxu0
      %v1911 = vadd.f32 %v1750, %v1910
      %v1912 = vpop.f32.mrf.mxu0
      %1913 = vmatprep.mubr.bf16.mxu0 0
      %1914 = vmatmul.mubr.bf16.gmra.mxu0 %v1316
      %v1915 = vpop.f32.mrf.mxu0
      %v1916 = vadd.f32 %v1755, %v1915
      %v1917 = vpop.f32.mrf.mxu0
      %v1918 = vpop.f32.mrf.mxu0
      %v1919 = vadd.f32 %v1758, %v1918
      %v1920 = vpop.f32.mrf.mxu0
      %1921 = vmatprep.mubr.bf16.mxu0 0
      %1922 = vmatmul.mubr.bf16.gmra.mxu0 %v1319
      %v1923 = vpop.f32.mrf.mxu0
      %v1924 = vadd.f32 %v1763, %v1923
      %v1925 = vpop.f32.mrf.mxu0
      %v1926 = vpop.f32.mrf.mxu0
      %v1927 = vadd.f32 %v1766, %v1926
      %v1928 = vpop.f32.mrf.mxu0
      %1929 = vmatprep.mubr.bf16.mxu0 0
      %1930 = vmatmul.mubr.bf16.gmra.mxu0 %v1322
      %v1931 = vpop.f32.mrf.mxu0
      %v1932 = vadd.f32 %v1771, %v1931
      %v1933 = vpop.f32.mrf.mxu0
      %v1934 = vpop.f32.mrf.mxu0
      %v1935 = vadd.f32 %v1774, %v1934
      %v1936 = vpop.f32.mrf.mxu0
      %1937 = vmatprep.mubr.bf16.mxu0 0
      %1938 = vmatmul.mubr.bf16.gmra.mxu0 %v1325
      %v1939 = vpop.f32.mrf.mxu0
      %v1940 = vadd.f32 %v1779, %v1939
      %v1941 = vpop.f32.mrf.mxu0
      %v1942 = vpop.f32.mrf.mxu0
      %v1943 = vadd.f32 %v1782, %v1942
      %v1944 = vpop.f32.mrf.mxu0
      %1945 = vmatprep.mubr.bf16.mxu0 0
      %1946 = vmatmul.mubr.bf16.gmra.mxu0 %v1328
      %v1947 = vpop.f32.mrf.mxu0
      %v1948 = vadd.f32 %v1787, %v1947
      %v1949 = vpop.f32.mrf.mxu0
      %v1950 = vpop.f32.mrf.mxu0
      %v1951 = vadd.f32 %v1790, %v1950
      %v1952 = vpop.f32.mrf.mxu0
      %1953 = vmatprep.mubr.bf16.mxu0 0
      %1954 = vmatmul.mubr.bf16.gmra.mxu0 %v1331
      %v1955 = vpop.f32.mrf.mxu0
      %v1956 = vadd.f32 %v1795, %v1955
      %v1957 = vpop.f32.mrf.mxu0
      %v1958 = vpop.f32.mrf.mxu0
      %v1959 = vadd.f32 %v1798, %v1958
      %v1960 = vpop.f32.mrf.mxu0
      %1961 = vmatprep.mubr.bf16.mxu0 0
      %1962 = vmatmul.mubr.bf16.gmra.mxu0 %v1334
      %v1963 = vpop.f32.mrf.mxu0
      %v1964 = vadd.f32 %v1803, %v1963
      %v1965 = vpop.f32.mrf.mxu0
      %v1966 = vpop.f32.mrf.mxu0
      %v1967 = vadd.f32 %v1806, %v1966
      %v1968 = vpop.f32.mrf.mxu0
      %1969 = vmatprep.mubr.bf16.mxu0 0
      %1970 = vmatmul.mubr.bf16.gmra.mxu0 %v1337
      %v1971 = vpop.f32.mrf.mxu0
      %v1972 = vadd.f32 %v1811, %v1971
      %v1973 = vpop.f32.mrf.mxu0
      %v1974 = vpop.f32.mrf.mxu0
      %v1975 = vadd.f32 %v1814, %v1974
      %v1976 = vpop.f32.mrf.mxu0
      %1977 = vmatprep.mubr.bf16.mxu0 0
      %1978 = vmatmul.mubr.bf16.gmra.mxu0 %v1340
      %v1979 = vpop.f32.mrf.mxu0
      %v1980 = vadd.f32 %v1819, %v1979
      %v1981 = vpop.f32.mrf.mxu0
      %v1982 = vpop.f32.mrf.mxu0
      %v1983 = vadd.f32 %v1822, %v1982
      %v1984 = vpop.f32.mrf.mxu0
      %1985 = vdwg.mxu0
      %v1986 = vmax.f32 %v1860, 0.0
      %v1987 = vmax.f32 %v1863, 0.0
      %v1988 = vmax.f32 %v1868, 0.0
      %v1989 = vmax.f32 %v1871, 0.0
      %v1990 = vmax.f32 %v1876, 0.0
      %v1991 = vmax.f32 %v1879, 0.0
      %v1992 = vmax.f32 %v1884, 0.0
      %v1993 = vmax.f32 %v1887, 0.0
      %v1994 = vmax.f32 %v1892, 0.0
      %v1995 = vmax.f32 %v1895, 0.0
      %v1996 = vmax.f32 %v1900, 0.0
      %v1997 = vmax.f32 %v1903, 0.0
      %v1998 = vmax.f32 %v1908, 0.0
      %v1999 = vmax.f32 %v1911, 0.0
      %v2000 = vmax.f32 %v1916, 0.0
      %v2001 = vmax.f32 %v1919, 0.0
      %v2002 = vmax.f32 %v1924, 0.0
      %v2003 = vmax.f32 %v1927, 0.0
      %v2004 = vmax.f32 %v1932, 0.0
      %v2005 = vmax.f32 %v1935, 0.0
      %v2006 = vmax.f32 %v1940, 0.0
      %v2007 = vmax.f32 %v1943, 0.0
      %v2008 = vmax.f32 %v1948, 0.0
      %v2009 = vmax.f32 %v1951, 0.0
      %v2010 = vmax.f32 %v1956, 0.0
      %v2011 = vmax.f32 %v1959, 0.0
      %v2012 = vmax.f32 %v1964, 0.0
      %v2013 = vmax.f32 %v1967, 0.0
      %v2014 = vmax.f32 %v1972, 0.0
      %v2015 = vmax.f32 %v1975, 0.0
      %v2016 = vmax.f32 %v1980, 0.0
      %v2017 = vmax.f32 %v1983, 0.0
      %v2018 = vld [vmem:[%s3] sm:$0xf]
      %v2019 = vld [vmem:[%s3 + $0x4] sm:$0xf]
      %v2020 = vld [vmem:[%s3 + $0x8] sm:$0xf]
      %v2021 = vld [vmem:[%s3 + $0xc] sm:$0xf]
      %v2022 = vld [vmem:[%s3 + $0x10] sm:$0xf]
      %v2023 = vld [vmem:[%s3 + $0x14] sm:$0xf]
      %v2024 = vld [vmem:[%s3 + $0x18] sm:$0xf]
      %v2025 = vld [vmem:[%s3 + $0x1c] sm:$0xf]
      %v2026 = vld [vmem:[%s3 + $0x20] sm:$0xf]
      %v2027 = vld [vmem:[%s3 + $0x24] sm:$0xf]
      %v2028 = vld [vmem:[%s3 + $0x28] sm:$0xf]
      %v2029 = vld [vmem:[%s3 + $0x2c] sm:$0xf]
      %v2030 = vld [vmem:[%s3 + $0x30] sm:$0xf]
      %v2031 = vld [vmem:[%s3 + $0x34] sm:$0xf]
      %v2032 = vld [vmem:[%s3 + $0x38] sm:$0xf]
      %v2033 = vld [vmem:[%s3 + $0x3c] sm:$0xf]
      %v2034 = vld [vmem:[%s4] sm:$0x1]
      %v2035 = vpack.c.bf16 %v1987, %v1986
      %v2036 = vpack.c.bf16 %v1989, %v1988
      %v2037 = vpack.c.bf16 %v1991, %v1990
      %v2038 = vpack.c.bf16 %v1993, %v1992
      %v2039 = vpack.c.bf16 %v1995, %v1994
      %v2040 = vpack.c.bf16 %v1997, %v1996
      %v2041 = vpack.c.bf16 %v1999, %v1998
      %v2042 = vpack.c.bf16 %v2001, %v2000
      %v2043 = vpack.c.bf16 %v2003, %v2002
      %v2044 = vpack.c.bf16 %v2005, %v2004
      %v2045 = vpack.c.bf16 %v2007, %v2006
      %v2046 = vpack.c.bf16 %v2009, %v2008
      %v2047 = vpack.c.bf16 %v2011, %v2010
      %v2048 = vpack.c.bf16 %v2013, %v2012
      %v2049 = vpack.c.bf16 %v2015, %v2014
      %v2050 = vpack.c.bf16 %v2017, %v2016
      %v2052 = vlaneseq
      %v2053 = vshrl.u32 %v2052, 7
      %v2054 = vsub.s32 0, %v2053
      %v2055 = vrot.slane %v2034, %v2054
      %v2073 = vunpack.c.l.b16 %v2018
      %v2074 = vunpack.c.l.b16 %v2019
      %v2075 = vunpack.c.l.b16 %v2020
      %v2076 = vunpack.c.l.b16 %v2021
      %v2077 = vunpack.c.l.b16 %v2022
      %v2078 = vunpack.c.l.b16 %v2023
      %v2079 = vunpack.c.l.b16 %v2024
      %v2080 = vunpack.c.l.b16 %v2025
      %v2081 = vunpack.c.l.b16 %v2026
      %v2082 = vunpack.c.l.b16 %v2027
      %v2083 = vunpack.c.l.b16 %v2028
      %v2084 = vunpack.c.l.b16 %v2029
      %v2085 = vunpack.c.l.b16 %v2030
      %v2086 = vunpack.c.l.b16 %v2031
      %v2087 = vunpack.c.l.b16 %v2032
      %v2088 = vunpack.c.l.b16 %v2033
      %v2089 = vpack.c.b16 %v2074, %v2073
      %v2090 = vpack.c.b16 %v2076, %v2075
      %v2091 = vpack.c.b16 %v2078, %v2077
      %v2092 = vpack.c.b16 %v2080, %v2079
      %v2093 = vpack.c.b16 %v2082, %v2081
      %v2094 = vpack.c.b16 %v2084, %v2083
      %v2095 = vpack.c.b16 %v2086, %v2085
      %v2096 = vpack.c.b16 %v2088, %v2087
      %2105 = vmatprep.subr.bf16.mxu0 0
      %2106 = vmatpush1.bf16.msra.mxu0 %v2096
      %2107 = vmatprep.subr.bf16.mxu0 0
      %2108 = vmatpush1.bf16.msra.mxu0 %v2095
      %2109 = vmatprep.subr.bf16.mxu0 0
      %2110 = vmatpush1.bf16.msra.mxu0 %v2094
      %2111 = vmatprep.subr.bf16.mxu0 0
      %2112 = vmatpush1.bf16.msra.mxu0 %v2093
      %2113 = vmatprep.subr.bf16.mxu0 0
      %2114 = vmatpush1.bf16.msra.mxu0 %v2092
      %2115 = vmatprep.subr.bf16.mxu0 0
      %2116 = vmatpush1.bf16.msra.mxu0 %v2091
      %2117 = vmatprep.subr.bf16.mxu0 0
      %2118 = vmatpush1.bf16.msra.mxu0 %v2090
      %2119 = vmatprep.subr.bf16.mxu0 0
      %2120 = vmatpush1.bf16.msra.mxu0 %v2089
      %2121 = vmatprep.subr.bf16.mxu0 0
      %2122 = vmatpush2.bf16.msra.mxu0 0
      %2123 = vmatprep.subr.bf16.mxu0 0
      %2124 = vmatpush2.bf16.msra.mxu0 0
      %2125 = vmatprep.subr.bf16.mxu0 0
      %2126 = vmatpush2.bf16.msra.mxu0 0
      %2127 = vmatprep.subr.bf16.mxu0 0
      %2128 = vmatpush2.bf16.msra.mxu0 0
      %2129 = vmatprep.subr.bf16.mxu0 0
      %2130 = vmatpush2.bf16.msra.mxu0 0
      %2131 = vmatprep.subr.bf16.mxu0 0
      %2132 = vmatpush2.bf16.msra.mxu0 0
      %2133 = vmatprep.subr.bf16.mxu0 0
      %2134 = vmatpush2.bf16.msra.mxu0 0
      %2135 = vmatprep.subr.bf16.mxu0 0
      %2136 = vmatpush2.bf16.msra.mxu0 0
      %2137 = vmatprep.mubr.bf16.mxu0 0
      %2138 = vmatmul.mubr.bf16.gmra.mxu0 %v2035
      %v2139 = vpop.f32.mrf.mxu0
      %v2140 = vadd.f32 %v2055, %v2139
      %v2141 = vpop.f32.mrf.mxu0
      %v2142 = vpop.f32.mrf.mxu0
      %v2143 = vadd.f32 %v2055, %v2142
      %v2144 = vpop.f32.mrf.mxu0
      %2145 = vmatprep.mubr.bf16.mxu0 0
      %2146 = vmatmul.mubr.bf16.gmra.mxu0 %v2036
      %v2147 = vpop.f32.mrf.mxu0
      %v2148 = vadd.f32 %v2055, %v2147
      %v2149 = vpop.f32.mrf.mxu0
      %v2150 = vpop.f32.mrf.mxu0
      %v2151 = vadd.f32 %v2055, %v2150
      %v2152 = vpop.f32.mrf.mxu0
      %2153 = vmatprep.mubr.bf16.mxu0 0
      %2154 = vmatmul.mubr.bf16.gmra.mxu0 %v2037
      %v2155 = vpop.f32.mrf.mxu0
      %v2156 = vadd.f32 %v2055, %v2155
      %v2157 = vpop.f32.mrf.mxu0
      %v2158 = vpop.f32.mrf.mxu0
      %v2159 = vadd.f32 %v2055, %v2158
      %v2160 = vpop.f32.mrf.mxu0
      %2161 = vmatprep.mubr.bf16.mxu0 0
      %2162 = vmatmul.mubr.bf16.gmra.mxu0 %v2038
      %v2163 = vpop.f32.mrf.mxu0
      %v2164 = vadd.f32 %v2055, %v2163
      %v2165 = vpop.f32.mrf.mxu0
      %v2166 = vpop.f32.mrf.mxu0
      %v2167 = vadd.f32 %v2055, %v2166
      %v2168 = vpop.f32.mrf.mxu0
      %2169 = vmatprep.mubr.bf16.mxu0 0
      %2170 = vmatmul.mubr.bf16.gmra.mxu0 %v2039
      %v2171 = vpop.f32.mrf.mxu0
      %v2172 = vadd.f32 %v2055, %v2171
      %v2173 = vpop.f32.mrf.mxu0
      %v2174 = vpop.f32.mrf.mxu0
      %v2175 = vadd.f32 %v2055, %v2174
      %v2176 = vpop.f32.mrf.mxu0
      %2177 = vmatprep.mubr.bf16.mxu0 0
      %2178 = vmatmul.mubr.bf16.gmra.mxu0 %v2040
      %v2179 = vpop.f32.mrf.mxu0
      %v2180 = vadd.f32 %v2055, %v2179
      %v2181 = vpop.f32.mrf.mxu0
      %v2182 = vpop.f32.mrf.mxu0
      %v2183 = vadd.f32 %v2055, %v2182
      %v2184 = vpop.f32.mrf.mxu0
      %2185 = vmatprep.mubr.bf16.mxu0 0
      %2186 = vmatmul.mubr.bf16.gmra.mxu0 %v2041
      %v2187 = vpop.f32.mrf.mxu0
      %v2188 = vadd.f32 %v2055, %v2187
      %v2189 = vpop.f32.mrf.mxu0
      %v2190 = vpop.f32.mrf.mxu0
      %v2191 = vadd.f32 %v2055, %v2190
      %v2192 = vpop.f32.mrf.mxu0
      %2193 = vmatprep.mubr.bf16.mxu0 0
      %2194 = vmatmul.mubr.bf16.gmra.mxu0 %v2042
      %v2195 = vpop.f32.mrf.mxu0
      %v2196 = vadd.f32 %v2055, %v2195
      %v2197 = vpop.f32.mrf.mxu0
      %v2198 = vpop.f32.mrf.mxu0
      %v2199 = vadd.f32 %v2055, %v2198
      %v2200 = vpop.f32.mrf.mxu0
      %2201 = vmatprep.mubr.bf16.mxu0 0
      %2202 = vmatmul.mubr.bf16.gmra.mxu0 %v2043
      %v2203 = vpop.f32.mrf.mxu0
      %v2204 = vadd.f32 %v2055, %v2203
      %v2205 = vpop.f32.mrf.mxu0
      %v2206 = vpop.f32.mrf.mxu0
      %v2207 = vadd.f32 %v2055, %v2206
      %v2208 = vpop.f32.mrf.mxu0
      %2209 = vmatprep.mubr.bf16.mxu0 0
      %2210 = vmatmul.mubr.bf16.gmra.mxu0 %v2044
      %v2211 = vpop.f32.mrf.mxu0
      %v2212 = vadd.f32 %v2055, %v2211
      %v2213 = vpop.f32.mrf.mxu0
      %v2214 = vpop.f32.mrf.mxu0
      %v2215 = vadd.f32 %v2055, %v2214
      %v2216 = vpop.f32.mrf.mxu0
      %2217 = vmatprep.mubr.bf16.mxu0 0
      %2218 = vmatmul.mubr.bf16.gmra.mxu0 %v2045
      %v2219 = vpop.f32.mrf.mxu0
      %v2220 = vadd.f32 %v2055, %v2219
      %v2221 = vpop.f32.mrf.mxu0
      %v2222 = vpop.f32.mrf.mxu0
      %v2223 = vadd.f32 %v2055, %v2222
      %v2224 = vpop.f32.mrf.mxu0
      %2225 = vmatprep.mubr.bf16.mxu0 0
      %2226 = vmatmul.mubr.bf16.gmra.mxu0 %v2046
      %v2227 = vpop.f32.mrf.mxu0
      %v2228 = vadd.f32 %v2055, %v2227
      %v2229 = vpop.f32.mrf.mxu0
      %v2230 = vpop.f32.mrf.mxu0
      %v2231 = vadd.f32 %v2055, %v2230
      %v2232 = vpop.f32.mrf.mxu0
      %2233 = vmatprep.mubr.bf16.mxu0 0
      %2234 = vmatmul.mubr.bf16.gmra.mxu0 %v2047
      %v2235 = vpop.f32.mrf.mxu0
      %v2236 = vadd.f32 %v2055, %v2235
      %v2237 = vpop.f32.mrf.mxu0
      %v2238 = vpop.f32.mrf.mxu0
      %v2239 = vadd.f32 %v2055, %v2238
      %v2240 = vpop.f32.mrf.mxu0
      %2241 = vmatprep.mubr.bf16.mxu0 0
      %2242 = vmatmul.mubr.bf16.gmra.mxu0 %v2048
      %v2243 = vpop.f32.mrf.mxu0
      %v2244 = vadd.f32 %v2055, %v2243
      %v2245 = vpop.f32.mrf.mxu0
      %v2246 = vpop.f32.mrf.mxu0
      %v2247 = vadd.f32 %v2055, %v2246
      %v2248 = vpop.f32.mrf.mxu0
      %2249 = vmatprep.mubr.bf16.mxu0 0
      %2250 = vmatmul.mubr.bf16.gmra.mxu0 %v2049
      %v2251 = vpop.f32.mrf.mxu0
      %v2252 = vadd.f32 %v2055, %v2251
      %v2253 = vpop.f32.mrf.mxu0
      %v2254 = vpop.f32.mrf.mxu0
      %v2255 = vadd.f32 %v2055, %v2254
      %v2256 = vpop.f32.mrf.mxu0
      %2257 = vmatprep.mubr.bf16.mxu0 0
      %2258 = vmatmul.mubr.bf16.gmra.mxu0 %v2050
      %v2259 = vpop.f32.mrf.mxu0
      %v2260 = vadd.f32 %v2055, %v2259
      %v2261 = vpop.f32.mrf.mxu0
      %v2262 = vpop.f32.mrf.mxu0
      %v2263 = vadd.f32 %v2055, %v2262
      %v2264 = vpop.f32.mrf.mxu0
      %2265 = vdwg.mxu0
      %v2266 = vmax.f32 %v2140, 0.0
      %v2267 = vmax.f32 %v2143, 0.0
      %v2268 = vmax.f32 %v2148, 0.0
      %v2269 = vmax.f32 %v2151, 0.0
      %v2270 = vmax.f32 %v2156, 0.0
      %v2271 = vmax.f32 %v2159, 0.0
      %v2272 = vmax.f32 %v2164, 0.0
      %v2273 = vmax.f32 %v2167, 0.0
      %v2274 = vmax.f32 %v2172, 0.0
      %v2275 = vmax.f32 %v2175, 0.0
      %v2276 = vmax.f32 %v2180, 0.0
      %v2277 = vmax.f32 %v2183, 0.0
      %v2278 = vmax.f32 %v2188, 0.0
      %v2279 = vmax.f32 %v2191, 0.0
      %v2280 = vmax.f32 %v2196, 0.0
      %v2281 = vmax.f32 %v2199, 0.0
      %v2282 = vmax.f32 %v2204, 0.0
      %v2283 = vmax.f32 %v2207, 0.0
      %v2284 = vmax.f32 %v2212, 0.0
      %v2285 = vmax.f32 %v2215, 0.0
      %v2286 = vmax.f32 %v2220, 0.0
      %v2287 = vmax.f32 %v2223, 0.0
      %v2288 = vmax.f32 %v2228, 0.0
      %v2289 = vmax.f32 %v2231, 0.0
      %v2290 = vmax.f32 %v2236, 0.0
      %v2291 = vmax.f32 %v2239, 0.0
      %v2292 = vmax.f32 %v2244, 0.0
      %v2293 = vmax.f32 %v2247, 0.0
      %v2294 = vmax.f32 %v2252, 0.0
      %v2295 = vmax.f32 %v2255, 0.0
      %v2296 = vmax.f32 %v2260, 0.0
      %v2297 = vmax.f32 %v2263, 0.0
      %v2298 = vld [vmem:[%s5] sm:$0xf]
      %v2299 = vld [vmem:[%s5 + $0x4] sm:$0xf]
      %v2300 = vld [vmem:[%s5 + $0x8] sm:$0xf]
      %v2301 = vld [vmem:[%s5 + $0xc] sm:$0xf]
      %v2302 = vld [vmem:[%s5 + $0x10] sm:$0xf]
      %v2303 = vld [vmem:[%s5 + $0x14] sm:$0xf]
      %v2304 = vld [vmem:[%s5 + $0x18] sm:$0xf]
      %v2305 = vld [vmem:[%s5 + $0x1c] sm:$0xf]
      %v2306 = vld [vmem:[%s6] sm:$0x1]
      %v2307 = vpack.c.bf16 %v2267, %v2266
      %v2308 = vpack.c.bf16 %v2269, %v2268
      %v2309 = vpack.c.bf16 %v2271, %v2270
      %v2310 = vpack.c.bf16 %v2273, %v2272
      %v2311 = vpack.c.bf16 %v2275, %v2274
      %v2312 = vpack.c.bf16 %v2277, %v2276
      %v2313 = vpack.c.bf16 %v2279, %v2278
      %v2314 = vpack.c.bf16 %v2281, %v2280
      %v2315 = vpack.c.bf16 %v2283, %v2282
      %v2316 = vpack.c.bf16 %v2285, %v2284
      %v2317 = vpack.c.bf16 %v2287, %v2286
      %v2318 = vpack.c.bf16 %v2289, %v2288
      %v2319 = vpack.c.bf16 %v2291, %v2290
      %v2320 = vpack.c.bf16 %v2293, %v2292
      %v2321 = vpack.c.bf16 %v2295, %v2294
      %v2322 = vpack.c.bf16 %v2297, %v2296
      %v2324 = vlaneseq
      %v2325 = vshrl.u32 %v2324, 7
      %v2326 = vsub.s32 0, %v2325
      %v2327 = vrot.slane %v2306, %v2326
      %v2337 = vunpack.c.l.b16 %v2298
      %v2338 = vunpack.c.l.b16 %v2299
      %v2339 = vunpack.c.l.b16 %v2300
      %v2340 = vunpack.c.l.b16 %v2301
      %v2341 = vunpack.c.l.b16 %v2302
      %v2342 = vunpack.c.l.b16 %v2303
      %v2343 = vunpack.c.l.b16 %v2304
      %v2344 = vunpack.c.l.b16 %v2305
      %v2345 = vpack.c.b16 %v2338, %v2337
      %v2346 = vpack.c.b16 %v2340, %v2339
      %v2347 = vpack.c.b16 %v2342, %v2341
      %v2348 = vpack.c.b16 %v2344, %v2343
      %vm2353 = vcmask 523264
      %v2355 = vsel %vm2353, %v2307, 0
      %v2358 = vsel %vm2353, %v2308, 0
      %v2361 = vsel %vm2353, %v2309, 0
      %v2364 = vsel %vm2353, %v2310, 0
      %v2367 = vsel %vm2353, %v2311, 0
      %v2370 = vsel %vm2353, %v2312, 0
      %v2373 = vsel %vm2353, %v2313, 0
      %v2376 = vsel %vm2353, %v2314, 0
      %v2379 = vsel %vm2353, %v2315, 0
      %v2382 = vsel %vm2353, %v2316, 0
      %v2385 = vsel %vm2353, %v2317, 0
      %v2388 = vsel %vm2353, %v2318, 0
      %v2391 = vsel %vm2353, %v2319, 0
      %v2394 = vsel %vm2353, %v2320, 0
      %v2397 = vsel %vm2353, %v2321, 0
      %v2400 = vsel %vm2353, %v2322, 0
      %2402 = vmatprep.subr.bf16.mxu0 0
      %2403 = vmatpush1.bf16.msra.mxu0 0
      %2404 = vmatprep.subr.bf16.mxu0 0
      %2405 = vmatpush1.bf16.msra.mxu0 0
      %2406 = vmatprep.subr.bf16.mxu0 0
      %2407 = vmatpush1.bf16.msra.mxu0 0
      %2408 = vmatprep.subr.bf16.mxu0 0
      %2409 = vmatpush1.bf16.msra.mxu0 0
      %2410 = vmatprep.subr.bf16.mxu0 0
      %2411 = vmatpush1.bf16.msra.mxu0 %v2348
      %2412 = vmatprep.subr.bf16.mxu0 0
      %2413 = vmatpush1.bf16.msra.mxu0 %v2347
      %2414 = vmatprep.subr.bf16.mxu0 0
      %2415 = vmatpush1.bf16.msra.mxu0 %v2346
      %2416 = vmatprep.subr.bf16.mxu0 0
      %2417 = vmatpush1.bf16.msra.mxu0 %v2345
      %2418 = vmatprep.subr.bf16.mxu0 0
      %2419 = vmatpush2.bf16.msra.mxu0 0
      %2420 = vmatprep.subr.bf16.mxu0 0
      %2421 = vmatpush2.bf16.msra.mxu0 0
      %2422 = vmatprep.subr.bf16.mxu0 0
      %2423 = vmatpush2.bf16.msra.mxu0 0
      %2424 = vmatprep.subr.bf16.mxu0 0
      %2425 = vmatpush2.bf16.msra.mxu0 0
      %2426 = vmatprep.subr.bf16.mxu0 0
      %2427 = vmatpush2.bf16.msra.mxu0 0
      %2428 = vmatprep.subr.bf16.mxu0 0
      %2429 = vmatpush2.bf16.msra.mxu0 0
      %2430 = vmatprep.subr.bf16.mxu0 0
      %2431 = vmatpush2.bf16.msra.mxu0 0
      %2432 = vmatprep.subr.bf16.mxu0 0
      %2433 = vmatpush2.bf16.msra.mxu0 0
      %2434 = vmatprep.mubr.bf16.mxu0 0
      %2435 = vmatmul.mubr.bf16.gmra.mxu0 %v2355
      %v2436 = vpop.f32.mrf.mxu0
      %v2437 = vadd.f32 %v2327, %v2436
      %v2438 = vpop.f32.mrf.mxu0
      %v2439 = vpop.f32.mrf.mxu0
      %v2440 = vadd.f32 %v2327, %v2439
      %v2441 = vpop.f32.mrf.mxu0
      %2442 = vmatprep.mubr.bf16.mxu0 0
      %2443 = vmatmul.mubr.bf16.gmra.mxu0 %v2358
      %v2444 = vpop.f32.mrf.mxu0
      %v2445 = vadd.f32 %v2327, %v2444
      %v2446 = vpop.f32.mrf.mxu0
      %v2447 = vpop.f32.mrf.mxu0
      %v2448 = vadd.f32 %v2327, %v2447
      %v2449 = vpop.f32.mrf.mxu0
      %2450 = vmatprep.mubr.bf16.mxu0 0
      %2451 = vmatmul.mubr.bf16.gmra.mxu0 %v2361
      %v2452 = vpop.f32.mrf.mxu0
      %v2453 = vadd.f32 %v2327, %v2452
      %v2454 = vpop.f32.mrf.mxu0
      %v2455 = vpop.f32.mrf.mxu0
      %v2456 = vadd.f32 %v2327, %v2455
      %v2457 = vpop.f32.mrf.mxu0
      %2458 = vmatprep.mubr.bf16.mxu0 0
      %2459 = vmatmul.mubr.bf16.gmra.mxu0 %v2364
      %v2460 = vpop.f32.mrf.mxu0
      %v2461 = vadd.f32 %v2327, %v2460
      %v2462 = vpop.f32.mrf.mxu0
      %v2463 = vpop.f32.mrf.mxu0
      %v2464 = vadd.f32 %v2327, %v2463
      %v2465 = vpop.f32.mrf.mxu0
      %2466 = vmatprep.mubr.bf16.mxu0 0
      %2467 = vmatmul.mubr.bf16.gmra.mxu0 %v2367
      %v2468 = vpop.f32.mrf.mxu0
      %v2469 = vadd.f32 %v2327, %v2468
      %v2470 = vpop.f32.mrf.mxu0
      %v2471 = vpop.f32.mrf.mxu0
      %v2472 = vadd.f32 %v2327, %v2471
      %v2473 = vpop.f32.mrf.mxu0
      %2474 = vmatprep.mubr.bf16.mxu0 0
      %2475 = vmatmul.mubr.bf16.gmra.mxu0 %v2370
      %v2476 = vpop.f32.mrf.mxu0
      %v2477 = vadd.f32 %v2327, %v2476
      %v2478 = vpop.f32.mrf.mxu0
      %v2479 = vpop.f32.mrf.mxu0
      %v2480 = vadd.f32 %v2327, %v2479
      %v2481 = vpop.f32.mrf.mxu0
      %2482 = vmatprep.mubr.bf16.mxu0 0
      %2483 = vmatmul.mubr.bf16.gmra.mxu0 %v2373
      %v2484 = vpop.f32.mrf.mxu0
      %v2485 = vadd.f32 %v2327, %v2484
      %v2486 = vpop.f32.mrf.mxu0
      %v2487 = vpop.f32.mrf.mxu0
      %v2488 = vadd.f32 %v2327, %v2487
      %v2489 = vpop.f32.mrf.mxu0
      %2490 = vmatprep.mubr.bf16.mxu0 0
      %2491 = vmatmul.mubr.bf16.gmra.mxu0 %v2376
      %v2492 = vpop.f32.mrf.mxu0
      %v2493 = vadd.f32 %v2327, %v2492
      %v2494 = vpop.f32.mrf.mxu0
      %v2495 = vpop.f32.mrf.mxu0
      %v2496 = vadd.f32 %v2327, %v2495
      %v2497 = vpop.f32.mrf.mxu0
      %2498 = vmatprep.mubr.bf16.mxu0 0
      %2499 = vmatmul.mubr.bf16.gmra.mxu0 %v2379
      %v2500 = vpop.f32.mrf.mxu0
      %v2501 = vadd.f32 %v2327, %v2500
      %v2502 = vpop.f32.mrf.mxu0
      %v2503 = vpop.f32.mrf.mxu0
      %v2504 = vadd.f32 %v2327, %v2503
      %v2505 = vpop.f32.mrf.mxu0
      %2506 = vmatprep.mubr.bf16.mxu0 0
      %2507 = vmatmul.mubr.bf16.gmra.mxu0 %v2382
      %v2508 = vpop.f32.mrf.mxu0
      %v2509 = vadd.f32 %v2327, %v2508
      %v2510 = vpop.f32.mrf.mxu0
      %v2511 = vpop.f32.mrf.mxu0
      %v2512 = vadd.f32 %v2327, %v2511
      %v2513 = vpop.f32.mrf.mxu0
      %2514 = vmatprep.mubr.bf16.mxu0 0
      %2515 = vmatmul.mubr.bf16.gmra.mxu0 %v2385
      %v2516 = vpop.f32.mrf.mxu0
      %v2517 = vadd.f32 %v2327, %v2516
      %v2518 = vpop.f32.mrf.mxu0
      %v2519 = vpop.f32.mrf.mxu0
      %v2520 = vadd.f32 %v2327, %v2519
      %v2521 = vpop.f32.mrf.mxu0
      %2522 = vmatprep.mubr.bf16.mxu0 0
      %2523 = vmatmul.mubr.bf16.gmra.mxu0 %v2388
      %v2524 = vpop.f32.mrf.mxu0
      %v2525 = vadd.f32 %v2327, %v2524
      %v2526 = vpop.f32.mrf.mxu0
      %v2527 = vpop.f32.mrf.mxu0
      %v2528 = vadd.f32 %v2327, %v2527
      %v2529 = vpop.f32.mrf.mxu0
      %2530 = vmatprep.mubr.bf16.mxu0 0
      %2531 = vmatmul.mubr.bf16.gmra.mxu0 %v2391
      %v2532 = vpop.f32.mrf.mxu0
      %v2533 = vadd.f32 %v2327, %v2532
      %v2534 = vpop.f32.mrf.mxu0
      %v2535 = vpop.f32.mrf.mxu0
      %v2536 = vadd.f32 %v2327, %v2535
      %v2537 = vpop.f32.mrf.mxu0
      %2538 = vmatprep.mubr.bf16.mxu0 0
      %2539 = vmatmul.mubr.bf16.gmra.mxu0 %v2394
      %v2540 = vpop.f32.mrf.mxu0
      %v2541 = vadd.f32 %v2327, %v2540
      %v2542 = vpop.f32.mrf.mxu0
      %v2543 = vpop.f32.mrf.mxu0
      %v2544 = vadd.f32 %v2327, %v2543
      %v2545 = vpop.f32.mrf.mxu0
      %2546 = vmatprep.mubr.bf16.mxu0 0
      %2547 = vmatmul.mubr.bf16.gmra.mxu0 %v2397
      %v2548 = vpop.f32.mrf.mxu0
      %v2549 = vadd.f32 %v2327, %v2548
      %v2550 = vpop.f32.mrf.mxu0
      %v2551 = vpop.f32.mrf.mxu0
      %v2552 = vadd.f32 %v2327, %v2551
      %v2553 = vpop.f32.mrf.mxu0
      %2554 = vmatprep.mubr.bf16.mxu0 0
      %2555 = vmatmul.mubr.bf16.gmra.mxu0 %v2400
      %v2556 = vpop.f32.mrf.mxu0
      %v2557 = vadd.f32 %v2327, %v2556
      %v2558 = vpop.f32.mrf.mxu0
      %v2559 = vpop.f32.mrf.mxu0
      %v2560 = vadd.f32 %v2327, %v2559
      %v2561 = vpop.f32.mrf.mxu0
      %2562 = vdwg.mxu0
      %v2563 = vmax.f32 %v2437, 0.0
      %v2564 = vmax.f32 %v2440, 0.0
      %v2565 = vmax.f32 %v2445, 0.0
      %v2566 = vmax.f32 %v2448, 0.0
      %v2567 = vmax.f32 %v2453, 0.0
      %v2568 = vmax.f32 %v2456, 0.0
      %v2569 = vmax.f32 %v2461, 0.0
      %v2570 = vmax.f32 %v2464, 0.0
      %v2571 = vmax.f32 %v2469, 0.0
      %v2572 = vmax.f32 %v2472, 0.0
      %v2573 = vmax.f32 %v2477, 0.0
      %v2574 = vmax.f32 %v2480, 0.0
      %v2575 = vmax.f32 %v2485, 0.0
      %v2576 = vmax.f32 %v2488, 0.0
      %v2577 = vmax.f32 %v2493, 0.0
      %v2578 = vmax.f32 %v2496, 0.0
      %v2579 = vmax.f32 %v2501, 0.0
      %v2580 = vmax.f32 %v2504, 0.0
      %v2581 = vmax.f32 %v2509, 0.0
      %v2582 = vmax.f32 %v2512, 0.0
      %v2583 = vmax.f32 %v2517, 0.0
      %v2584 = vmax.f32 %v2520, 0.0
      %v2585 = vmax.f32 %v2525, 0.0
      %v2586 = vmax.f32 %v2528, 0.0
      %v2587 = vmax.f32 %v2533, 0.0
      %v2588 = vmax.f32 %v2536, 0.0
      %v2589 = vmax.f32 %v2541, 0.0
      %v2590 = vmax.f32 %v2544, 0.0
      %v2591 = vmax.f32 %v2549, 0.0
      %v2592 = vmax.f32 %v2552, 0.0
      %v2593 = vmax.f32 %v2557, 0.0
      %v2594 = vmax.f32 %v2560, 0.0
      %v2595 = vld [vmem:[%s7] sm:$0xf]
      %v2596 = vld [vmem:[%s7 + $0x4] sm:$0x3]
      %v2597 = vld [vmem:[%s8] sm:$0x1]
      %v2598 = vpack.c.bf16 %v2564, %v2563
      %v2599 = vpack.c.bf16 %v2566, %v2565
      %v2600 = vpack.c.bf16 %v2568, %v2567
      %v2601 = vpack.c.bf16 %v2570, %v2569
      %v2602 = vpack.c.bf16 %v2572, %v2571
      %v2603 = vpack.c.bf16 %v2574, %v2573
      %v2604 = vpack.c.bf16 %v2576, %v2575
      %v2605 = vpack.c.bf16 %v2578, %v2577
      %v2606 = vpack.c.bf16 %v2580, %v2579
      %v2607 = vpack.c.bf16 %v2582, %v2581
      %v2608 = vpack.c.bf16 %v2584, %v2583
      %v2609 = vpack.c.bf16 %v2586, %v2585
      %v2610 = vpack.c.bf16 %v2588, %v2587
      %v2611 = vpack.c.bf16 %v2590, %v2589
      %v2612 = vpack.c.bf16 %v2592, %v2591
      %v2613 = vpack.c.bf16 %v2594, %v2593
      %v2615 = vlaneseq
      %v2616 = vshrl.u32 %v2615, 7
      %v2617 = vsub.s32 0, %v2616
      %v2618 = vrot.slane %v2597, %v2617
      %v2622 = vunpack.c.l.b16 %v2595
      %v2623 = vunpack.c.l.b16 %v2596
      %v2624 = vpack.c.b16 %v2623, %v2622
      %vm2625 = vcmask 97280
      %v2627 = vsel %vm2625, %v2598, 0
      %v2630 = vsel %vm2625, %v2599, 0
      %v2633 = vsel %vm2625, %v2600, 0
      %v2636 = vsel %vm2625, %v2601, 0
      %v2639 = vsel %vm2625, %v2602, 0
      %v2642 = vsel %vm2625, %v2603, 0
      %v2645 = vsel %vm2625, %v2604, 0
      %v2648 = vsel %vm2625, %v2605, 0
      %v2651 = vsel %vm2625, %v2606, 0
      %v2654 = vsel %vm2625, %v2607, 0
      %v2657 = vsel %vm2625, %v2608, 0
      %v2660 = vsel %vm2625, %v2609, 0
      %v2663 = vsel %vm2625, %v2610, 0
      %v2666 = vsel %vm2625, %v2611, 0
      %v2669 = vsel %vm2625, %v2612, 0
      %v2672 = vsel %vm2625, %v2613, 0
      %vm2674 = vcmask 1045504
      %v2676 = vsel %vm2674, %v2624, 0
      %2678 = vmatprep.subr.bf16.mxu0 0
      %2679 = vmatpush1.bf16.msra.mxu0 0
      %2680 = vmatprep.subr.bf16.mxu0 0
      %2681 = vmatpush1.bf16.msra.mxu0 0
      %2682 = vmatprep.subr.bf16.mxu0 0
      %2683 = vmatpush1.bf16.msra.mxu0 0
      %2684 = vmatprep.subr.bf16.mxu0 0
      %2685 = vmatpush1.bf16.msra.mxu0 0
      %2686 = vmatprep.subr.bf16.mxu0 0
      %2687 = vmatpush1.bf16.msra.mxu0 0
      %2688 = vmatprep.subr.bf16.mxu0 0
      %2689 = vmatpush1.bf16.msra.mxu0 0
      %2690 = vmatprep.subr.bf16.mxu0 0
      %2691 = vmatpush1.bf16.msra.mxu0 0
      %2692 = vmatprep.subr.bf16.mxu0 0
      %2693 = vmatpush1.bf16.msra.mxu0 %v2676
      %2694 = vmatprep.subr.bf16.mxu0 0
      %2695 = vmatpush2.bf16.msra.mxu0 0
      %2696 = vmatprep.subr.bf16.mxu0 0
      %2697 = vmatpush2.bf16.msra.mxu0 0
      %2698 = vmatprep.subr.bf16.mxu0 0
      %2699 = vmatpush2.bf16.msra.mxu0 0
      %2700 = vmatprep.subr.bf16.mxu0 0
      %2701 = vmatpush2.bf16.msra.mxu0 0
      %2702 = vmatprep.subr.bf16.mxu0 0
      %2703 = vmatpush2.bf16.msra.mxu0 0
      %2704 = vmatprep.subr.bf16.mxu0 0
      %2705 = vmatpush2.bf16.msra.mxu0 0
      %2706 = vmatprep.subr.bf16.mxu0 0
      %2707 = vmatpush2.bf16.msra.mxu0 0
      %2708 = vmatprep.subr.bf16.mxu0 0
      %2709 = vmatpush2.bf16.msra.mxu0 0
      %2710 = vmatprep.mubr.bf16.mxu0 0
      %2711 = vmatmul.mubr.bf16.gmra.mxu0 %v2627
      %v2712 = vpop.f32.mrf.mxu0
      %v2713 = vadd.f32 %v2618, %v2712
      %v2714 = vpop.f32.mrf.mxu0
      %v2715 = vpop.f32.mrf.mxu0
      %v2716 = vadd.f32 %v2618, %v2715
      %v2717 = vpop.f32.mrf.mxu0
      %2718 = vmatprep.mubr.bf16.mxu0 0
      %2719 = vmatmul.mubr.bf16.gmra.mxu0 %v2630
      %v2720 = vpop.f32.mrf.mxu0
      %v2721 = vadd.f32 %v2618, %v2720
      %v2722 = vpop.f32.mrf.mxu0
      %v2723 = vpop.f32.mrf.mxu0
      %v2724 = vadd.f32 %v2618, %v2723
      %v2725 = vpop.f32.mrf.mxu0
      %2726 = vmatprep.mubr.bf16.mxu0 0
      %2727 = vmatmul.mubr.bf16.gmra.mxu0 %v2633
      %v2728 = vpop.f32.mrf.mxu0
      %v2729 = vadd.f32 %v2618, %v2728
      %v2730 = vpop.f32.mrf.mxu0
      %v2731 = vpop.f32.mrf.mxu0
      %v2732 = vadd.f32 %v2618, %v2731
      %v2733 = vpop.f32.mrf.mxu0
      %2734 = vmatprep.mubr.bf16.mxu0 0
      %2735 = vmatmul.mubr.bf16.gmra.mxu0 %v2636
      %v2736 = vpop.f32.mrf.mxu0
      %v2737 = vadd.f32 %v2618, %v2736
      %v2738 = vpop.f32.mrf.mxu0
      %v2739 = vpop.f32.mrf.mxu0
      %v2740 = vadd.f32 %v2618, %v2739
      %v2741 = vpop.f32.mrf.mxu0
      %2742 = vmatprep.mubr.bf16.mxu0 0
      %2743 = vmatmul.mubr.bf16.gmra.mxu0 %v2639
      %v2744 = vpop.f32.mrf.mxu0
      %v2745 = vadd.f32 %v2618, %v2744
      %v2746 = vpop.f32.mrf.mxu0
      %v2747 = vpop.f32.mrf.mxu0
      %v2748 = vadd.f32 %v2618, %v2747
      %v2749 = vpop.f32.mrf.mxu0
      %2750 = vmatprep.mubr.bf16.mxu0 0
      %2751 = vmatmul.mubr.bf16.gmra.mxu0 %v2642
      %v2752 = vpop.f32.mrf.mxu0
      %v2753 = vadd.f32 %v2618, %v2752
      %v2754 = vpop.f32.mrf.mxu0
      %v2755 = vpop.f32.mrf.mxu0
      %v2756 = vadd.f32 %v2618, %v2755
      %v2757 = vpop.f32.mrf.mxu0
      %2758 = vmatprep.mubr.bf16.mxu0 0
      %2759 = vmatmul.mubr.bf16.gmra.mxu0 %v2645
      %v2760 = vpop.f32.mrf.mxu0
      %v2761 = vadd.f32 %v2618, %v2760
      %v2762 = vpop.f32.mrf.mxu0
      %v2763 = vpop.f32.mrf.mxu0
      %v2764 = vadd.f32 %v2618, %v2763
      %v2765 = vpop.f32.mrf.mxu0
      %2766 = vmatprep.mubr.bf16.mxu0 0
      %2767 = vmatmul.mubr.bf16.gmra.mxu0 %v2648
      %v2768 = vpop.f32.mrf.mxu0
      %v2769 = vadd.f32 %v2618, %v2768
      %v2770 = vpop.f32.mrf.mxu0
      %v2771 = vpop.f32.mrf.mxu0
      %v2772 = vadd.f32 %v2618, %v2771
      %v2773 = vpop.f32.mrf.mxu0
      %2774 = vmatprep.mubr.bf16.mxu0 0
      %2775 = vmatmul.mubr.bf16.gmra.mxu0 %v2651
      %v2776 = vpop.f32.mrf.mxu0
      %v2777 = vadd.f32 %v2618, %v2776
      %v2778 = vpop.f32.mrf.mxu0
      %v2779 = vpop.f32.mrf.mxu0
      %v2780 = vadd.f32 %v2618, %v2779
      %v2781 = vpop.f32.mrf.mxu0
      %2782 = vmatprep.mubr.bf16.mxu0 0
      %2783 = vmatmul.mubr.bf16.gmra.mxu0 %v2654
      %v2784 = vpop.f32.mrf.mxu0
      %v2785 = vadd.f32 %v2618, %v2784
      %v2786 = vpop.f32.mrf.mxu0
      %v2787 = vpop.f32.mrf.mxu0
      %v2788 = vadd.f32 %v2618, %v2787
      %v2789 = vpop.f32.mrf.mxu0
      %2790 = vmatprep.mubr.bf16.mxu0 0
      %2791 = vmatmul.mubr.bf16.gmra.mxu0 %v2657
      %v2792 = vpop.f32.mrf.mxu0
      %v2793 = vadd.f32 %v2618, %v2792
      %v2794 = vpop.f32.mrf.mxu0
      %v2795 = vpop.f32.mrf.mxu0
      %v2796 = vadd.f32 %v2618, %v2795
      %v2797 = vpop.f32.mrf.mxu0
      %2798 = vmatprep.mubr.bf16.mxu0 0
      %2799 = vmatmul.mubr.bf16.gmra.mxu0 %v2660
      %v2800 = vpop.f32.mrf.mxu0
      %v2801 = vadd.f32 %v2618, %v2800
      %v2802 = vpop.f32.mrf.mxu0
      %v2803 = vpop.f32.mrf.mxu0
      %v2804 = vadd.f32 %v2618, %v2803
      %v2805 = vpop.f32.mrf.mxu0
      %2806 = vmatprep.mubr.bf16.mxu0 0
      %2807 = vmatmul.mubr.bf16.gmra.mxu0 %v2663
      %v2808 = vpop.f32.mrf.mxu0
      %v2809 = vadd.f32 %v2618, %v2808
      %v2810 = vpop.f32.mrf.mxu0
      %v2811 = vpop.f32.mrf.mxu0
      %v2812 = vadd.f32 %v2618, %v2811
      %v2813 = vpop.f32.mrf.mxu0
      %2814 = vmatprep.mubr.bf16.mxu0 0
      %2815 = vmatmul.mubr.bf16.gmra.mxu0 %v2666
      %v2816 = vpop.f32.mrf.mxu0
      %v2817 = vadd.f32 %v2618, %v2816
      %v2818 = vpop.f32.mrf.mxu0
      %v2819 = vpop.f32.mrf.mxu0
      %v2820 = vadd.f32 %v2618, %v2819
      %v2821 = vpop.f32.mrf.mxu0
      %2822 = vmatprep.mubr.bf16.mxu0 0
      %2823 = vmatmul.mubr.bf16.gmra.mxu0 %v2669
      %v2824 = vpop.f32.mrf.mxu0
      %v2825 = vadd.f32 %v2618, %v2824
      %v2826 = vpop.f32.mrf.mxu0
      %v2827 = vpop.f32.mrf.mxu0
      %v2828 = vadd.f32 %v2618, %v2827
      %v2829 = vpop.f32.mrf.mxu0
      %2830 = vmatprep.mubr.bf16.mxu0 0
      %2831 = vmatmul.mubr.bf16.gmra.mxu0 %v2672
      %v2832 = vpop.f32.mrf.mxu0
      %v2833 = vadd.f32 %v2618, %v2832
      %v2834 = vpop.f32.mrf.mxu0
      %v2835 = vpop.f32.mrf.mxu0
      %v2836 = vadd.f32 %v2618, %v2835
      %v2837 = vpop.f32.mrf.mxu0
      %2838 = vdwg.mxu0
      %v2839 = vld [vmem:[%s9] sm:$0x3]
      %v2840 = vld [vmem:[%s10] sm:$0x1]
      %v2841 = vpack.c.bf16 %v2716, %v2713
      %v2842 = vpack.c.bf16 %v2724, %v2721
      %v2843 = vpack.c.bf16 %v2732, %v2729
      %v2844 = vpack.c.bf16 %v2740, %v2737
      %v2845 = vpack.c.bf16 %v2748, %v2745
      %v2846 = vpack.c.bf16 %v2756, %v2753
      %v2847 = vpack.c.bf16 %v2764, %v2761
      %v2848 = vpack.c.bf16 %v2772, %v2769
      %v2849 = vpack.c.bf16 %v2780, %v2777
      %v2850 = vpack.c.bf16 %v2788, %v2785
      %v2851 = vpack.c.bf16 %v2796, %v2793
      %v2852 = vpack.c.bf16 %v2804, %v2801
      %v2853 = vpack.c.bf16 %v2812, %v2809
      %v2854 = vpack.c.bf16 %v2820, %v2817
      %v2855 = vpack.c.bf16 %v2828, %v2825
      %v2856 = vpack.c.bf16 %v2836, %v2833
      %v2858 = vlaneseq
      %v2859 = vshrl.u32 %v2858, 7
      %v2860 = vsub.s32 0, %v2859
      %v2861 = vrot.slane %v2840, %v2860
      %vm2863 = vcmask 23552
      %v2865 = vsel %vm2863, %v2841, 0
      %v2868 = vsel %vm2863, %v2842, 0
      %v2871 = vsel %vm2863, %v2843, 0
      %v2874 = vsel %vm2863, %v2844, 0
      %v2877 = vsel %vm2863, %v2845, 0
      %v2880 = vsel %vm2863, %v2846, 0
      %v2883 = vsel %vm2863, %v2847, 0
      %v2886 = vsel %vm2863, %v2848, 0
      %v2889 = vsel %vm2863, %v2849, 0
      %v2892 = vsel %vm2863, %v2850, 0
      %v2895 = vsel %vm2863, %v2851, 0
      %v2898 = vsel %vm2863, %v2852, 0
      %v2901 = vsel %vm2863, %v2853, 0
      %v2904 = vsel %vm2863, %v2854, 0
      %v2907 = vsel %vm2863, %v2855, 0
      %v2910 = vsel %vm2863, %v2856, 0
      %vm2912 = vcmask 1040384
      %vm2913 = vcmask 1041408
      %v2914 = vsel %vm2912, 4294967295, 65535
      %v2915 = vsel %vm2913, %v2914, 0
      %v2917 = vand.u32 %v2839, %v2915
      %2919 = vmatprep.subr.bf16.mxu0 0
      %2920 = vmatpush1.bf16.msra.mxu0 0
      %2921 = vmatprep.subr.bf16.mxu0 0
      %2922 = vmatpush1.bf16.msra.mxu0 0
      %2923 = vmatprep.subr.bf16.mxu0 0
      %2924 = vmatpush1.bf16.msra.mxu0 0
      %2925 = vmatprep.subr.bf16.mxu0 0
      %2926 = vmatpush1.bf16.msra.mxu0 0
      %2927 = vmatprep.subr.bf16.mxu0 0
      %2928 = vmatpush1.bf16.msra.mxu0 0
      %2929 = vmatprep.subr.bf16.mxu0 0
      %2930 = vmatpush1.bf16.msra.mxu0 0
      %2931 = vmatprep.subr.bf16.mxu0 0
      %2932 = vmatpush1.bf16.msra.mxu0 0
      %2933 = vmatprep.subr.bf16.mxu0 0
      %2934 = vmatpush1.bf16.msra.mxu0 %v2917
      %2935 = vmatprep.subr.bf16.mxu0 0
      %2936 = vmatpush2.bf16.msra.mxu0 0
      %2937 = vmatprep.subr.bf16.mxu0 0
      %2938 = vmatpush2.bf16.msra.mxu0 0
      %2939 = vmatprep.subr.bf16.mxu0 0
      %2940 = vmatpush2.bf16.msra.mxu0 0
      %2941 = vmatprep.subr.bf16.mxu0 0
      %2942 = vmatpush2.bf16.msra.mxu0 0
      %2943 = vmatprep.subr.bf16.mxu0 0
      %2944 = vmatpush2.bf16.msra.mxu0 0
      %2945 = vmatprep.subr.bf16.mxu0 0
      %2946 = vmatpush2.bf16.msra.mxu0 0
      %2947 = vmatprep.subr.bf16.mxu0 0
      %2948 = vmatpush2.bf16.msra.mxu0 0
      %2949 = vmatprep.subr.bf16.mxu0 0
      %2950 = vmatpush2.bf16.msra.mxu0 0
      %2951 = vmatprep.mubr.bf16.mxu0 0
      %2952 = vmatmul.mubr.bf16.gmra.mxu0 %v2865
      %v2953 = vpop.f32.mrf.mxu0
      %v2954 = vadd.f32 %v2861, %v2953
      %v2955 = vpop.f32.mrf.mxu0
      %v2956 = vpop.f32.mrf.mxu0
      %v2957 = vadd.f32 %v2861, %v2956
      %v2958 = vpop.f32.mrf.mxu0
      %2959 = vmatprep.mubr.bf16.mxu0 0
      %2960 = vmatmul.mubr.bf16.gmra.mxu0 %v2868
      %v2961 = vpop.f32.mrf.mxu0
      %v2962 = vadd.f32 %v2861, %v2961
      %v2963 = vpop.f32.mrf.mxu0
      %v2964 = vpop.f32.mrf.mxu0
      %v2965 = vadd.f32 %v2861, %v2964
      %v2966 = vpop.f32.mrf.mxu0
      %2967 = vmatprep.mubr.bf16.mxu0 0
      %2968 = vmatmul.mubr.bf16.gmra.mxu0 %v2871
      %v2969 = vpop.f32.mrf.mxu0
      %v2970 = vadd.f32 %v2861, %v2969
      %v2971 = vpop.f32.mrf.mxu0
      %v2972 = vpop.f32.mrf.mxu0
      %v2973 = vadd.f32 %v2861, %v2972
      %v2974 = vpop.f32.mrf.mxu0
      %2975 = vmatprep.mubr.bf16.mxu0 0
      %2976 = vmatmul.mubr.bf16.gmra.mxu0 %v2874
      %v2977 = vpop.f32.mrf.mxu0
      %v2978 = vadd.f32 %v2861, %v2977
      %v2979 = vpop.f32.mrf.mxu0
      %v2980 = vpop.f32.mrf.mxu0
      %v2981 = vadd.f32 %v2861, %v2980
      %v2982 = vpop.f32.mrf.mxu0
      %2983 = vmatprep.mubr.bf16.mxu0 0
      %2984 = vmatmul.mubr.bf16.gmra.mxu0 %v2877
      %v2985 = vpop.f32.mrf.mxu0
      %v2986 = vadd.f32 %v2861, %v2985
      %v2987 = vpop.f32.mrf.mxu0
      %v2988 = vpop.f32.mrf.mxu0
      %v2989 = vadd.f32 %v2861, %v2988
      %v2990 = vpop.f32.mrf.mxu0
      %2991 = vmatprep.mubr.bf16.mxu0 0
      %2992 = vmatmul.mubr.bf16.gmra.mxu0 %v2880
      %v2993 = vpop.f32.mrf.mxu0
      %v2994 = vadd.f32 %v2861, %v2993
      %v2995 = vpop.f32.mrf.mxu0
      %v2996 = vpop.f32.mrf.mxu0
      %v2997 = vadd.f32 %v2861, %v2996
      %v2998 = vpop.f32.mrf.mxu0
      %2999 = vmatprep.mubr.bf16.mxu0 0
      %3000 = vmatmul.mubr.bf16.gmra.mxu0 %v2883
      %v3001 = vpop.f32.mrf.mxu0
      %v3002 = vadd.f32 %v2861, %v3001
      %v3003 = vpop.f32.mrf.mxu0
      %v3004 = vpop.f32.mrf.mxu0
      %v3005 = vadd.f32 %v2861, %v3004
      %v3006 = vpop.f32.mrf.mxu0
      %3007 = vmatprep.mubr.bf16.mxu0 0
      %3008 = vmatmul.mubr.bf16.gmra.mxu0 %v2886
      %v3009 = vpop.f32.mrf.mxu0
      %v3010 = vadd.f32 %v2861, %v3009
      %v3011 = vpop.f32.mrf.mxu0
      %v3012 = vpop.f32.mrf.mxu0
      %v3013 = vadd.f32 %v2861, %v3012
      %v3014 = vpop.f32.mrf.mxu0
      %3015 = vmatprep.mubr.bf16.mxu0 0
      %3016 = vmatmul.mubr.bf16.gmra.mxu0 %v2889
      %v3017 = vpop.f32.mrf.mxu0
      %v3018 = vadd.f32 %v2861, %v3017
      %v3019 = vpop.f32.mrf.mxu0
      %v3020 = vpop.f32.mrf.mxu0
      %v3021 = vadd.f32 %v2861, %v3020
      %v3022 = vpop.f32.mrf.mxu0
      %3023 = vmatprep.mubr.bf16.mxu0 0
      %3024 = vmatmul.mubr.bf16.gmra.mxu0 %v2892
      %v3025 = vpop.f32.mrf.mxu0
      %v3026 = vadd.f32 %v2861, %v3025
      %v3027 = vpop.f32.mrf.mxu0
      %v3028 = vpop.f32.mrf.mxu0
      %v3029 = vadd.f32 %v2861, %v3028
      %v3030 = vpop.f32.mrf.mxu0
      %3031 = vmatprep.mubr.bf16.mxu0 0
      %3032 = vmatmul.mubr.bf16.gmra.mxu0 %v2895
      %v3033 = vpop.f32.mrf.mxu0
      %v3034 = vadd.f32 %v2861, %v3033
      %v3035 = vpop.f32.mrf.mxu0
      %v3036 = vpop.f32.mrf.mxu0
      %v3037 = vadd.f32 %v2861, %v3036
      %v3038 = vpop.f32.mrf.mxu0
      %3039 = vmatprep.mubr.bf16.mxu0 0
      %3040 = vmatmul.mubr.bf16.gmra.mxu0 %v2898
      %v3041 = vpop.f32.mrf.mxu0
      %v3042 = vadd.f32 %v2861, %v3041
      %v3043 = vpop.f32.mrf.mxu0
      %v3044 = vpop.f32.mrf.mxu0
      %v3045 = vadd.f32 %v2861, %v3044
      %v3046 = vpop.f32.mrf.mxu0
      %3047 = vmatprep.mubr.bf16.mxu0 0
      %3048 = vmatmul.mubr.bf16.gmra.mxu0 %v2901
      %v3049 = vpop.f32.mrf.mxu0
      %v3050 = vadd.f32 %v2861, %v3049
      %v3051 = vpop.f32.mrf.mxu0
      %v3052 = vpop.f32.mrf.mxu0
      %v3053 = vadd.f32 %v2861, %v3052
      %v3054 = vpop.f32.mrf.mxu0
      %3055 = vmatprep.mubr.bf16.mxu0 0
      %3056 = vmatmul.mubr.bf16.gmra.mxu0 %v2904
      %v3057 = vpop.f32.mrf.mxu0
      %v3058 = vadd.f32 %v2861, %v3057
      %v3059 = vpop.f32.mrf.mxu0
      %v3060 = vpop.f32.mrf.mxu0
      %v3061 = vadd.f32 %v2861, %v3060
      %v3062 = vpop.f32.mrf.mxu0
      %3063 = vmatprep.mubr.bf16.mxu0 0
      %3064 = vmatmul.mubr.bf16.gmra.mxu0 %v2907
      %v3065 = vpop.f32.mrf.mxu0
      %v3066 = vadd.f32 %v2861, %v3065
      %v3067 = vpop.f32.mrf.mxu0
      %v3068 = vpop.f32.mrf.mxu0
      %v3069 = vadd.f32 %v2861, %v3068
      %v3070 = vpop.f32.mrf.mxu0
      %3071 = vmatprep.mubr.bf16.mxu0 0
      %3072 = vmatmul.mubr.bf16.gmra.mxu0 %v2910
      %v3073 = vpop.f32.mrf.mxu0
      %v3074 = vadd.f32 %v2861, %v3073
      %v3075 = vpop.f32.mrf.mxu0
      %v3076 = vpop.f32.mrf.mxu0
      %v3077 = vadd.f32 %v2861, %v3076
      %v3078 = vpop.f32.mrf.mxu0
      %3079 = vdwg.mxu0
      %v3080 = vmax.f32 %v2954, 0.0
      %v3081 = vmax.f32 %v2957, 0.0
      %v3082 = vmax.f32 %v2962, 0.0
      %v3083 = vmax.f32 %v2965, 0.0
      %v3084 = vmax.f32 %v2970, 0.0
      %v3085 = vmax.f32 %v2973, 0.0
      %v3086 = vmax.f32 %v2978, 0.0
      %v3087 = vmax.f32 %v2981, 0.0
      %v3088 = vmax.f32 %v2986, 0.0
      %v3089 = vmax.f32 %v2989, 0.0
      %v3090 = vmax.f32 %v2994, 0.0
      %v3091 = vmax.f32 %v2997, 0.0
      %v3092 = vmax.f32 %v3002, 0.0
      %v3093 = vmax.f32 %v3005, 0.0
      %v3094 = vmax.f32 %v3010, 0.0
      %v3095 = vmax.f32 %v3013, 0.0
      %v3096 = vmax.f32 %v3018, 0.0
      %v3097 = vmax.f32 %v3021, 0.0
      %v3098 = vmax.f32 %v3026, 0.0
      %v3099 = vmax.f32 %v3029, 0.0
      %v3100 = vmax.f32 %v3034, 0.0
      %v3101 = vmax.f32 %v3037, 0.0
      %v3102 = vmax.f32 %v3042, 0.0
      %v3103 = vmax.f32 %v3045, 0.0
      %v3104 = vmax.f32 %v3050, 0.0
      %v3105 = vmax.f32 %v3053, 0.0
      %v3106 = vmax.f32 %v3058, 0.0
      %v3107 = vmax.f32 %v3061, 0.0
      %v3108 = vmax.f32 %v3066, 0.0
      %v3109 = vmax.f32 %v3069, 0.0
      %v3110 = vmax.f32 %v3074, 0.0
      %v3111 = vmax.f32 %v3077, 0.0
      %v3112 = vld [vmem:[%s11] sm:$0xf]
      %v3113 = vld [vmem:[%s11 + $0x4] sm:$0x3]
      %v3114 = vld [vmem:[%s12] sm:$0x1]
      %v3115 = vpack.c.bf16 %v3081, %v3080
      %v3116 = vpack.c.bf16 %v3083, %v3082
      %v3117 = vpack.c.bf16 %v3085, %v3084
      %v3118 = vpack.c.bf16 %v3087, %v3086
      %v3119 = vpack.c.bf16 %v3089, %v3088
      %v3120 = vpack.c.bf16 %v3091, %v3090
      %v3121 = vpack.c.bf16 %v3093, %v3092
      %v3122 = vpack.c.bf16 %v3095, %v3094
      %v3123 = vpack.c.bf16 %v3097, %v3096
      %v3124 = vpack.c.bf16 %v3099, %v3098
      %v3125 = vpack.c.bf16 %v3101, %v3100
      %v3126 = vpack.c.bf16 %v3103, %v3102
      %v3127 = vpack.c.bf16 %v3105, %v3104
      %v3128 = vpack.c.bf16 %v3107, %v3106
      %v3129 = vpack.c.bf16 %v3109, %v3108
      %v3130 = vpack.c.bf16 %v3111, %v3110
      %v3132 = vlaneseq
      %v3133 = vshrl.u32 %v3132, 7
      %v3134 = vsub.s32 0, %v3133
      %v3135 = vrot.slane %v3114, %v3134
      %v3139 = vunpack.c.l.b16 %v3112
      %v3140 = vunpack.c.l.b16 %v3113
      %v3141 = vpack.c.b16 %v3140, %v3139
      %v3143 = vsel %vm2625, %v3115, 0
      %v3146 = vsel %vm2625, %v3116, 0
      %v3149 = vsel %vm2625, %v3117, 0
      %v3152 = vsel %vm2625, %v3118, 0
      %v3155 = vsel %vm2625, %v3119, 0
      %v3158 = vsel %vm2625, %v3120, 0
      %v3161 = vsel %vm2625, %v3121, 0
      %v3164 = vsel %vm2625, %v3122, 0
      %v3167 = vsel %vm2625, %v3123, 0
      %v3170 = vsel %vm2625, %v3124, 0
      %v3173 = vsel %vm2625, %v3125, 0
      %v3176 = vsel %vm2625, %v3126, 0
      %v3179 = vsel %vm2625, %v3127, 0
      %v3182 = vsel %vm2625, %v3128, 0
      %v3185 = vsel %vm2625, %v3129, 0
      %v3188 = vsel %vm2625, %v3130, 0
      %v3191 = vsel %vm2674, %v3141, 0
      %3193 = vmatprep.subr.bf16.mxu0 0
      %3194 = vmatpush1.bf16.msra.mxu0 0
      %3195 = vmatprep.subr.bf16.mxu0 0
      %3196 = vmatpush1.bf16.msra.mxu0 0
      %3197 = vmatprep.subr.bf16.mxu0 0
      %3198 = vmatpush1.bf16.msra.mxu0 0
      %3199 = vmatprep.subr.bf16.mxu0 0
      %3200 = vmatpush1.bf16.msra.mxu0 0
      %3201 = vmatprep.subr.bf16.mxu0 0
      %3202 = vmatpush1.bf16.msra.mxu0 0
      %3203 = vmatprep.subr.bf16.mxu0 0
      %3204 = vmatpush1.bf16.msra.mxu0 0
      %3205 = vmatprep.subr.bf16.mxu0 0
      %3206 = vmatpush1.bf16.msra.mxu0 0
      %3207 = vmatprep.subr.bf16.mxu0 0
      %3208 = vmatpush1.bf16.msra.mxu0 %v3191
      %3209 = vmatprep.subr.bf16.mxu0 0
      %3210 = vmatpush2.bf16.msra.mxu0 0
      %3211 = vmatprep.subr.bf16.mxu0 0
      %3212 = vmatpush2.bf16.msra.mxu0 0
      %3213 = vmatprep.subr.bf16.mxu0 0
      %3214 = vmatpush2.bf16.msra.mxu0 0
      %3215 = vmatprep.subr.bf16.mxu0 0
      %3216 = vmatpush2.bf16.msra.mxu0 0
      %3217 = vmatprep.subr.bf16.mxu0 0
      %3218 = vmatpush2.bf16.msra.mxu0 0
      %3219 = vmatprep.subr.bf16.mxu0 0
      %3220 = vmatpush2.bf16.msra.mxu0 0
      %3221 = vmatprep.subr.bf16.mxu0 0
      %3222 = vmatpush2.bf16.msra.mxu0 0
      %3223 = vmatprep.subr.bf16.mxu0 0
      %3224 = vmatpush2.bf16.msra.mxu0 0
      %3225 = vmatprep.mubr.bf16.mxu0 0
      %3226 = vmatmul.mubr.bf16.gmra.mxu0 %v3143
      %v3227 = vpop.f32.mrf.mxu0
      %v3228 = vadd.f32 %v3135, %v3227
      %v3229 = vpop.f32.mrf.mxu0
      %v3230 = vpop.f32.mrf.mxu0
      %v3231 = vadd.f32 %v3135, %v3230
      %v3232 = vpop.f32.mrf.mxu0
      %3233 = vmatprep.mubr.bf16.mxu0 0
      %3234 = vmatmul.mubr.bf16.gmra.mxu0 %v3146
      %v3235 = vpop.f32.mrf.mxu0
      %v3236 = vadd.f32 %v3135, %v3235
      %v3237 = vpop.f32.mrf.mxu0
      %v3238 = vpop.f32.mrf.mxu0
      %v3239 = vadd.f32 %v3135, %v3238
      %v3240 = vpop.f32.mrf.mxu0
      %3241 = vmatprep.mubr.bf16.mxu0 0
      %3242 = vmatmul.mubr.bf16.gmra.mxu0 %v3149
      %v3243 = vpop.f32.mrf.mxu0
      %v3244 = vadd.f32 %v3135, %v3243
      %v3245 = vpop.f32.mrf.mxu0
      %v3246 = vpop.f32.mrf.mxu0
      %v3247 = vadd.f32 %v3135, %v3246
      %v3248 = vpop.f32.mrf.mxu0
      %3249 = vmatprep.mubr.bf16.mxu0 0
      %3250 = vmatmul.mubr.bf16.gmra.mxu0 %v3152
      %v3251 = vpop.f32.mrf.mxu0
      %v3252 = vadd.f32 %v3135, %v3251
      %v3253 = vpop.f32.mrf.mxu0
      %v3254 = vpop.f32.mrf.mxu0
      %v3255 = vadd.f32 %v3135, %v3254
      %v3256 = vpop.f32.mrf.mxu0
      %3257 = vmatprep.mubr.bf16.mxu0 0
      %3258 = vmatmul.mubr.bf16.gmra.mxu0 %v3155
      %v3259 = vpop.f32.mrf.mxu0
      %v3260 = vadd.f32 %v3135, %v3259
      %v3261 = vpop.f32.mrf.mxu0
      %v3262 = vpop.f32.mrf.mxu0
      %v3263 = vadd.f32 %v3135, %v3262
      %v3264 = vpop.f32.mrf.mxu0
      %3265 = vmatprep.mubr.bf16.mxu0 0
      %3266 = vmatmul.mubr.bf16.gmra.mxu0 %v3158
      %v3267 = vpop.f32.mrf.mxu0
      %v3268 = vadd.f32 %v3135, %v3267
      %v3269 = vpop.f32.mrf.mxu0
      %v3270 = vpop.f32.mrf.mxu0
      %v3271 = vadd.f32 %v3135, %v3270
      %v3272 = vpop.f32.mrf.mxu0
      %3273 = vmatprep.mubr.bf16.mxu0 0
      %3274 = vmatmul.mubr.bf16.gmra.mxu0 %v3161
      %v3275 = vpop.f32.mrf.mxu0
      %v3276 = vadd.f32 %v3135, %v3275
      %v3277 = vpop.f32.mrf.mxu0
      %v3278 = vpop.f32.mrf.mxu0
      %v3279 = vadd.f32 %v3135, %v3278
      %v3280 = vpop.f32.mrf.mxu0
      %3281 = vmatprep.mubr.bf16.mxu0 0
      %3282 = vmatmul.mubr.bf16.gmra.mxu0 %v3164
      %v3283 = vpop.f32.mrf.mxu0
      %v3284 = vadd.f32 %v3135, %v3283
      %v3285 = vpop.f32.mrf.mxu0
      %v3286 = vpop.f32.mrf.mxu0
      %v3287 = vadd.f32 %v3135, %v3286
      %v3288 = vpop.f32.mrf.mxu0
      %3289 = vmatprep.mubr.bf16.mxu0 0
      %3290 = vmatmul.mubr.bf16.gmra.mxu0 %v3167
      %v3291 = vpop.f32.mrf.mxu0
      %v3292 = vadd.f32 %v3135, %v3291
      %v3293 = vpop.f32.mrf.mxu0
      %v3294 = vpop.f32.mrf.mxu0
      %v3295 = vadd.f32 %v3135, %v3294
      %v3296 = vpop.f32.mrf.mxu0
      %3297 = vmatprep.mubr.bf16.mxu0 0
      %3298 = vmatmul.mubr.bf16.gmra.mxu0 %v3170
      %v3299 = vpop.f32.mrf.mxu0
      %v3300 = vadd.f32 %v3135, %v3299
      %v3301 = vpop.f32.mrf.mxu0
      %v3302 = vpop.f32.mrf.mxu0
      %v3303 = vadd.f32 %v3135, %v3302
      %v3304 = vpop.f32.mrf.mxu0
      %3305 = vmatprep.mubr.bf16.mxu0 0
      %3306 = vmatmul.mubr.bf16.gmra.mxu0 %v3173
      %v3307 = vpop.f32.mrf.mxu0
      %v3308 = vadd.f32 %v3135, %v3307
      %v3309 = vpop.f32.mrf.mxu0
      %v3310 = vpop.f32.mrf.mxu0
      %v3311 = vadd.f32 %v3135, %v3310
      %v3312 = vpop.f32.mrf.mxu0
      %3313 = vmatprep.mubr.bf16.mxu0 0
      %3314 = vmatmul.mubr.bf16.gmra.mxu0 %v3176
      %v3315 = vpop.f32.mrf.mxu0
      %v3316 = vadd.f32 %v3135, %v3315
      %v3317 = vpop.f32.mrf.mxu0
      %v3318 = vpop.f32.mrf.mxu0
      %v3319 = vadd.f32 %v3135, %v3318
      %v3320 = vpop.f32.mrf.mxu0
      %3321 = vmatprep.mubr.bf16.mxu0 0
      %3322 = vmatmul.mubr.bf16.gmra.mxu0 %v3179
      %v3323 = vpop.f32.mrf.mxu0
      %v3324 = vadd.f32 %v3135, %v3323
      %v3325 = vpop.f32.mrf.mxu0
      %v3326 = vpop.f32.mrf.mxu0
      %v3327 = vadd.f32 %v3135, %v3326
      %v3328 = vpop.f32.mrf.mxu0
      %3329 = vmatprep.mubr.bf16.mxu0 0
      %3330 = vmatmul.mubr.bf16.gmra.mxu0 %v3182
      %v3331 = vpop.f32.mrf.mxu0
      %v3332 = vadd.f32 %v3135, %v3331
      %v3333 = vpop.f32.mrf.mxu0
      %v3334 = vpop.f32.mrf.mxu0
      %v3335 = vadd.f32 %v3135, %v3334
      %v3336 = vpop.f32.mrf.mxu0
      %3337 = vmatprep.mubr.bf16.mxu0 0
      %3338 = vmatmul.mubr.bf16.gmra.mxu0 %v3185
      %v3339 = vpop.f32.mrf.mxu0
      %v3340 = vadd.f32 %v3135, %v3339
      %v3341 = vpop.f32.mrf.mxu0
      %v3342 = vpop.f32.mrf.mxu0
      %v3343 = vadd.f32 %v3135, %v3342
      %v3344 = vpop.f32.mrf.mxu0
      %3345 = vmatprep.mubr.bf16.mxu0 0
      %3346 = vmatmul.mubr.bf16.gmra.mxu0 %v3188
      %v3347 = vpop.f32.mrf.mxu0
      %v3348 = vadd.f32 %v3135, %v3347
      %v3349 = vpop.f32.mrf.mxu0
      %v3350 = vpop.f32.mrf.mxu0
      %v3351 = vadd.f32 %v3135, %v3350
      %v3352 = vpop.f32.mrf.mxu0
      %3353 = vdwg.mxu0
      %v3354 = vmax.f32 %v3228, 0.0
      %v3355 = vmax.f32 %v3231, 0.0
      %v3356 = vmax.f32 %v3236, 0.0
      %v3357 = vmax.f32 %v3239, 0.0
      %v3358 = vmax.f32 %v3244, 0.0
      %v3359 = vmax.f32 %v3247, 0.0
      %v3360 = vmax.f32 %v3252, 0.0
      %v3361 = vmax.f32 %v3255, 0.0
      %v3362 = vmax.f32 %v3260, 0.0
      %v3363 = vmax.f32 %v3263, 0.0
      %v3364 = vmax.f32 %v3268, 0.0
      %v3365 = vmax.f32 %v3271, 0.0
      %v3366 = vmax.f32 %v3276, 0.0
      %v3367 = vmax.f32 %v3279, 0.0
      %v3368 = vmax.f32 %v3284, 0.0
      %v3369 = vmax.f32 %v3287, 0.0
      %v3370 = vmax.f32 %v3292, 0.0
      %v3371 = vmax.f32 %v3295, 0.0
      %v3372 = vmax.f32 %v3300, 0.0
      %v3373 = vmax.f32 %v3303, 0.0
      %v3374 = vmax.f32 %v3308, 0.0
      %v3375 = vmax.f32 %v3311, 0.0
      %v3376 = vmax.f32 %v3316, 0.0
      %v3377 = vmax.f32 %v3319, 0.0
      %v3378 = vmax.f32 %v3324, 0.0
      %v3379 = vmax.f32 %v3327, 0.0
      %v3380 = vmax.f32 %v3332, 0.0
      %v3381 = vmax.f32 %v3335, 0.0
      %v3382 = vmax.f32 %v3340, 0.0
      %v3383 = vmax.f32 %v3343, 0.0
      %v3384 = vmax.f32 %v3348, 0.0
      %v3385 = vmax.f32 %v3351, 0.0
      %v3386 = vld [vmem:[%s13] sm:$0xf]
      %v3387 = vld [vmem:[%s13 + $0x4] sm:$0xf]
      %v3388 = vld [vmem:[%s13 + $0x8] sm:$0xf]
      %v3389 = vld [vmem:[%s13 + $0xc] sm:$0xf]
      %v3390 = vld [vmem:[%s13 + $0x10] sm:$0xf]
      %v3391 = vld [vmem:[%s13 + $0x14] sm:$0xf]
      %v3392 = vld [vmem:[%s13 + $0x18] sm:$0xf]
      %v3393 = vld [vmem:[%s13 + $0x1c] sm:$0xf]
      %v3394 = vld [vmem:[%s14] sm:$0x1]
      %v3395 = vpack.c.bf16 %v3355, %v3354
      %v3396 = vpack.c.bf16 %v3357, %v3356
      %v3397 = vpack.c.bf16 %v3359, %v3358
      %v3398 = vpack.c.bf16 %v3361, %v3360
      %v3399 = vpack.c.bf16 %v3363, %v3362
      %v3400 = vpack.c.bf16 %v3365, %v3364
      %v3401 = vpack.c.bf16 %v3367, %v3366
      %v3402 = vpack.c.bf16 %v3369, %v3368
      %v3403 = vpack.c.bf16 %v3371, %v3370
      %v3404 = vpack.c.bf16 %v3373, %v3372
      %v3405 = vpack.c.bf16 %v3375, %v3374
      %v3406 = vpack.c.bf16 %v3377, %v3376
      %v3407 = vpack.c.bf16 %v3379, %v3378
      %v3408 = vpack.c.bf16 %v3381, %v3380
      %v3409 = vpack.c.bf16 %v3383, %v3382
      %v3410 = vpack.c.bf16 %v3385, %v3384
      %v3412 = vlaneseq
      %v3413 = vshrl.u32 %v3412, 7
      %v3414 = vsub.s32 0, %v3413
      %v3415 = vrot.slane %v3394, %v3414
      %v3425 = vunpack.c.l.b16 %v3386
      %v3426 = vunpack.c.l.b16 %v3387
      %v3427 = vunpack.c.l.b16 %v3388
      %v3428 = vunpack.c.l.b16 %v3389
      %v3429 = vunpack.c.l.b16 %v3390
      %v3430 = vunpack.c.l.b16 %v3391
      %v3431 = vunpack.c.l.b16 %v3392
      %v3432 = vunpack.c.l.b16 %v3393
      %v3433 = vpack.c.b16 %v3426, %v3425
      %v3434 = vpack.c.b16 %v3428, %v3427
      %v3435 = vpack.c.b16 %v3430, %v3429
      %v3436 = vpack.c.b16 %v3432, %v3431
      %v3442 = vsel %vm2353, %v3395, 0
      %v3445 = vsel %vm2353, %v3396, 0
      %v3448 = vsel %vm2353, %v3397, 0
      %v3451 = vsel %vm2353, %v3398, 0
      %v3454 = vsel %vm2353, %v3399, 0
      %v3457 = vsel %vm2353, %v3400, 0
      %v3460 = vsel %vm2353, %v3401, 0
      %v3463 = vsel %vm2353, %v3402, 0
      %v3466 = vsel %vm2353, %v3403, 0
      %v3469 = vsel %vm2353, %v3404, 0
      %v3472 = vsel %vm2353, %v3405, 0
      %v3475 = vsel %vm2353, %v3406, 0
      %v3478 = vsel %vm2353, %v3407, 0
      %v3481 = vsel %vm2353, %v3408, 0
      %v3484 = vsel %vm2353, %v3409, 0
      %v3487 = vsel %vm2353, %v3410, 0
      %3489 = vmatprep.subr.bf16.mxu0 0
      %3490 = vmatpush1.bf16.msra.mxu0 0
      %3491 = vmatprep.subr.bf16.mxu0 0
      %3492 = vmatpush1.bf16.msra.mxu0 0
      %3493 = vmatprep.subr.bf16.mxu0 0
      %3494 = vmatpush1.bf16.msra.mxu0 0
      %3495 = vmatprep.subr.bf16.mxu0 0
      %3496 = vmatpush1.bf16.msra.mxu0 0
      %3497 = vmatprep.subr.bf16.mxu0 0
      %3498 = vmatpush1.bf16.msra.mxu0 %v3436
      %3499 = vmatprep.subr.bf16.mxu0 0
      %3500 = vmatpush1.bf16.msra.mxu0 %v3435
      %3501 = vmatprep.subr.bf16.mxu0 0
      %3502 = vmatpush1.bf16.msra.mxu0 %v3434
      %3503 = vmatprep.subr.bf16.mxu0 0
      %3504 = vmatpush1.bf16.msra.mxu0 %v3433
      %3505 = vmatprep.subr.bf16.mxu0 0
      %3506 = vmatpush2.bf16.msra.mxu0 0
      %3507 = vmatprep.subr.bf16.mxu0 0
      %3508 = vmatpush2.bf16.msra.mxu0 0
      %3509 = vmatprep.subr.bf16.mxu0 0
      %3510 = vmatpush2.bf16.msra.mxu0 0
      %3511 = vmatprep.subr.bf16.mxu0 0
      %3512 = vmatpush2.bf16.msra.mxu0 0
      %3513 = vmatprep.subr.bf16.mxu0 0
      %3514 = vmatpush2.bf16.msra.mxu0 0
      %3515 = vmatprep.subr.bf16.mxu0 0
      %3516 = vmatpush2.bf16.msra.mxu0 0
      %3517 = vmatprep.subr.bf16.mxu0 0
      %3518 = vmatpush2.bf16.msra.mxu0 0
      %3519 = vmatprep.subr.bf16.mxu0 0
      %3520 = vmatpush2.bf16.msra.mxu0 0
      %3521 = vmatprep.mubr.bf16.mxu0 0
      %3522 = vmatmul.mubr.bf16.gmra.mxu0 %v3442
      %v3523 = vpop.f32.mrf.mxu0
      %v3524 = vadd.f32 %v3415, %v3523
      %v3525 = vpop.f32.mrf.mxu0
      %v3526 = vpop.f32.mrf.mxu0
      %v3527 = vadd.f32 %v3415, %v3526
      %v3528 = vpop.f32.mrf.mxu0
      %3529 = vmatprep.mubr.bf16.mxu0 0
      %3530 = vmatmul.mubr.bf16.gmra.mxu0 %v3445
      %v3531 = vpop.f32.mrf.mxu0
      %v3532 = vadd.f32 %v3415, %v3531
      %v3533 = vpop.f32.mrf.mxu0
      %v3534 = vpop.f32.mrf.mxu0
      %v3535 = vadd.f32 %v3415, %v3534
      %v3536 = vpop.f32.mrf.mxu0
      %3537 = vmatprep.mubr.bf16.mxu0 0
      %3538 = vmatmul.mubr.bf16.gmra.mxu0 %v3448
      %v3539 = vpop.f32.mrf.mxu0
      %v3540 = vadd.f32 %v3415, %v3539
      %v3541 = vpop.f32.mrf.mxu0
      %v3542 = vpop.f32.mrf.mxu0
      %v3543 = vadd.f32 %v3415, %v3542
      %v3544 = vpop.f32.mrf.mxu0
      %3545 = vmatprep.mubr.bf16.mxu0 0
      %3546 = vmatmul.mubr.bf16.gmra.mxu0 %v3451
      %v3547 = vpop.f32.mrf.mxu0
      %v3548 = vadd.f32 %v3415, %v3547
      %v3549 = vpop.f32.mrf.mxu0
      %v3550 = vpop.f32.mrf.mxu0
      %v3551 = vadd.f32 %v3415, %v3550
      %v3552 = vpop.f32.mrf.mxu0
      %3553 = vmatprep.mubr.bf16.mxu0 0
      %3554 = vmatmul.mubr.bf16.gmra.mxu0 %v3454
      %v3555 = vpop.f32.mrf.mxu0
      %v3556 = vadd.f32 %v3415, %v3555
      %v3557 = vpop.f32.mrf.mxu0
      %v3558 = vpop.f32.mrf.mxu0
      %v3559 = vadd.f32 %v3415, %v3558
      %v3560 = vpop.f32.mrf.mxu0
      %3561 = vmatprep.mubr.bf16.mxu0 0
      %3562 = vmatmul.mubr.bf16.gmra.mxu0 %v3457
      %v3563 = vpop.f32.mrf.mxu0
      %v3564 = vadd.f32 %v3415, %v3563
      %v3565 = vpop.f32.mrf.mxu0
      %v3566 = vpop.f32.mrf.mxu0
      %v3567 = vadd.f32 %v3415, %v3566
      %v3568 = vpop.f32.mrf.mxu0
      %3569 = vmatprep.mubr.bf16.mxu0 0
      %3570 = vmatmul.mubr.bf16.gmra.mxu0 %v3460
      %v3571 = vpop.f32.mrf.mxu0
      %v3572 = vadd.f32 %v3415, %v3571
      %v3573 = vpop.f32.mrf.mxu0
      %v3574 = vpop.f32.mrf.mxu0
      %v3575 = vadd.f32 %v3415, %v3574
      %v3576 = vpop.f32.mrf.mxu0
      %3577 = vmatprep.mubr.bf16.mxu0 0
      %3578 = vmatmul.mubr.bf16.gmra.mxu0 %v3463
      %v3579 = vpop.f32.mrf.mxu0
      %v3580 = vadd.f32 %v3415, %v3579
      %v3581 = vpop.f32.mrf.mxu0
      %v3582 = vpop.f32.mrf.mxu0
      %v3583 = vadd.f32 %v3415, %v3582
      %v3584 = vpop.f32.mrf.mxu0
      %3585 = vmatprep.mubr.bf16.mxu0 0
      %3586 = vmatmul.mubr.bf16.gmra.mxu0 %v3466
      %v3587 = vpop.f32.mrf.mxu0
      %v3588 = vadd.f32 %v3415, %v3587
      %v3589 = vpop.f32.mrf.mxu0
      %v3590 = vpop.f32.mrf.mxu0
      %v3591 = vadd.f32 %v3415, %v3590
      %v3592 = vpop.f32.mrf.mxu0
      %3593 = vmatprep.mubr.bf16.mxu0 0
      %3594 = vmatmul.mubr.bf16.gmra.mxu0 %v3469
      %v3595 = vpop.f32.mrf.mxu0
      %v3596 = vadd.f32 %v3415, %v3595
      %v3597 = vpop.f32.mrf.mxu0
      %v3598 = vpop.f32.mrf.mxu0
      %v3599 = vadd.f32 %v3415, %v3598
      %v3600 = vpop.f32.mrf.mxu0
      %3601 = vmatprep.mubr.bf16.mxu0 0
      %3602 = vmatmul.mubr.bf16.gmra.mxu0 %v3472
      %v3603 = vpop.f32.mrf.mxu0
      %v3604 = vadd.f32 %v3415, %v3603
      %v3605 = vpop.f32.mrf.mxu0
      %v3606 = vpop.f32.mrf.mxu0
      %v3607 = vadd.f32 %v3415, %v3606
      %v3608 = vpop.f32.mrf.mxu0
      %3609 = vmatprep.mubr.bf16.mxu0 0
      %3610 = vmatmul.mubr.bf16.gmra.mxu0 %v3475
      %v3611 = vpop.f32.mrf.mxu0
      %v3612 = vadd.f32 %v3415, %v3611
      %v3613 = vpop.f32.mrf.mxu0
      %v3614 = vpop.f32.mrf.mxu0
      %v3615 = vadd.f32 %v3415, %v3614
      %v3616 = vpop.f32.mrf.mxu0
      %3617 = vmatprep.mubr.bf16.mxu0 0
      %3618 = vmatmul.mubr.bf16.gmra.mxu0 %v3478
      %v3619 = vpop.f32.mrf.mxu0
      %v3620 = vadd.f32 %v3415, %v3619
      %v3621 = vpop.f32.mrf.mxu0
      %v3622 = vpop.f32.mrf.mxu0
      %v3623 = vadd.f32 %v3415, %v3622
      %v3624 = vpop.f32.mrf.mxu0
      %3625 = vmatprep.mubr.bf16.mxu0 0
      %3626 = vmatmul.mubr.bf16.gmra.mxu0 %v3481
      %v3627 = vpop.f32.mrf.mxu0
      %v3628 = vadd.f32 %v3415, %v3627
      %v3629 = vpop.f32.mrf.mxu0
      %v3630 = vpop.f32.mrf.mxu0
      %v3631 = vadd.f32 %v3415, %v3630
      %v3632 = vpop.f32.mrf.mxu0
      %3633 = vmatprep.mubr.bf16.mxu0 0
      %3634 = vmatmul.mubr.bf16.gmra.mxu0 %v3484
      %v3635 = vpop.f32.mrf.mxu0
      %v3636 = vadd.f32 %v3415, %v3635
      %v3637 = vpop.f32.mrf.mxu0
      %v3638 = vpop.f32.mrf.mxu0
      %v3639 = vadd.f32 %v3415, %v3638
      %v3640 = vpop.f32.mrf.mxu0
      %3641 = vmatprep.mubr.bf16.mxu0 0
      %3642 = vmatmul.mubr.bf16.gmra.mxu0 %v3487
      %v3643 = vpop.f32.mrf.mxu0
      %v3644 = vadd.f32 %v3415, %v3643
      %v3645 = vpop.f32.mrf.mxu0
      %v3646 = vpop.f32.mrf.mxu0
      %v3647 = vadd.f32 %v3415, %v3646
      %v3648 = vpop.f32.mrf.mxu0
      %3649 = vdwg.mxu0
      %v3650 = vmax.f32 %v3524, 0.0
      %v3651 = vmax.f32 %v3527, 0.0
      %v3652 = vmax.f32 %v3532, 0.0
      %v3653 = vmax.f32 %v3535, 0.0
      %v3654 = vmax.f32 %v3540, 0.0
      %v3655 = vmax.f32 %v3543, 0.0
      %v3656 = vmax.f32 %v3548, 0.0
      %v3657 = vmax.f32 %v3551, 0.0
      %v3658 = vmax.f32 %v3556, 0.0
      %v3659 = vmax.f32 %v3559, 0.0
      %v3660 = vmax.f32 %v3564, 0.0
      %v3661 = vmax.f32 %v3567, 0.0
      %v3662 = vmax.f32 %v3572, 0.0
      %v3663 = vmax.f32 %v3575, 0.0
      %v3664 = vmax.f32 %v3580, 0.0
      %v3665 = vmax.f32 %v3583, 0.0
      %v3666 = vmax.f32 %v3588, 0.0
      %v3667 = vmax.f32 %v3591, 0.0
      %v3668 = vmax.f32 %v3596, 0.0
      %v3669 = vmax.f32 %v3599, 0.0
      %v3670 = vmax.f32 %v3604, 0.0
      %v3671 = vmax.f32 %v3607, 0.0
      %v3672 = vmax.f32 %v3612, 0.0
      %v3673 = vmax.f32 %v3615, 0.0
      %v3674 = vmax.f32 %v3620, 0.0
      %v3675 = vmax.f32 %v3623, 0.0
      %v3676 = vmax.f32 %v3628, 0.0
      %v3677 = vmax.f32 %v3631, 0.0
      %v3678 = vmax.f32 %v3636, 0.0
      %v3679 = vmax.f32 %v3639, 0.0
      %v3680 = vmax.f32 %v3644, 0.0
      %v3681 = vmax.f32 %v3647, 0.0
      %v3682 = vld [vmem:[%s15] sm:$0xff]
      %v3683 = vld [vmem:[%s15 + $0x8] sm:$0xff]
      %v3684 = vld [vmem:[%s15 + $0x10] sm:$0xff]
      %v3685 = vld [vmem:[%s15 + $0x18] sm:$0xf]
      %v3686 = vld [vmem:[%s15 + $0x1c] sm:$0xff]
      %v3687 = vld [vmem:[%s15 + $0x24] sm:$0xff]
      %v3688 = vld [vmem:[%s15 + $0x2c] sm:$0xff]
      %v3689 = vld [vmem:[%s15 + $0x34] sm:$0xf]
      %v3690 = vld [vmem:[%s15 + $0x38] sm:$0xff]
      %v3691 = vld [vmem:[%s15 + $0x40] sm:$0xff]
      %v3692 = vld [vmem:[%s15 + $0x48] sm:$0xff]
      %v3693 = vld [vmem:[%s15 + $0x50] sm:$0xf]
      %v3694 = vld [vmem:[%s15 + $0x54] sm:$0xff]
      %v3695 = vld [vmem:[%s15 + $0x5c] sm:$0xff]
      %v3696 = vld [vmem:[%s15 + $0x64] sm:$0xff]
      %v3697 = vld [vmem:[%s15 + $0x6c] sm:$0xf]
      %v3698 = vld [vmem:[%s15 + $0x70] sm:$0xff]
      %v3699 = vld [vmem:[%s15 + $0x78] sm:$0xff]
      %v3700 = vld [vmem:[%s15 + $0x80] sm:$0xff]
      %v3701 = vld [vmem:[%s15 + $0x88] sm:$0xf]
      %v3702 = vld [vmem:[%s15 + $0x8c] sm:$0xff]
      %v3703 = vld [vmem:[%s15 + $0x94] sm:$0xff]
      %v3704 = vld [vmem:[%s15 + $0x9c] sm:$0xff]
      %v3705 = vld [vmem:[%s15 + $0xa4] sm:$0xf]
      %v3706 = vld [vmem:[%s15 + $0xa8] sm:$0xff]
      %v3707 = vld [vmem:[%s15 + $0xb0] sm:$0xff]
      %v3708 = vld [vmem:[%s15 + $0xb8] sm:$0xff]
      %v3709 = vld [vmem:[%s15 + $0xc0] sm:$0xf]
      %v3710 = vld [vmem:[%s15 + $0xc4] sm:$0xff]
      %v3711 = vld [vmem:[%s15 + $0xcc] sm:$0xff]
      %v3712 = vld [vmem:[%s15 + $0xd4] sm:$0xff]
      %v3713 = vld [vmem:[%s15 + $0xdc] sm:$0xf]
      %v3714 = vld [vmem:[%s15 + $0xe0] sm:$0xff]
      %v3715 = vld [vmem:[%s15 + $0xe8] sm:$0xff]
      %v3716 = vld [vmem:[%s15 + $0xf0] sm:$0xff]
      %v3717 = vld [vmem:[%s15 + $0xf8] sm:$0xf]
      %v3718 = vld [vmem:[%s15 + $0xfc] sm:$0xff]
      %v3719 = vld [vmem:[%s15 + $0x104] sm:$0xff]
      %v3720 = vld [vmem:[%s15 + $0x10c] sm:$0xff]
      %v3721 = vld [vmem:[%s15 + $0x114] sm:$0xf]
      %v3722 = vld [vmem:[%s15 + $0x118] sm:$0xff]
      %v3723 = vld [vmem:[%s15 + $0x120] sm:$0xff]
      %v3724 = vld [vmem:[%s15 + $0x128] sm:$0xff]
      %v3725 = vld [vmem:[%s15 + $0x130] sm:$0xf]
      %v3726 = vld [vmem:[%s15 + $0x134] sm:$0xff]
      %v3727 = vld [vmem:[%s15 + $0x13c] sm:$0xff]
      %v3728 = vld [vmem:[%s15 + $0x144] sm:$0xff]
      %v3729 = vld [vmem:[%s15 + $0x14c] sm:$0xf]
      %v3730 = vld [vmem:[%s15 + $0x150] sm:$0xff]
      %v3731 = vld [vmem:[%s15 + $0x158] sm:$0xff]
      %v3732 = vld [vmem:[%s15 + $0x160] sm:$0xff]
      %v3733 = vld [vmem:[%s15 + $0x168] sm:$0xf]
      %v3734 = vld [vmem:[%s15 + $0x16c] sm:$0xff]
      %v3735 = vld [vmem:[%s15 + $0x174] sm:$0xff]
      %v3736 = vld [vmem:[%s15 + $0x17c] sm:$0xff]
      %v3737 = vld [vmem:[%s15 + $0x184] sm:$0xf]
      %v3738 = vld [vmem:[%s15 + $0x188] sm:$0xff]
      %v3739 = vld [vmem:[%s15 + $0x190] sm:$0xff]
      %v3740 = vld [vmem:[%s15 + $0x198] sm:$0xff]
      %v3741 = vld [vmem:[%s15 + $0x1a0] sm:$0xf]
      %v3742 = vld [vmem:[%s15 + $0x1a4] sm:$0xff]
      %v3743 = vld [vmem:[%s15 + $0x1ac] sm:$0xff]
      %v3744 = vld [vmem:[%s15 + $0x1b4] sm:$0xff]
      %v3745 = vld [vmem:[%s15 + $0x1bc] sm:$0xf]
      %v3746 = vld [vmem:[%s16] sm:$0xff]
      %v3747 = vpack.c.bf16 %v3651, %v3650
      %v3748 = vpack.c.bf16 %v3653, %v3652
      %v3749 = vpack.c.bf16 %v3655, %v3654
      %v3750 = vpack.c.bf16 %v3657, %v3656
      %v3751 = vpack.c.bf16 %v3659, %v3658
      %v3752 = vpack.c.bf16 %v3661, %v3660
      %v3753 = vpack.c.bf16 %v3663, %v3662
      %v3754 = vpack.c.bf16 %v3665, %v3664
      %v3755 = vpack.c.bf16 %v3667, %v3666
      %v3756 = vpack.c.bf16 %v3669, %v3668
      %v3757 = vpack.c.bf16 %v3671, %v3670
      %v3758 = vpack.c.bf16 %v3673, %v3672
      %v3759 = vpack.c.bf16 %v3675, %v3674
      %v3760 = vpack.c.bf16 %v3677, %v3676
      %v3761 = vpack.c.bf16 %v3679, %v3678
      %v3762 = vpack.c.bf16 %v3681, %v3680
      %v3764 = vlaneseq
      %v3765 = vshrl.u32 %v3764, 7
      %v3766 = vsub.s32 0, %v3765
      %v3767 = vrot.slane %v3746, %v3766
      %v3768 = vlaneseq
      %v3769 = vshrl.u32 %v3768, 7
      %v3770 = vsub.s32 1, %v3769
      %v3771 = vrot.slane %v3746, %v3770
      %v3772 = vlaneseq
      %v3773 = vshrl.u32 %v3772, 7
      %v3774 = vsub.s32 2, %v3773
      %v3775 = vrot.slane %v3746, %v3774
      %v3776 = vlaneseq
      %v3777 = vshrl.u32 %v3776, 7
      %v3778 = vsub.s32 3, %v3777
      %v3779 = vrot.slane %v3746, %v3778
      %v3780 = vlaneseq
      %v3781 = vshrl.u32 %v3780, 7
      %v3782 = vsub.s32 4, %v3781
      %v3783 = vrot.slane %v3746, %v3782
      %v3784 = vlaneseq
      %v3785 = vshrl.u32 %v3784, 7
      %v3786 = vsub.s32 5, %v3785
      %v3787 = vrot.slane %v3746, %v3786
      %v3788 = vlaneseq
      %v3789 = vshrl.u32 %v3788, 7
      %v3790 = vsub.s32 6, %v3789
      %v3791 = vrot.slane %v3746, %v3790
      %v3863 = vunpack.c.l.b16 %v3682
      %v3864 = vunpack.c.h.b16 %v3682
      %v3865 = vunpack.c.l.b16 %v3683
      %v3866 = vunpack.c.h.b16 %v3683
      %v3867 = vunpack.c.l.b16 %v3684
      %v3868 = vunpack.c.h.b16 %v3684
      %v3869 = vunpack.c.l.b16 %v3685
      %v3870 = vunpack.c.l.b16 %v3686
      %v3871 = vunpack.c.h.b16 %v3686
      %v3872 = vunpack.c.l.b16 %v3687
      %v3873 = vunpack.c.h.b16 %v3687
      %v3874 = vunpack.c.l.b16 %v3688
      %v3875 = vunpack.c.h.b16 %v3688
      %v3876 = vunpack.c.l.b16 %v3689
      %v3877 = vunpack.c.l.b16 %v3690
      %v3878 = vunpack.c.h.b16 %v3690
      %v3879 = vunpack.c.l.b16 %v3691
      %v3880 = vunpack.c.h.b16 %v3691
      %v3881 = vunpack.c.l.b16 %v3692
      %v3882 = vunpack.c.h.b16 %v3692
      %v3883 = vunpack.c.l.b16 %v3693
      %v3884 = vunpack.c.l.b16 %v3694
      %v3885 = vunpack.c.h.b16 %v3694
      %v3886 = vunpack.c.l.b16 %v3695
      %v3887 = vunpack.c.h.b16 %v3695
      %v3888 = vunpack.c.l.b16 %v3696
      %v3889 = vunpack.c.h.b16 %v3696
      %v3890 = vunpack.c.l.b16 %v3697
      %v3891 = vunpack.c.l.b16 %v3698
      %v3892 = vunpack.c.h.b16 %v3698
      %v3893 = vunpack.c.l.b16 %v3699
      %v3894 = vunpack.c.h.b16 %v3699
      %v3895 = vunpack.c.l.b16 %v3700
      %v3896 = vunpack.c.h.b16 %v3700
      %v3897 = vunpack.c.l.b16 %v3701
      %v3898 = vunpack.c.l.b16 %v3702
      %v3899 = vunpack.c.h.b16 %v3702
      %v3900 = vunpack.c.l.b16 %v3703
      %v3901 = vunpack.c.h.b16 %v3703
      %v3902 = vunpack.c.l.b16 %v3704
      %v3903 = vunpack.c.h.b16 %v3704
      %v3904 = vunpack.c.l.b16 %v3705
      %v3905 = vunpack.c.l.b16 %v3706
      %v3906 = vunpack.c.h.b16 %v3706
      %v3907 = vunpack.c.l.b16 %v3707
      %v3908 = vunpack.c.h.b16 %v3707
      %v3909 = vunpack.c.l.b16 %v3708
      %v3910 = vunpack.c.h.b16 %v3708
      %v3911 = vunpack.c.l.b16 %v3709
      %v3912 = vunpack.c.l.b16 %v3710
      %v3913 = vunpack.c.h.b16 %v3710
      %v3914 = vunpack.c.l.b16 %v3711
      %v3915 = vunpack.c.h.b16 %v3711
      %v3916 = vunpack.c.l.b16 %v3712
      %v3917 = vunpack.c.h.b16 %v3712
      %v3918 = vunpack.c.l.b16 %v3713
      %v3919 = vunpack.c.l.b16 %v3714
      %v3920 = vunpack.c.h.b16 %v3714
      %v3921 = vunpack.c.l.b16 %v3715
      %v3922 = vunpack.c.h.b16 %v3715
      %v3923 = vunpack.c.l.b16 %v3716
      %v3924 = vunpack.c.h.b16 %v3716
      %v3925 = vunpack.c.l.b16 %v3717
      %v3926 = vunpack.c.l.b16 %v3718
      %v3927 = vunpack.c.h.b16 %v3718
      %v3928 = vunpack.c.l.b16 %v3719
      %v3929 = vunpack.c.h.b16 %v3719
      %v3930 = vunpack.c.l.b16 %v3720
      %v3931 = vunpack.c.h.b16 %v3720
      %v3932 = vunpack.c.l.b16 %v3721
      %v3933 = vunpack.c.l.b16 %v3722
      %v3934 = vunpack.c.h.b16 %v3722
      %v3935 = vunpack.c.l.b16 %v3723
      %v3936 = vunpack.c.h.b16 %v3723
      %v3937 = vunpack.c.l.b16 %v3724
      %v3938 = vunpack.c.h.b16 %v3724
      %v3939 = vunpack.c.l.b16 %v3725
      %v3940 = vunpack.c.l.b16 %v3726
      %v3941 = vunpack.c.h.b16 %v3726
      %v3942 = vunpack.c.l.b16 %v3727
      %v3943 = vunpack.c.h.b16 %v3727
      %v3944 = vunpack.c.l.b16 %v3728
      %v3945 = vunpack.c.h.b16 %v3728
      %v3946 = vunpack.c.l.b16 %v3729
      %v3947 = vunpack.c.l.b16 %v3730
      %v3948 = vunpack.c.h.b16 %v3730
      %v3949 = vunpack.c.l.b16 %v3731
      %v3950 = vunpack.c.h.b16 %v3731
      %v3951 = vunpack.c.l.b16 %v3732
      %v3952 = vunpack.c.h.b16 %v3732
      %v3953 = vunpack.c.l.b16 %v3733
      %v3954 = vunpack.c.l.b16 %v3734
      %v3955 = vunpack.c.h.b16 %v3734
      %v3956 = vunpack.c.l.b16 %v3735
      %v3957 = vunpack.c.h.b16 %v3735
      %v3958 = vunpack.c.l.b16 %v3736
      %v3959 = vunpack.c.h.b16 %v3736
      %v3960 = vunpack.c.l.b16 %v3737
      %v3961 = vunpack.c.l.b16 %v3738
      %v3962 = vunpack.c.h.b16 %v3738
      %v3963 = vunpack.c.l.b16 %v3739
      %v3964 = vunpack.c.h.b16 %v3739
      %v3965 = vunpack.c.l.b16 %v3740
      %v3966 = vunpack.c.h.b16 %v3740
      %v3967 = vunpack.c.l.b16 %v3741
      %v3968 = vunpack.c.l.b16 %v3742
      %v3969 = vunpack.c.h.b16 %v3742
      %v3970 = vunpack.c.l.b16 %v3743
      %v3971 = vunpack.c.h.b16 %v3743
      %v3972 = vunpack.c.l.b16 %v3744
      %v3973 = vunpack.c.h.b16 %v3744
      %v3974 = vunpack.c.l.b16 %v3745
      %v3975 = vpack.c.b16 %v3870, %v3863
      %v3976 = vpack.c.b16 %v3871, %v3864
      %v3977 = vpack.c.b16 %v3872, %v3865
      %v3978 = vpack.c.b16 %v3873, %v3866
      %v3979 = vpack.c.b16 %v3874, %v3867
      %v3980 = vpack.c.b16 %v3875, %v3868
      %v3981 = vpack.c.b16 %v3876, %v3869
      %v3982 = vpack.c.b16 %v3884, %v3877
      %v3983 = vpack.c.b16 %v3885, %v3878
      %v3984 = vpack.c.b16 %v3886, %v3879
      %v3985 = vpack.c.b16 %v3887, %v3880
      %v3986 = vpack.c.b16 %v3888, %v3881
      %v3987 = vpack.c.b16 %v3889, %v3882
      %v3988 = vpack.c.b16 %v3890, %v3883
      %v3989 = vpack.c.b16 %v3898, %v3891
      %v3990 = vpack.c.b16 %v3899, %v3892
      %v3991 = vpack.c.b16 %v3900, %v3893
      %v3992 = vpack.c.b16 %v3901, %v3894
      %v3993 = vpack.c.b16 %v3902, %v3895
      %v3994 = vpack.c.b16 %v3903, %v3896
      %v3995 = vpack.c.b16 %v3904, %v3897
      %v3996 = vpack.c.b16 %v3912, %v3905
      %v3997 = vpack.c.b16 %v3913, %v3906
      %v3998 = vpack.c.b16 %v3914, %v3907
      %v3999 = vpack.c.b16 %v3915, %v3908
      %v4000 = vpack.c.b16 %v3916, %v3909
      %v4001 = vpack.c.b16 %v3917, %v3910
      %v4002 = vpack.c.b16 %v3918, %v3911
      %v4003 = vpack.c.b16 %v3926, %v3919
      %v4004 = vpack.c.b16 %v3927, %v3920
      %v4005 = vpack.c.b16 %v3928, %v3921
      %v4006 = vpack.c.b16 %v3929, %v3922
      %v4007 = vpack.c.b16 %v3930, %v3923
      %v4008 = vpack.c.b16 %v3931, %v3924
      %v4009 = vpack.c.b16 %v3932, %v3925
      %v4010 = vpack.c.b16 %v3940, %v3933
      %v4011 = vpack.c.b16 %v3941, %v3934
      %v4012 = vpack.c.b16 %v3942, %v3935
      %v4013 = vpack.c.b16 %v3943, %v3936
      %v4014 = vpack.c.b16 %v3944, %v3937
      %v4015 = vpack.c.b16 %v3945, %v3938
      %v4016 = vpack.c.b16 %v3946, %v3939
      %v4017 = vpack.c.b16 %v3954, %v3947
      %v4018 = vpack.c.b16 %v3955, %v3948
      %v4019 = vpack.c.b16 %v3956, %v3949
      %v4020 = vpack.c.b16 %v3957, %v3950
      %v4021 = vpack.c.b16 %v3958, %v3951
      %v4022 = vpack.c.b16 %v3959, %v3952
      %v4023 = vpack.c.b16 %v3960, %v3953
      %v4024 = vpack.c.b16 %v3968, %v3961
      %v4025 = vpack.c.b16 %v3969, %v3962
      %v4026 = vpack.c.b16 %v3970, %v3963
      %v4027 = vpack.c.b16 %v3971, %v3964
      %v4028 = vpack.c.b16 %v3972, %v3965
      %v4029 = vpack.c.b16 %v3973, %v3966
      %v4030 = vpack.c.b16 %v3974, %v3967
      %4087 = vmatprep.subr.bf16.mxu0 %v4025
      %4088 = vmatpush1.bf16.msra.mxu0 %v4024
      %4089 = vmatprep.subr.bf16.mxu0 %v4018
      %4090 = vmatpush1.bf16.msra.mxu0 %v4017
      %4091 = vmatprep.subr.bf16.mxu0 %v4011
      %4092 = vmatpush1.bf16.msra.mxu0 %v4010
      %4093 = vmatprep.subr.bf16.mxu0 %v4004
      %4094 = vmatpush1.bf16.msra.mxu0 %v4003
      %4095 = vmatprep.subr.bf16.mxu0 %v3997
      %4096 = vmatpush1.bf16.msra.mxu0 %v3996
      %4097 = vmatprep.subr.bf16.mxu0 %v3990
      %4098 = vmatpush1.bf16.msra.mxu0 %v3989
      %4099 = vmatprep.subr.bf16.mxu0 %v3983
      %4100 = vmatpush1.bf16.msra.mxu0 %v3982
      %4101 = vmatprep.subr.bf16.mxu0 %v3976
      %4102 = vmatpush1.bf16.msra.mxu0 %v3975
      %4103 = vmatprep.subr.bf16.mxu0 0
      %4104 = vmatpush2.bf16.msra.mxu0 0
      %4105 = vmatprep.subr.bf16.mxu0 0
      %4106 = vmatpush2.bf16.msra.mxu0 0
      %4107 = vmatprep.subr.bf16.mxu0 0
      %4108 = vmatpush2.bf16.msra.mxu0 0
      %4109 = vmatprep.subr.bf16.mxu0 0
      %4110 = vmatpush2.bf16.msra.mxu0 0
      %4111 = vmatprep.subr.bf16.mxu0 0
      %4112 = vmatpush2.bf16.msra.mxu0 0
      %4113 = vmatprep.subr.bf16.mxu0 0
      %4114 = vmatpush2.bf16.msra.mxu0 0
      %4115 = vmatprep.subr.bf16.mxu0 0
      %4116 = vmatpush2.bf16.msra.mxu0 0
      %4117 = vmatprep.subr.bf16.mxu0 0
      %4118 = vmatpush2.bf16.msra.mxu0 0
      %4119 = vmatprep.mubr.bf16.mxu0 0
      %4120 = vmatmul.mubr.bf16.gmra.mxu0 %v3747
      %v4121 = vpop.f32.mrf.mxu0
      %v4122 = vadd.f32 %v3767, %v4121
      %v4123 = vpop.f32.mrf.mxu0
      %v4124 = vadd.f32 %v3771, %v4123
      %v4125 = vpop.f32.mrf.mxu0
      %v4126 = vadd.f32 %v3767, %v4125
      %v4127 = vpop.f32.mrf.mxu0
      %v4128 = vadd.f32 %v3771, %v4127
      %4129 = vmatprep.mubr.bf16.mxu0 0
      %4130 = vmatmul.mubr.bf16.gmra.mxu0 %v3748
      %v4131 = vpop.f32.mrf.mxu0
      %v4132 = vadd.f32 %v3767, %v4131
      %v4133 = vpop.f32.mrf.mxu0
      %v4134 = vadd.f32 %v3771, %v4133
      %v4135 = vpop.f32.mrf.mxu0
      %v4136 = vadd.f32 %v3767, %v4135
      %v4137 = vpop.f32.mrf.mxu0
      %v4138 = vadd.f32 %v3771, %v4137
      %4139 = vmatprep.mubr.bf16.mxu0 0
      %4140 = vmatmul.mubr.bf16.gmra.mxu0 %v3749
      %v4141 = vpop.f32.mrf.mxu0
      %v4142 = vadd.f32 %v3767, %v4141
      %v4143 = vpop.f32.mrf.mxu0
      %v4144 = vadd.f32 %v3771, %v4143
      %v4145 = vpop.f32.mrf.mxu0
      %v4146 = vadd.f32 %v3767, %v4145
      %v4147 = vpop.f32.mrf.mxu0
      %v4148 = vadd.f32 %v3771, %v4147
      %4149 = vmatprep.mubr.bf16.mxu0 0
      %4150 = vmatmul.mubr.bf16.gmra.mxu0 %v3750
      %v4151 = vpop.f32.mrf.mxu0
      %v4152 = vadd.f32 %v3767, %v4151
      %v4153 = vpop.f32.mrf.mxu0
      %v4154 = vadd.f32 %v3771, %v4153
      %v4155 = vpop.f32.mrf.mxu0
      %v4156 = vadd.f32 %v3767, %v4155
      %v4157 = vpop.f32.mrf.mxu0
      %v4158 = vadd.f32 %v3771, %v4157
      %4159 = vmatprep.mubr.bf16.mxu0 0
      %4160 = vmatmul.mubr.bf16.gmra.mxu0 %v3751
      %v4161 = vpop.f32.mrf.mxu0
      %v4162 = vadd.f32 %v3767, %v4161
      %v4163 = vpop.f32.mrf.mxu0
      %v4164 = vadd.f32 %v3771, %v4163
      %v4165 = vpop.f32.mrf.mxu0
      %v4166 = vadd.f32 %v3767, %v4165
      %v4167 = vpop.f32.mrf.mxu0
      %v4168 = vadd.f32 %v3771, %v4167
      %4169 = vmatprep.mubr.bf16.mxu0 0
      %4170 = vmatmul.mubr.bf16.gmra.mxu0 %v3752
      %v4171 = vpop.f32.mrf.mxu0
      %v4172 = vadd.f32 %v3767, %v4171
      %v4173 = vpop.f32.mrf.mxu0
      %v4174 = vadd.f32 %v3771, %v4173
      %v4175 = vpop.f32.mrf.mxu0
      %v4176 = vadd.f32 %v3767, %v4175
      %v4177 = vpop.f32.mrf.mxu0
      %v4178 = vadd.f32 %v3771, %v4177
      %4179 = vmatprep.mubr.bf16.mxu0 0
      %4180 = vmatmul.mubr.bf16.gmra.mxu0 %v3753
      %v4181 = vpop.f32.mrf.mxu0
      %v4182 = vadd.f32 %v3767, %v4181
      %v4183 = vpop.f32.mrf.mxu0
      %v4184 = vadd.f32 %v3771, %v4183
      %v4185 = vpop.f32.mrf.mxu0
      %v4186 = vadd.f32 %v3767, %v4185
      %v4187 = vpop.f32.mrf.mxu0
      %v4188 = vadd.f32 %v3771, %v4187
      %4189 = vmatprep.mubr.bf16.mxu0 0
      %4190 = vmatmul.mubr.bf16.gmra.mxu0 %v3754
      %v4191 = vpop.f32.mrf.mxu0
      %v4192 = vadd.f32 %v3767, %v4191
      %v4193 = vpop.f32.mrf.mxu0
      %v4194 = vadd.f32 %v3771, %v4193
      %v4195 = vpop.f32.mrf.mxu0
      %v4196 = vadd.f32 %v3767, %v4195
      %v4197 = vpop.f32.mrf.mxu0
      %v4198 = vadd.f32 %v3771, %v4197
      %4199 = vmatprep.mubr.bf16.mxu0 0
      %4200 = vmatmul.mubr.bf16.gmra.mxu0 %v3755
      %v4201 = vpop.f32.mrf.mxu0
      %v4202 = vadd.f32 %v3767, %v4201
      %v4203 = vpop.f32.mrf.mxu0
      %v4204 = vadd.f32 %v3771, %v4203
      %v4205 = vpop.f32.mrf.mxu0
      %v4206 = vadd.f32 %v3767, %v4205
      %v4207 = vpop.f32.mrf.mxu0
      %v4208 = vadd.f32 %v3771, %v4207
      %4209 = vmatprep.mubr.bf16.mxu0 0
      %4210 = vmatmul.mubr.bf16.gmra.mxu0 %v3756
      %v4211 = vpop.f32.mrf.mxu0
      %v4212 = vadd.f32 %v3767, %v4211
      %v4213 = vpop.f32.mrf.mxu0
      %v4214 = vadd.f32 %v3771, %v4213
      %v4215 = vpop.f32.mrf.mxu0
      %v4216 = vadd.f32 %v3767, %v4215
      %v4217 = vpop.f32.mrf.mxu0
      %v4218 = vadd.f32 %v3771, %v4217
      %4219 = vmatprep.mubr.bf16.mxu0 0
      %4220 = vmatmul.mubr.bf16.gmra.mxu0 %v3757
      %v4221 = vpop.f32.mrf.mxu0
      %v4222 = vadd.f32 %v3767, %v4221
      %v4223 = vpop.f32.mrf.mxu0
      %v4224 = vadd.f32 %v3771, %v4223
      %v4225 = vpop.f32.mrf.mxu0
      %v4226 = vadd.f32 %v3767, %v4225
      %v4227 = vpop.f32.mrf.mxu0
      %v4228 = vadd.f32 %v3771, %v4227
      %4229 = vmatprep.mubr.bf16.mxu0 0
      %4230 = vmatmul.mubr.bf16.gmra.mxu0 %v3758
      %v4231 = vpop.f32.mrf.mxu0
      %v4232 = vadd.f32 %v3767, %v4231
      %v4233 = vpop.f32.mrf.mxu0
      %v4234 = vadd.f32 %v3771, %v4233
      %v4235 = vpop.f32.mrf.mxu0
      %v4236 = vadd.f32 %v3767, %v4235
      %v4237 = vpop.f32.mrf.mxu0
      %v4238 = vadd.f32 %v3771, %v4237
      %4239 = vmatprep.mubr.bf16.mxu0 0
      %4240 = vmatmul.mubr.bf16.gmra.mxu0 %v3759
      %v4241 = vpop.f32.mrf.mxu0
      %v4242 = vadd.f32 %v3767, %v4241
      %v4243 = vpop.f32.mrf.mxu0
      %v4244 = vadd.f32 %v3771, %v4243
      %v4245 = vpop.f32.mrf.mxu0
      %v4246 = vadd.f32 %v3767, %v4245
      %v4247 = vpop.f32.mrf.mxu0
      %v4248 = vadd.f32 %v3771, %v4247
      %4249 = vmatprep.mubr.bf16.mxu0 0
      %4250 = vmatmul.mubr.bf16.gmra.mxu0 %v3760
      %v4251 = vpop.f32.mrf.mxu0
      %v4252 = vadd.f32 %v3767, %v4251
      %v4253 = vpop.f32.mrf.mxu0
      %v4254 = vadd.f32 %v3771, %v4253
      %v4255 = vpop.f32.mrf.mxu0
      %v4256 = vadd.f32 %v3767, %v4255
      %v4257 = vpop.f32.mrf.mxu0
      %v4258 = vadd.f32 %v3771, %v4257
      %4259 = vmatprep.mubr.bf16.mxu0 0
      %4260 = vmatmul.mubr.bf16.gmra.mxu0 %v3761
      %v4261 = vpop.f32.mrf.mxu0
      %v4262 = vadd.f32 %v3767, %v4261
      %v4263 = vpop.f32.mrf.mxu0
      %v4264 = vadd.f32 %v3771, %v4263
      %v4265 = vpop.f32.mrf.mxu0
      %v4266 = vadd.f32 %v3767, %v4265
      %v4267 = vpop.f32.mrf.mxu0
      %v4268 = vadd.f32 %v3771, %v4267
      %4269 = vmatprep.mubr.bf16.mxu0 0
      %4270 = vmatmul.mubr.bf16.gmra.mxu0 %v3762
      %v4271 = vpop.f32.mrf.mxu0
      %v4272 = vadd.f32 %v3767, %v4271
      %v4273 = vpop.f32.mrf.mxu0
      %v4274 = vadd.f32 %v3771, %v4273
      %v4275 = vpop.f32.mrf.mxu0
      %v4276 = vadd.f32 %v3767, %v4275
      %v4277 = vpop.f32.mrf.mxu0
      %v4278 = vadd.f32 %v3771, %v4277
      %4279 = vdwg.mxu0
      %4280 = vmatprep.subr.bf16.mxu0 %v4027
      %4281 = vmatpush1.bf16.msra.mxu0 %v4026
      %4282 = vmatprep.subr.bf16.mxu0 %v4020
      %4283 = vmatpush1.bf16.msra.mxu0 %v4019
      %4284 = vmatprep.subr.bf16.mxu0 %v4013
      %4285 = vmatpush1.bf16.msra.mxu0 %v4012
      %4286 = vmatprep.subr.bf16.mxu0 %v4006
      %4287 = vmatpush1.bf16.msra.mxu0 %v4005
      %4288 = vmatprep.subr.bf16.mxu0 %v3999
      %4289 = vmatpush1.bf16.msra.mxu0 %v3998
      %4290 = vmatprep.subr.bf16.mxu0 %v3992
      %4291 = vmatpush1.bf16.msra.mxu0 %v3991
      %4292 = vmatprep.subr.bf16.mxu0 %v3985
      %4293 = vmatpush1.bf16.msra.mxu0 %v3984
      %4294 = vmatprep.subr.bf16.mxu0 %v3978
      %4295 = vmatpush1.bf16.msra.mxu0 %v3977
      %4296 = vmatprep.subr.bf16.mxu0 0
      %4297 = vmatpush2.bf16.msra.mxu0 0
      %4298 = vmatprep.subr.bf16.mxu0 0
      %4299 = vmatpush2.bf16.msra.mxu0 0
      %4300 = vmatprep.subr.bf16.mxu0 0
      %4301 = vmatpush2.bf16.msra.mxu0 0
      %4302 = vmatprep.subr.bf16.mxu0 0
      %4303 = vmatpush2.bf16.msra.mxu0 0
      %4304 = vmatprep.subr.bf16.mxu0 0
      %4305 = vmatpush2.bf16.msra.mxu0 0
      %4306 = vmatprep.subr.bf16.mxu0 0
      %4307 = vmatpush2.bf16.msra.mxu0 0
      %4308 = vmatprep.subr.bf16.mxu0 0
      %4309 = vmatpush2.bf16.msra.mxu0 0
      %4310 = vmatprep.subr.bf16.mxu0 0
      %4311 = vmatpush2.bf16.msra.mxu0 0
      %4312 = vmatprep.mubr.bf16.mxu0 0
      %4313 = vmatmul.mubr.bf16.gmra.mxu0 %v3747
      %v4314 = vpop.f32.mrf.mxu0
      %v4315 = vadd.f32 %v3775, %v4314
      %v4316 = vpop.f32.mrf.mxu0
      %v4317 = vadd.f32 %v3779, %v4316
      %v4318 = vpop.f32.mrf.mxu0
      %v4319 = vadd.f32 %v3775, %v4318
      %v4320 = vpop.f32.mrf.mxu0
      %v4321 = vadd.f32 %v3779, %v4320
      %4322 = vmatprep.mubr.bf16.mxu0 0
      %4323 = vmatmul.mubr.bf16.gmra.mxu0 %v3748
      %v4324 = vpop.f32.mrf.mxu0
      %v4325 = vadd.f32 %v3775, %v4324
      %v4326 = vpop.f32.mrf.mxu0
      %v4327 = vadd.f32 %v3779, %v4326
      %v4328 = vpop.f32.mrf.mxu0
      %v4329 = vadd.f32 %v3775, %v4328
      %v4330 = vpop.f32.mrf.mxu0
      %v4331 = vadd.f32 %v3779, %v4330
      %4332 = vmatprep.mubr.bf16.mxu0 0
      %4333 = vmatmul.mubr.bf16.gmra.mxu0 %v3749
      %v4334 = vpop.f32.mrf.mxu0
      %v4335 = vadd.f32 %v3775, %v4334
      %v4336 = vpop.f32.mrf.mxu0
      %v4337 = vadd.f32 %v3779, %v4336
      %v4338 = vpop.f32.mrf.mxu0
      %v4339 = vadd.f32 %v3775, %v4338
      %v4340 = vpop.f32.mrf.mxu0
      %v4341 = vadd.f32 %v3779, %v4340
      %4342 = vmatprep.mubr.bf16.mxu0 0
      %4343 = vmatmul.mubr.bf16.gmra.mxu0 %v3750
      %v4344 = vpop.f32.mrf.mxu0
      %v4345 = vadd.f32 %v3775, %v4344
      %v4346 = vpop.f32.mrf.mxu0
      %v4347 = vadd.f32 %v3779, %v4346
      %v4348 = vpop.f32.mrf.mxu0
      %v4349 = vadd.f32 %v3775, %v4348
      %v4350 = vpop.f32.mrf.mxu0
      %v4351 = vadd.f32 %v3779, %v4350
      %4352 = vmatprep.mubr.bf16.mxu0 0
      %4353 = vmatmul.mubr.bf16.gmra.mxu0 %v3751
      %v4354 = vpop.f32.mrf.mxu0
      %v4355 = vadd.f32 %v3775, %v4354
      %v4356 = vpop.f32.mrf.mxu0
      %v4357 = vadd.f32 %v3779, %v4356
      %v4358 = vpop.f32.mrf.mxu0
      %v4359 = vadd.f32 %v3775, %v4358
      %v4360 = vpop.f32.mrf.mxu0
      %v4361 = vadd.f32 %v3779, %v4360
      %4362 = vmatprep.mubr.bf16.mxu0 0
      %4363 = vmatmul.mubr.bf16.gmra.mxu0 %v3752
      %v4364 = vpop.f32.mrf.mxu0
      %v4365 = vadd.f32 %v3775, %v4364
      %v4366 = vpop.f32.mrf.mxu0
      %v4367 = vadd.f32 %v3779, %v4366
      %v4368 = vpop.f32.mrf.mxu0
      %v4369 = vadd.f32 %v3775, %v4368
      %v4370 = vpop.f32.mrf.mxu0
      %v4371 = vadd.f32 %v3779, %v4370
      %4372 = vmatprep.mubr.bf16.mxu0 0
      %4373 = vmatmul.mubr.bf16.gmra.mxu0 %v3753
      %v4374 = vpop.f32.mrf.mxu0
      %v4375 = vadd.f32 %v3775, %v4374
      %v4376 = vpop.f32.mrf.mxu0
      %v4377 = vadd.f32 %v3779, %v4376
      %v4378 = vpop.f32.mrf.mxu0
      %v4379 = vadd.f32 %v3775, %v4378
      %v4380 = vpop.f32.mrf.mxu0
      %v4381 = vadd.f32 %v3779, %v4380
      %4382 = vmatprep.mubr.bf16.mxu0 0
      %4383 = vmatmul.mubr.bf16.gmra.mxu0 %v3754
      %v4384 = vpop.f32.mrf.mxu0
      %v4385 = vadd.f32 %v3775, %v4384
      %v4386 = vpop.f32.mrf.mxu0
      %v4387 = vadd.f32 %v3779, %v4386
      %v4388 = vpop.f32.mrf.mxu0
      %v4389 = vadd.f32 %v3775, %v4388
      %v4390 = vpop.f32.mrf.mxu0
      %v4391 = vadd.f32 %v3779, %v4390
      %4392 = vmatprep.mubr.bf16.mxu0 0
      %4393 = vmatmul.mubr.bf16.gmra.mxu0 %v3755
      %v4394 = vpop.f32.mrf.mxu0
      %v4395 = vadd.f32 %v3775, %v4394
      %v4396 = vpop.f32.mrf.mxu0
      %v4397 = vadd.f32 %v3779, %v4396
      %v4398 = vpop.f32.mrf.mxu0
      %v4399 = vadd.f32 %v3775, %v4398
      %v4400 = vpop.f32.mrf.mxu0
      %v4401 = vadd.f32 %v3779, %v4400
      %4402 = vmatprep.mubr.bf16.mxu0 0
      %4403 = vmatmul.mubr.bf16.gmra.mxu0 %v3756
      %v4404 = vpop.f32.mrf.mxu0
      %v4405 = vadd.f32 %v3775, %v4404
      %v4406 = vpop.f32.mrf.mxu0
      %v4407 = vadd.f32 %v3779, %v4406
      %v4408 = vpop.f32.mrf.mxu0
      %v4409 = vadd.f32 %v3775, %v4408
      %v4410 = vpop.f32.mrf.mxu0
      %v4411 = vadd.f32 %v3779, %v4410
      %4412 = vmatprep.mubr.bf16.mxu0 0
      %4413 = vmatmul.mubr.bf16.gmra.mxu0 %v3757
      %v4414 = vpop.f32.mrf.mxu0
      %v4415 = vadd.f32 %v3775, %v4414
      %v4416 = vpop.f32.mrf.mxu0
      %v4417 = vadd.f32 %v3779, %v4416
      %v4418 = vpop.f32.mrf.mxu0
      %v4419 = vadd.f32 %v3775, %v4418
      %v4420 = vpop.f32.mrf.mxu0
      %v4421 = vadd.f32 %v3779, %v4420
      %4422 = vmatprep.mubr.bf16.mxu0 0
      %4423 = vmatmul.mubr.bf16.gmra.mxu0 %v3758
      %v4424 = vpop.f32.mrf.mxu0
      %v4425 = vadd.f32 %v3775, %v4424
      %v4426 = vpop.f32.mrf.mxu0
      %v4427 = vadd.f32 %v3779, %v4426
      %v4428 = vpop.f32.mrf.mxu0
      %v4429 = vadd.f32 %v3775, %v4428
      %v4430 = vpop.f32.mrf.mxu0
      %v4431 = vadd.f32 %v3779, %v4430
      %4432 = vmatprep.mubr.bf16.mxu0 0
      %4433 = vmatmul.mubr.bf16.gmra.mxu0 %v3759
      %v4434 = vpop.f32.mrf.mxu0
      %v4435 = vadd.f32 %v3775, %v4434
      %v4436 = vpop.f32.mrf.mxu0
      %v4437 = vadd.f32 %v3779, %v4436
      %v4438 = vpop.f32.mrf.mxu0
      %v4439 = vadd.f32 %v3775, %v4438
      %v4440 = vpop.f32.mrf.mxu0
      %v4441 = vadd.f32 %v3779, %v4440
      %4442 = vmatprep.mubr.bf16.mxu0 0
      %4443 = vmatmul.mubr.bf16.gmra.mxu0 %v3760
      %v4444 = vpop.f32.mrf.mxu0
      %v4445 = vadd.f32 %v3775, %v4444
      %v4446 = vpop.f32.mrf.mxu0
      %v4447 = vadd.f32 %v3779, %v4446
      %v4448 = vpop.f32.mrf.mxu0
      %v4449 = vadd.f32 %v3775, %v4448
      %v4450 = vpop.f32.mrf.mxu0
      %v4451 = vadd.f32 %v3779, %v4450
      %4452 = vmatprep.mubr.bf16.mxu0 0
      %4453 = vmatmul.mubr.bf16.gmra.mxu0 %v3761
      %v4454 = vpop.f32.mrf.mxu0
      %v4455 = vadd.f32 %v3775, %v4454
      %v4456 = vpop.f32.mrf.mxu0
      %v4457 = vadd.f32 %v3779, %v4456
      %v4458 = vpop.f32.mrf.mxu0
      %v4459 = vadd.f32 %v3775, %v4458
      %v4460 = vpop.f32.mrf.mxu0
      %v4461 = vadd.f32 %v3779, %v4460
      %4462 = vmatprep.mubr.bf16.mxu0 0
      %4463 = vmatmul.mubr.bf16.gmra.mxu0 %v3762
      %v4464 = vpop.f32.mrf.mxu0
      %v4465 = vadd.f32 %v3775, %v4464
      %v4466 = vpop.f32.mrf.mxu0
      %v4467 = vadd.f32 %v3779, %v4466
      %v4468 = vpop.f32.mrf.mxu0
      %v4469 = vadd.f32 %v3775, %v4468
      %v4470 = vpop.f32.mrf.mxu0
      %v4471 = vadd.f32 %v3779, %v4470
      %4472 = vdwg.mxu0
      %4473 = vmatprep.subr.bf16.mxu0 %v4029
      %4474 = vmatpush1.bf16.msra.mxu0 %v4028
      %4475 = vmatprep.subr.bf16.mxu0 %v4022
      %4476 = vmatpush1.bf16.msra.mxu0 %v4021
      %4477 = vmatprep.subr.bf16.mxu0 %v4015
      %4478 = vmatpush1.bf16.msra.mxu0 %v4014
      %4479 = vmatprep.subr.bf16.mxu0 %v4008
      %4480 = vmatpush1.bf16.msra.mxu0 %v4007
      %4481 = vmatprep.subr.bf16.mxu0 %v4001
      %4482 = vmatpush1.bf16.msra.mxu0 %v4000
      %4483 = vmatprep.subr.bf16.mxu0 %v3994
      %4484 = vmatpush1.bf16.msra.mxu0 %v3993
      %4485 = vmatprep.subr.bf16.mxu0 %v3987
      %4486 = vmatpush1.bf16.msra.mxu0 %v3986
      %4487 = vmatprep.subr.bf16.mxu0 %v3980
      %4488 = vmatpush1.bf16.msra.mxu0 %v3979
      %4489 = vmatprep.subr.bf16.mxu0 0
      %4490 = vmatpush2.bf16.msra.mxu0 0
      %4491 = vmatprep.subr.bf16.mxu0 0
      %4492 = vmatpush2.bf16.msra.mxu0 0
      %4493 = vmatprep.subr.bf16.mxu0 0
      %4494 = vmatpush2.bf16.msra.mxu0 0
      %4495 = vmatprep.subr.bf16.mxu0 0
      %4496 = vmatpush2.bf16.msra.mxu0 0
      %4497 = vmatprep.subr.bf16.mxu0 0
      %4498 = vmatpush2.bf16.msra.mxu0 0
      %4499 = vmatprep.subr.bf16.mxu0 0
      %4500 = vmatpush2.bf16.msra.mxu0 0
      %4501 = vmatprep.subr.bf16.mxu0 0
      %4502 = vmatpush2.bf16.msra.mxu0 0
      %4503 = vmatprep.subr.bf16.mxu0 0
      %4504 = vmatpush2.bf16.msra.mxu0 0
      %4505 = vmatprep.mubr.bf16.mxu0 0
      %4506 = vmatmul.mubr.bf16.gmra.mxu0 %v3747
      %v4507 = vpop.f32.mrf.mxu0
      %v4508 = vadd.f32 %v3783, %v4507
      %v4509 = vpop.f32.mrf.mxu0
      %v4510 = vadd.f32 %v3787, %v4509
      %v4511 = vpop.f32.mrf.mxu0
      %v4512 = vadd.f32 %v3783, %v4511
      %v4513 = vpop.f32.mrf.mxu0
      %v4514 = vadd.f32 %v3787, %v4513
      %4515 = vmatprep.mubr.bf16.mxu0 0
      %4516 = vmatmul.mubr.bf16.gmra.mxu0 %v3748
      %v4517 = vpop.f32.mrf.mxu0
      %v4518 = vadd.f32 %v3783, %v4517
      %v4519 = vpop.f32.mrf.mxu0
      %v4520 = vadd.f32 %v3787, %v4519
      %v4521 = vpop.f32.mrf.mxu0
      %v4522 = vadd.f32 %v3783, %v4521
      %v4523 = vpop.f32.mrf.mxu0
      %v4524 = vadd.f32 %v3787, %v4523
      %4525 = vmatprep.mubr.bf16.mxu0 0
      %4526 = vmatmul.mubr.bf16.gmra.mxu0 %v3749
      %v4527 = vpop.f32.mrf.mxu0
      %v4528 = vadd.f32 %v3783, %v4527
      %v4529 = vpop.f32.mrf.mxu0
      %v4530 = vadd.f32 %v3787, %v4529
      %v4531 = vpop.f32.mrf.mxu0
      %v4532 = vadd.f32 %v3783, %v4531
      %v4533 = vpop.f32.mrf.mxu0
      %v4534 = vadd.f32 %v3787, %v4533
      %4535 = vmatprep.mubr.bf16.mxu0 0
      %4536 = vmatmul.mubr.bf16.gmra.mxu0 %v3750
      %v4537 = vpop.f32.mrf.mxu0
      %v4538 = vadd.f32 %v3783, %v4537
      %v4539 = vpop.f32.mrf.mxu0
      %v4540 = vadd.f32 %v3787, %v4539
      %v4541 = vpop.f32.mrf.mxu0
      %v4542 = vadd.f32 %v3783, %v4541
      %v4543 = vpop.f32.mrf.mxu0
      %v4544 = vadd.f32 %v3787, %v4543
      %4545 = vmatprep.mubr.bf16.mxu0 0
      %4546 = vmatmul.mubr.bf16.gmra.mxu0 %v3751
      %v4547 = vpop.f32.mrf.mxu0
      %v4548 = vadd.f32 %v3783, %v4547
      %v4549 = vpop.f32.mrf.mxu0
      %v4550 = vadd.f32 %v3787, %v4549
      %v4551 = vpop.f32.mrf.mxu0
      %v4552 = vadd.f32 %v3783, %v4551
      %v4553 = vpop.f32.mrf.mxu0
      %v4554 = vadd.f32 %v3787, %v4553
      %4555 = vmatprep.mubr.bf16.mxu0 0
      %4556 = vmatmul.mubr.bf16.gmra.mxu0 %v3752
      %v4557 = vpop.f32.mrf.mxu0
      %v4558 = vadd.f32 %v3783, %v4557
      %v4559 = vpop.f32.mrf.mxu0
      %v4560 = vadd.f32 %v3787, %v4559
      %v4561 = vpop.f32.mrf.mxu0
      %v4562 = vadd.f32 %v3783, %v4561
      %v4563 = vpop.f32.mrf.mxu0
      %v4564 = vadd.f32 %v3787, %v4563
      %4565 = vmatprep.mubr.bf16.mxu0 0
      %4566 = vmatmul.mubr.bf16.gmra.mxu0 %v3753
      %v4567 = vpop.f32.mrf.mxu0
      %v4568 = vadd.f32 %v3783, %v4567
      %v4569 = vpop.f32.mrf.mxu0
      %v4570 = vadd.f32 %v3787, %v4569
      %v4571 = vpop.f32.mrf.mxu0
      %v4572 = vadd.f32 %v3783, %v4571
      %v4573 = vpop.f32.mrf.mxu0
      %v4574 = vadd.f32 %v3787, %v4573
      %4575 = vmatprep.mubr.bf16.mxu0 0
      %4576 = vmatmul.mubr.bf16.gmra.mxu0 %v3754
      %v4577 = vpop.f32.mrf.mxu0
      %v4578 = vadd.f32 %v3783, %v4577
      %v4579 = vpop.f32.mrf.mxu0
      %v4580 = vadd.f32 %v3787, %v4579
      %v4581 = vpop.f32.mrf.mxu0
      %v4582 = vadd.f32 %v3783, %v4581
      %v4583 = vpop.f32.mrf.mxu0
      %v4584 = vadd.f32 %v3787, %v4583
      %4585 = vmatprep.mubr.bf16.mxu0 0
      %4586 = vmatmul.mubr.bf16.gmra.mxu0 %v3755
      %v4587 = vpop.f32.mrf.mxu0
      %v4588 = vadd.f32 %v3783, %v4587
      %v4589 = vpop.f32.mrf.mxu0
      %v4590 = vadd.f32 %v3787, %v4589
      %v4591 = vpop.f32.mrf.mxu0
      %v4592 = vadd.f32 %v3783, %v4591
      %v4593 = vpop.f32.mrf.mxu0
      %v4594 = vadd.f32 %v3787, %v4593
      %4595 = vmatprep.mubr.bf16.mxu0 0
      %4596 = vmatmul.mubr.bf16.gmra.mxu0 %v3756
      %v4597 = vpop.f32.mrf.mxu0
      %v4598 = vadd.f32 %v3783, %v4597
      %v4599 = vpop.f32.mrf.mxu0
      %v4600 = vadd.f32 %v3787, %v4599
      %v4601 = vpop.f32.mrf.mxu0
      %v4602 = vadd.f32 %v3783, %v4601
      %v4603 = vpop.f32.mrf.mxu0
      %v4604 = vadd.f32 %v3787, %v4603
      %4605 = vmatprep.mubr.bf16.mxu0 0
      %4606 = vmatmul.mubr.bf16.gmra.mxu0 %v3757
      %v4607 = vpop.f32.mrf.mxu0
      %v4608 = vadd.f32 %v3783, %v4607
      %v4609 = vpop.f32.mrf.mxu0
      %v4610 = vadd.f32 %v3787, %v4609
      %v4611 = vpop.f32.mrf.mxu0
      %v4612 = vadd.f32 %v3783, %v4611
      %v4613 = vpop.f32.mrf.mxu0
      %v4614 = vadd.f32 %v3787, %v4613
      %4615 = vmatprep.mubr.bf16.mxu0 0
      %4616 = vmatmul.mubr.bf16.gmra.mxu0 %v3758
      %v4617 = vpop.f32.mrf.mxu0
      %v4618 = vadd.f32 %v3783, %v4617
      %v4619 = vpop.f32.mrf.mxu0
      %v4620 = vadd.f32 %v3787, %v4619
      %v4621 = vpop.f32.mrf.mxu0
      %v4622 = vadd.f32 %v3783, %v4621
      %v4623 = vpop.f32.mrf.mxu0
      %v4624 = vadd.f32 %v3787, %v4623
      %4625 = vmatprep.mubr.bf16.mxu0 0
      %4626 = vmatmul.mubr.bf16.gmra.mxu0 %v3759
      %v4627 = vpop.f32.mrf.mxu0
      %v4628 = vadd.f32 %v3783, %v4627
      %v4629 = vpop.f32.mrf.mxu0
      %v4630 = vadd.f32 %v3787, %v4629
      %v4631 = vpop.f32.mrf.mxu0
      %v4632 = vadd.f32 %v3783, %v4631
      %v4633 = vpop.f32.mrf.mxu0
      %v4634 = vadd.f32 %v3787, %v4633
      %4635 = vmatprep.mubr.bf16.mxu0 0
      %4636 = vmatmul.mubr.bf16.gmra.mxu0 %v3760
      %v4637 = vpop.f32.mrf.mxu0
      %v4638 = vadd.f32 %v3783, %v4637
      %v4639 = vpop.f32.mrf.mxu0
      %v4640 = vadd.f32 %v3787, %v4639
      %v4641 = vpop.f32.mrf.mxu0
      %v4642 = vadd.f32 %v3783, %v4641
      %v4643 = vpop.f32.mrf.mxu0
      %v4644 = vadd.f32 %v3787, %v4643
      %4645 = vmatprep.mubr.bf16.mxu0 0
      %4646 = vmatmul.mubr.bf16.gmra.mxu0 %v3761
      %v4647 = vpop.f32.mrf.mxu0
      %v4648 = vadd.f32 %v3783, %v4647
      %v4649 = vpop.f32.mrf.mxu0
      %v4650 = vadd.f32 %v3787, %v4649
      %v4651 = vpop.f32.mrf.mxu0
      %v4652 = vadd.f32 %v3783, %v4651
      %v4653 = vpop.f32.mrf.mxu0
      %v4654 = vadd.f32 %v3787, %v4653
      %4655 = vmatprep.mubr.bf16.mxu0 0
      %4656 = vmatmul.mubr.bf16.gmra.mxu0 %v3762
      %v4657 = vpop.f32.mrf.mxu0
      %v4658 = vadd.f32 %v3783, %v4657
      %v4659 = vpop.f32.mrf.mxu0
      %v4660 = vadd.f32 %v3787, %v4659
      %v4661 = vpop.f32.mrf.mxu0
      %v4662 = vadd.f32 %v3783, %v4661
      %v4663 = vpop.f32.mrf.mxu0
      %v4664 = vadd.f32 %v3787, %v4663
      %4665 = vdwg.mxu0
      %4666 = vmatprep.subr.bf16.mxu0 0
      %4667 = vmatpush1.bf16.msra.mxu0 %v4030
      %4668 = vmatprep.subr.bf16.mxu0 0
      %4669 = vmatpush1.bf16.msra.mxu0 %v4023
      %4670 = vmatprep.subr.bf16.mxu0 0
      %4671 = vmatpush1.bf16.msra.mxu0 %v4016
      %4672 = vmatprep.subr.bf16.mxu0 0
      %4673 = vmatpush1.bf16.msra.mxu0 %v4009
      %4674 = vmatprep.subr.bf16.mxu0 0
      %4675 = vmatpush1.bf16.msra.mxu0 %v4002
      %4676 = vmatprep.subr.bf16.mxu0 0
      %4677 = vmatpush1.bf16.msra.mxu0 %v3995
      %4678 = vmatprep.subr.bf16.mxu0 0
      %4679 = vmatpush1.bf16.msra.mxu0 %v3988
      %4680 = vmatprep.subr.bf16.mxu0 0
      %4681 = vmatpush1.bf16.msra.mxu0 %v3981
      %4682 = vmatprep.subr.bf16.mxu0 0
      %4683 = vmatpush2.bf16.msra.mxu0 0
      %4684 = vmatprep.subr.bf16.mxu0 0
      %4685 = vmatpush2.bf16.msra.mxu0 0
      %4686 = vmatprep.subr.bf16.mxu0 0
      %4687 = vmatpush2.bf16.msra.mxu0 0
      %4688 = vmatprep.subr.bf16.mxu0 0
      %4689 = vmatpush2.bf16.msra.mxu0 0
      %4690 = vmatprep.subr.bf16.mxu0 0
      %4691 = vmatpush2.bf16.msra.mxu0 0
      %4692 = vmatprep.subr.bf16.mxu0 0
      %4693 = vmatpush2.bf16.msra.mxu0 0
      %4694 = vmatprep.subr.bf16.mxu0 0
      %4695 = vmatpush2.bf16.msra.mxu0 0
      %4696 = vmatprep.subr.bf16.mxu0 0
      %4697 = vmatpush2.bf16.msra.mxu0 0
      %4698 = vmatprep.mubr.bf16.mxu0 0
      %4699 = vmatmul.mubr.bf16.gmra.mxu0 %v3747
      %v4700 = vpop.f32.mrf.mxu0
      %v4701 = vadd.f32 %v3791, %v4700
      %v4702 = vpop.f32.mrf.mxu0
      %v4703 = vpop.f32.mrf.mxu0
      %v4704 = vadd.f32 %v3791, %v4703
      %v4705 = vpop.f32.mrf.mxu0
      %4706 = vmatprep.mubr.bf16.mxu0 0
      %4707 = vmatmul.mubr.bf16.gmra.mxu0 %v3748
      %v4708 = vpop.f32.mrf.mxu0
      %v4709 = vadd.f32 %v3791, %v4708
      %v4710 = vpop.f32.mrf.mxu0
      %v4711 = vpop.f32.mrf.mxu0
      %v4712 = vadd.f32 %v3791, %v4711
      %v4713 = vpop.f32.mrf.mxu0
      %4714 = vmatprep.mubr.bf16.mxu0 0
      %4715 = vmatmul.mubr.bf16.gmra.mxu0 %v3749
      %v4716 = vpop.f32.mrf.mxu0
      %v4717 = vadd.f32 %v3791, %v4716
      %v4718 = vpop.f32.mrf.mxu0
      %v4719 = vpop.f32.mrf.mxu0
      %v4720 = vadd.f32 %v3791, %v4719
      %v4721 = vpop.f32.mrf.mxu0
      %4722 = vmatprep.mubr.bf16.mxu0 0
      %4723 = vmatmul.mubr.bf16.gmra.mxu0 %v3750
      %v4724 = vpop.f32.mrf.mxu0
      %v4725 = vadd.f32 %v3791, %v4724
      %v4726 = vpop.f32.mrf.mxu0
      %v4727 = vpop.f32.mrf.mxu0
      %v4728 = vadd.f32 %v3791, %v4727
      %v4729 = vpop.f32.mrf.mxu0
      %4730 = vmatprep.mubr.bf16.mxu0 0
      %4731 = vmatmul.mubr.bf16.gmra.mxu0 %v3751
      %v4732 = vpop.f32.mrf.mxu0
      %v4733 = vadd.f32 %v3791, %v4732
      %v4734 = vpop.f32.mrf.mxu0
      %v4735 = vpop.f32.mrf.mxu0
      %v4736 = vadd.f32 %v3791, %v4735
      %v4737 = vpop.f32.mrf.mxu0
      %4738 = vmatprep.mubr.bf16.mxu0 0
      %4739 = vmatmul.mubr.bf16.gmra.mxu0 %v3752
      %v4740 = vpop.f32.mrf.mxu0
      %v4741 = vadd.f32 %v3791, %v4740
      %v4742 = vpop.f32.mrf.mxu0
      %v4743 = vpop.f32.mrf.mxu0
      %v4744 = vadd.f32 %v3791, %v4743
      %v4745 = vpop.f32.mrf.mxu0
      %4746 = vmatprep.mubr.bf16.mxu0 0
      %4747 = vmatmul.mubr.bf16.gmra.mxu0 %v3753
      %v4748 = vpop.f32.mrf.mxu0
      %v4749 = vadd.f32 %v3791, %v4748
      %v4750 = vpop.f32.mrf.mxu0
      %v4751 = vpop.f32.mrf.mxu0
      %v4752 = vadd.f32 %v3791, %v4751
      %v4753 = vpop.f32.mrf.mxu0
      %4754 = vmatprep.mubr.bf16.mxu0 0
      %4755 = vmatmul.mubr.bf16.gmra.mxu0 %v3754
      %v4756 = vpop.f32.mrf.mxu0
      %v4757 = vadd.f32 %v3791, %v4756
      %v4758 = vpop.f32.mrf.mxu0
      %v4759 = vpop.f32.mrf.mxu0
      %v4760 = vadd.f32 %v3791, %v4759
      %v4761 = vpop.f32.mrf.mxu0
      %4762 = vmatprep.mubr.bf16.mxu0 0
      %4763 = vmatmul.mubr.bf16.gmra.mxu0 %v3755
      %v4764 = vpop.f32.mrf.mxu0
      %v4765 = vadd.f32 %v3791, %v4764
      %v4766 = vpop.f32.mrf.mxu0
      %v4767 = vpop.f32.mrf.mxu0
      %v4768 = vadd.f32 %v3791, %v4767
      %v4769 = vpop.f32.mrf.mxu0
      %4770 = vmatprep.mubr.bf16.mxu0 0
      %4771 = vmatmul.mubr.bf16.gmra.mxu0 %v3756
      %v4772 = vpop.f32.mrf.mxu0
      %v4773 = vadd.f32 %v3791, %v4772
      %v4774 = vpop.f32.mrf.mxu0
      %v4775 = vpop.f32.mrf.mxu0
      %v4776 = vadd.f32 %v3791, %v4775
      %v4777 = vpop.f32.mrf.mxu0
      %4778 = vmatprep.mubr.bf16.mxu0 0
      %4779 = vmatmul.mubr.bf16.gmra.mxu0 %v3757
      %v4780 = vpop.f32.mrf.mxu0
      %v4781 = vadd.f32 %v3791, %v4780
      %v4782 = vpop.f32.mrf.mxu0
      %v4783 = vpop.f32.mrf.mxu0
      %v4784 = vadd.f32 %v3791, %v4783
      %v4785 = vpop.f32.mrf.mxu0
      %4786 = vmatprep.mubr.bf16.mxu0 0
      %4787 = vmatmul.mubr.bf16.gmra.mxu0 %v3758
      %v4788 = vpop.f32.mrf.mxu0
      %v4789 = vadd.f32 %v3791, %v4788
      %v4790 = vpop.f32.mrf.mxu0
      %v4791 = vpop.f32.mrf.mxu0
      %v4792 = vadd.f32 %v3791, %v4791
      %v4793 = vpop.f32.mrf.mxu0
      %4794 = vmatprep.mubr.bf16.mxu0 0
      %4795 = vmatmul.mubr.bf16.gmra.mxu0 %v3759
      %v4796 = vpop.f32.mrf.mxu0
      %v4797 = vadd.f32 %v3791, %v4796
      %v4798 = vpop.f32.mrf.mxu0
      %v4799 = vpop.f32.mrf.mxu0
      %v4800 = vadd.f32 %v3791, %v4799
      %v4801 = vpop.f32.mrf.mxu0
      %4802 = vmatprep.mubr.bf16.mxu0 0
      %4803 = vmatmul.mubr.bf16.gmra.mxu0 %v3760
      %v4804 = vpop.f32.mrf.mxu0
      %v4805 = vadd.f32 %v3791, %v4804
      %v4806 = vpop.f32.mrf.mxu0
      %v4807 = vpop.f32.mrf.mxu0
      %v4808 = vadd.f32 %v3791, %v4807
      %v4809 = vpop.f32.mrf.mxu0
      %4810 = vmatprep.mubr.bf16.mxu0 0
      %4811 = vmatmul.mubr.bf16.gmra.mxu0 %v3761
      %v4812 = vpop.f32.mrf.mxu0
      %v4813 = vadd.f32 %v3791, %v4812
      %v4814 = vpop.f32.mrf.mxu0
      %v4815 = vpop.f32.mrf.mxu0
      %v4816 = vadd.f32 %v3791, %v4815
      %v4817 = vpop.f32.mrf.mxu0
      %4818 = vmatprep.mubr.bf16.mxu0 0
      %4819 = vmatmul.mubr.bf16.gmra.mxu0 %v3762
      %v4820 = vpop.f32.mrf.mxu0
      %v4821 = vadd.f32 %v3791, %v4820
      %v4822 = vpop.f32.mrf.mxu0
      %v4823 = vpop.f32.mrf.mxu0
      %v4824 = vadd.f32 %v3791, %v4823
      %v4825 = vpop.f32.mrf.mxu0
      %4826 = vdwg.mxu0
      %v4827 = vxor.u32 %v4122, 2147483648
      %v4828 = vxor.u32 %v4124, 2147483648
      %v4829 = vxor.u32 %v4315, 2147483648
      %v4830 = vxor.u32 %v4317, 2147483648
      %v4831 = vxor.u32 %v4508, 2147483648
      %v4832 = vxor.u32 %v4510, 2147483648
      %v4833 = vxor.u32 %v4701, 2147483648
      %v4834 = vxor.u32 %v4126, 2147483648
      %v4835 = vxor.u32 %v4128, 2147483648
      %v4836 = vxor.u32 %v4319, 2147483648
      %v4837 = vxor.u32 %v4321, 2147483648
      %v4838 = vxor.u32 %v4512, 2147483648
      %v4839 = vxor.u32 %v4514, 2147483648
      %v4840 = vxor.u32 %v4704, 2147483648
      %v4841 = vxor.u32 %v4132, 2147483648
      %v4842 = vxor.u32 %v4134, 2147483648
      %v4843 = vxor.u32 %v4325, 2147483648
      %v4844 = vxor.u32 %v4327, 2147483648
      %v4845 = vxor.u32 %v4518, 2147483648
      %v4846 = vxor.u32 %v4520, 2147483648
      %v4847 = vxor.u32 %v4709, 2147483648
      %v4848 = vxor.u32 %v4136, 2147483648
      %v4849 = vxor.u32 %v4138, 2147483648
      %v4850 = vxor.u32 %v4329, 2147483648
      %v4851 = vxor.u32 %v4331, 2147483648
      %v4852 = vxor.u32 %v4522, 2147483648
      %v4853 = vxor.u32 %v4524, 2147483648
      %v4854 = vxor.u32 %v4712, 2147483648
      %v4855 = vxor.u32 %v4142, 2147483648
      %v4856 = vxor.u32 %v4144, 2147483648
      %v4857 = vxor.u32 %v4335, 2147483648
      %v4858 = vxor.u32 %v4337, 2147483648
      %v4859 = vxor.u32 %v4528, 2147483648
      %v4860 = vxor.u32 %v4530, 2147483648
      %v4861 = vxor.u32 %v4717, 2147483648
      %v4862 = vxor.u32 %v4146, 2147483648
      %v4863 = vxor.u32 %v4148, 2147483648
      %v4864 = vxor.u32 %v4339, 2147483648
      %v4865 = vxor.u32 %v4341, 2147483648
      %v4866 = vxor.u32 %v4532, 2147483648
      %v4867 = vxor.u32 %v4534, 2147483648
      %v4868 = vxor.u32 %v4720, 2147483648
      %v4869 = vxor.u32 %v4152, 2147483648
      %v4870 = vxor.u32 %v4154, 2147483648
      %v4871 = vxor.u32 %v4345, 2147483648
      %v4872 = vxor.u32 %v4347, 2147483648
      %v4873 = vxor.u32 %v4538, 2147483648
      %v4874 = vxor.u32 %v4540, 2147483648
      %v4875 = vxor.u32 %v4725, 2147483648
      %v4876 = vxor.u32 %v4156, 2147483648
      %v4877 = vxor.u32 %v4158, 2147483648
      %v4878 = vxor.u32 %v4349, 2147483648
      %v4879 = vxor.u32 %v4351, 2147483648
      %v4880 = vxor.u32 %v4542, 2147483648
      %v4881 = vxor.u32 %v4544, 2147483648
      %v4882 = vxor.u32 %v4728, 2147483648
      %v4883 = vxor.u32 %v4162, 2147483648
      %v4884 = vxor.u32 %v4164, 2147483648
      %v4885 = vxor.u32 %v4355, 2147483648
      %v4886 = vxor.u32 %v4357, 2147483648
      %v4887 = vxor.u32 %v4548, 2147483648
      %v4888 = vxor.u32 %v4550, 2147483648
      %v4889 = vxor.u32 %v4733, 2147483648
      %v4890 = vxor.u32 %v4166, 2147483648
      %v4891 = vxor.u32 %v4168, 2147483648
      %v4892 = vxor.u32 %v4359, 2147483648
      %v4893 = vxor.u32 %v4361, 2147483648
      %v4894 = vxor.u32 %v4552, 2147483648
      %v4895 = vxor.u32 %v4554, 2147483648
      %v4896 = vxor.u32 %v4736, 2147483648
      %v4897 = vxor.u32 %v4172, 2147483648
      %v4898 = vxor.u32 %v4174, 2147483648
      %v4899 = vxor.u32 %v4365, 2147483648
      %v4900 = vxor.u32 %v4367, 2147483648
      %v4901 = vxor.u32 %v4558, 2147483648
      %v4902 = vxor.u32 %v4560, 2147483648
      %v4903 = vxor.u32 %v4741, 2147483648
      %v4904 = vxor.u32 %v4176, 2147483648
      %v4905 = vxor.u32 %v4178, 2147483648
      %v4906 = vxor.u32 %v4369, 2147483648
      %v4907 = vxor.u32 %v4371, 2147483648
      %v4908 = vxor.u32 %v4562, 2147483648
      %v4909 = vxor.u32 %v4564, 2147483648
      %v4910 = vxor.u32 %v4744, 2147483648
      %v4911 = vxor.u32 %v4182, 2147483648
      %v4912 = vxor.u32 %v4184, 2147483648
      %v4913 = vxor.u32 %v4375, 2147483648
      %v4914 = vxor.u32 %v4377, 2147483648
      %v4915 = vxor.u32 %v4568, 2147483648
      %v4916 = vxor.u32 %v4570, 2147483648
      %v4917 = vxor.u32 %v4749, 2147483648
      %v4918 = vxor.u32 %v4186, 2147483648
      %v4919 = vxor.u32 %v4188, 2147483648
      %v4920 = vxor.u32 %v4379, 2147483648
      %v4921 = vxor.u32 %v4381, 2147483648
      %v4922 = vxor.u32 %v4572, 2147483648
      %v4923 = vxor.u32 %v4574, 2147483648
      %v4924 = vxor.u32 %v4752, 2147483648
      %v4925 = vxor.u32 %v4192, 2147483648
      %v4926 = vxor.u32 %v4194, 2147483648
      %v4927 = vxor.u32 %v4385, 2147483648
      %v4928 = vxor.u32 %v4387, 2147483648
      %v4929 = vxor.u32 %v4578, 2147483648
      %v4930 = vxor.u32 %v4580, 2147483648
      %v4931 = vxor.u32 %v4757, 2147483648
      %v4932 = vxor.u32 %v4196, 2147483648
      %v4933 = vxor.u32 %v4198, 2147483648
      %v4934 = vxor.u32 %v4389, 2147483648
      %v4935 = vxor.u32 %v4391, 2147483648
      %v4936 = vxor.u32 %v4582, 2147483648
      %v4937 = vxor.u32 %v4584, 2147483648
      %v4938 = vxor.u32 %v4760, 2147483648
      %v4939 = vxor.u32 %v4202, 2147483648
      %v4940 = vxor.u32 %v4204, 2147483648
      %v4941 = vxor.u32 %v4395, 2147483648
      %v4942 = vxor.u32 %v4397, 2147483648
      %v4943 = vxor.u32 %v4588, 2147483648
      %v4944 = vxor.u32 %v4590, 2147483648
      %v4945 = vxor.u32 %v4765, 2147483648
      %v4946 = vxor.u32 %v4206, 2147483648
      %v4947 = vxor.u32 %v4208, 2147483648
      %v4948 = vxor.u32 %v4399, 2147483648
      %v4949 = vxor.u32 %v4401, 2147483648
      %v4950 = vxor.u32 %v4592, 2147483648
      %v4951 = vxor.u32 %v4594, 2147483648
      %v4952 = vxor.u32 %v4768, 2147483648
      %v4953 = vxor.u32 %v4212, 2147483648
      %v4954 = vxor.u32 %v4214, 2147483648
      %v4955 = vxor.u32 %v4405, 2147483648
      %v4956 = vxor.u32 %v4407, 2147483648
      %v4957 = vxor.u32 %v4598, 2147483648
      %v4958 = vxor.u32 %v4600, 2147483648
      %v4959 = vxor.u32 %v4773, 2147483648
      %v4960 = vxor.u32 %v4216, 2147483648
      %v4961 = vxor.u32 %v4218, 2147483648
      %v4962 = vxor.u32 %v4409, 2147483648
      %v4963 = vxor.u32 %v4411, 2147483648
      %v4964 = vxor.u32 %v4602, 2147483648
      %v4965 = vxor.u32 %v4604, 2147483648
      %v4966 = vxor.u32 %v4776, 2147483648
      %v4967 = vxor.u32 %v4222, 2147483648
      %v4968 = vxor.u32 %v4224, 2147483648
      %v4969 = vxor.u32 %v4415, 2147483648
      %v4970 = vxor.u32 %v4417, 2147483648
      %v4971 = vxor.u32 %v4608, 2147483648
      %v4972 = vxor.u32 %v4610, 2147483648
      %v4973 = vxor.u32 %v4781, 2147483648
      %v4974 = vxor.u32 %v4226, 2147483648
      %v4975 = vxor.u32 %v4228, 2147483648
      %v4976 = vxor.u32 %v4419, 2147483648
      %v4977 = vxor.u32 %v4421, 2147483648
      %v4978 = vxor.u32 %v4612, 2147483648
      %v4979 = vxor.u32 %v4614, 2147483648
      %v4980 = vxor.u32 %v4784, 2147483648
      %v4981 = vxor.u32 %v4232, 2147483648
      %v4982 = vxor.u32 %v4234, 2147483648
      %v4983 = vxor.u32 %v4425, 2147483648
      %v4984 = vxor.u32 %v4427, 2147483648
      %v4985 = vxor.u32 %v4618, 2147483648
      %v4986 = vxor.u32 %v4620, 2147483648
      %v4987 = vxor.u32 %v4789, 2147483648
      %v4988 = vxor.u32 %v4236, 2147483648
      %v4989 = vxor.u32 %v4238, 2147483648
      %v4990 = vxor.u32 %v4429, 2147483648
      %v4991 = vxor.u32 %v4431, 2147483648
      %v4992 = vxor.u32 %v4622, 2147483648
      %v4993 = vxor.u32 %v4624, 2147483648
      %v4994 = vxor.u32 %v4792, 2147483648
      %v4995 = vxor.u32 %v4242, 2147483648
      %v4996 = vxor.u32 %v4244, 2147483648
      %v4997 = vxor.u32 %v4435, 2147483648
      %v4998 = vxor.u32 %v4437, 2147483648
      %v4999 = vxor.u32 %v4628, 2147483648
      %v5000 = vxor.u32 %v4630, 2147483648
      %v5001 = vxor.u32 %v4797, 2147483648
      %v5002 = vxor.u32 %v4246, 2147483648
      %v5003 = vxor.u32 %v4248, 2147483648
      %v5004 = vxor.u32 %v4439, 2147483648
      %v5005 = vxor.u32 %v4441, 2147483648
      %v5006 = vxor.u32 %v4632, 2147483648
      %v5007 = vxor.u32 %v4634, 2147483648
      %v5008 = vxor.u32 %v4800, 2147483648
      %v5009 = vxor.u32 %v4252, 2147483648
      %v5010 = vxor.u32 %v4254, 2147483648
      %v5011 = vxor.u32 %v4445, 2147483648
      %v5012 = vxor.u32 %v4447, 2147483648
      %v5013 = vxor.u32 %v4638, 2147483648
      %v5014 = vxor.u32 %v4640, 2147483648
      %v5015 = vxor.u32 %v4805, 2147483648
      %v5016 = vxor.u32 %v4256, 2147483648
      %v5017 = vxor.u32 %v4258, 2147483648
      %v5018 = vxor.u32 %v4449, 2147483648
      %v5019 = vxor.u32 %v4451, 2147483648
      %v5020 = vxor.u32 %v4642, 2147483648
      %v5021 = vxor.u32 %v4644, 2147483648
      %v5022 = vxor.u32 %v4808, 2147483648
      %v5023 = vxor.u32 %v4262, 2147483648
      %v5024 = vxor.u32 %v4264, 2147483648
      %v5025 = vxor.u32 %v4455, 2147483648
      %v5026 = vxor.u32 %v4457, 2147483648
      %v5027 = vxor.u32 %v4648, 2147483648
      %v5028 = vxor.u32 %v4650, 2147483648
      %v5029 = vxor.u32 %v4813, 2147483648
      %v5030 = vxor.u32 %v4266, 2147483648
      %v5031 = vxor.u32 %v4268, 2147483648
      %v5032 = vxor.u32 %v4459, 2147483648
      %v5033 = vxor.u32 %v4461, 2147483648
      %v5034 = vxor.u32 %v4652, 2147483648
      %v5035 = vxor.u32 %v4654, 2147483648
      %v5036 = vxor.u32 %v4816, 2147483648
      %v5037 = vxor.u32 %v4272, 2147483648
      %v5038 = vxor.u32 %v4274, 2147483648
      %v5039 = vxor.u32 %v4465, 2147483648
      %v5040 = vxor.u32 %v4467, 2147483648
      %v5041 = vxor.u32 %v4658, 2147483648
      %v5042 = vxor.u32 %v4660, 2147483648
      %v5043 = vxor.u32 %v4821, 2147483648
      %v5044 = vxor.u32 %v4276, 2147483648
      %v5045 = vxor.u32 %v4278, 2147483648
      %v5046 = vxor.u32 %v4469, 2147483648
      %v5047 = vxor.u32 %v4471, 2147483648
      %v5048 = vxor.u32 %v4662, 2147483648
      %v5049 = vxor.u32 %v4664, 2147483648
      %v5050 = vxor.u32 %v4824, 2147483648
      %v5051 = vmul.f32 %v4827, 1.442695
      %v5052 = vpow.pop %v5051
      %v5053 = vmul.f32 %v4828, 1.442695
      %v5054 = vpow.pop %v5053
      %v5055 = vmul.f32 %v4829, 1.442695
      %v5056 = vpow.pop %v5055
      %v5057 = vmul.f32 %v4830, 1.442695
      %v5058 = vpow.pop %v5057
      %v5059 = vmul.f32 %v4831, 1.442695
      %v5060 = vpow.pop %v5059
      %v5061 = vmul.f32 %v4832, 1.442695
      %v5062 = vpow.pop %v5061
      %v5063 = vmul.f32 %v4833, 1.442695
      %v5064 = vpow.pop %v5063
      %v5065 = vmul.f32 %v4834, 1.442695
      %v5066 = vpow.pop %v5065
      %v5067 = vmul.f32 %v4835, 1.442695
      %v5068 = vpow.pop %v5067
      %v5069 = vmul.f32 %v4836, 1.442695
      %v5070 = vpow.pop %v5069
      %v5071 = vmul.f32 %v4837, 1.442695
      %v5072 = vpow.pop %v5071
      %v5073 = vmul.f32 %v4838, 1.442695
      %v5074 = vpow.pop %v5073
      %v5075 = vmul.f32 %v4839, 1.442695
      %v5076 = vpow.pop %v5075
      %v5077 = vmul.f32 %v4840, 1.442695
      %v5078 = vpow.pop %v5077
      %v5079 = vmul.f32 %v4841, 1.442695
      %v5080 = vpow.pop %v5079
      %v5081 = vmul.f32 %v4842, 1.442695
      %v5082 = vpow.pop %v5081
      %v5083 = vmul.f32 %v4843, 1.442695
      %v5084 = vpow.pop %v5083
      %v5085 = vmul.f32 %v4844, 1.442695
      %v5086 = vpow.pop %v5085
      %v5087 = vmul.f32 %v4845, 1.442695
      %v5088 = vpow.pop %v5087
      %v5089 = vmul.f32 %v4846, 1.442695
      %v5090 = vpow.pop %v5089
      %v5091 = vmul.f32 %v4847, 1.442695
      %v5092 = vpow.pop %v5091
      %v5093 = vmul.f32 %v4848, 1.442695
      %v5094 = vpow.pop %v5093
      %v5095 = vmul.f32 %v4849, 1.442695
      %v5096 = vpow.pop %v5095
      %v5097 = vmul.f32 %v4850, 1.442695
      %v5098 = vpow.pop %v5097
      %v5099 = vmul.f32 %v4851, 1.442695
      %v5100 = vpow.pop %v5099
      %v5101 = vmul.f32 %v4852, 1.442695
      %v5102 = vpow.pop %v5101
      %v5103 = vmul.f32 %v4853, 1.442695
      %v5104 = vpow.pop %v5103
      %v5105 = vmul.f32 %v4854, 1.442695
      %v5106 = vpow.pop %v5105
      %v5107 = vmul.f32 %v4855, 1.442695
      %v5108 = vpow.pop %v5107
      %v5109 = vmul.f32 %v4856, 1.442695
      %v5110 = vpow.pop %v5109
      %v5111 = vmul.f32 %v4857, 1.442695
      %v5112 = vpow.pop %v5111
      %v5113 = vmul.f32 %v4858, 1.442695
      %v5114 = vpow.pop %v5113
      %v5115 = vmul.f32 %v4859, 1.442695
      %v5116 = vpow.pop %v5115
      %v5117 = vmul.f32 %v4860, 1.442695
      %v5118 = vpow.pop %v5117
      %v5119 = vmul.f32 %v4861, 1.442695
      %v5120 = vpow.pop %v5119
      %v5121 = vmul.f32 %v4862, 1.442695
      %v5122 = vpow.pop %v5121
      %v5123 = vmul.f32 %v4863, 1.442695
      %v5124 = vpow.pop %v5123
      %v5125 = vmul.f32 %v4864, 1.442695
      %v5126 = vpow.pop %v5125
      %v5127 = vmul.f32 %v4865, 1.442695
      %v5128 = vpow.pop %v5127
      %v5129 = vmul.f32 %v4866, 1.442695
      %v5130 = vpow.pop %v5129
      %v5131 = vmul.f32 %v4867, 1.442695
      %v5132 = vpow.pop %v5131
      %v5133 = vmul.f32 %v4868, 1.442695
      %v5134 = vpow.pop %v5133
      %v5135 = vmul.f32 %v4869, 1.442695
      %v5136 = vpow.pop %v5135
      %v5137 = vmul.f32 %v4870, 1.442695
      %v5138 = vpow.pop %v5137
      %v5139 = vmul.f32 %v4871, 1.442695
      %v5140 = vpow.pop %v5139
      %v5141 = vmul.f32 %v4872, 1.442695
      %v5142 = vpow.pop %v5141
      %v5143 = vmul.f32 %v4873, 1.442695
      %v5144 = vpow.pop %v5143
      %v5145 = vmul.f32 %v4874, 1.442695
      %v5146 = vpow.pop %v5145
      %v5147 = vmul.f32 %v4875, 1.442695
      %v5148 = vpow.pop %v5147
      %v5149 = vmul.f32 %v4876, 1.442695
      %v5150 = vpow.pop %v5149
      %v5151 = vmul.f32 %v4877, 1.442695
      %v5152 = vpow.pop %v5151
      %v5153 = vmul.f32 %v4878, 1.442695
      %v5154 = vpow.pop %v5153
      %v5155 = vmul.f32 %v4879, 1.442695
      %v5156 = vpow.pop %v5155
      %v5157 = vmul.f32 %v4880, 1.442695
      %v5158 = vpow.pop %v5157
      %v5159 = vmul.f32 %v4881, 1.442695
      %v5160 = vpow.pop %v5159
      %v5161 = vmul.f32 %v4882, 1.442695
      %v5162 = vpow.pop %v5161
      %v5163 = vmul.f32 %v4883, 1.442695
      %v5164 = vpow.pop %v5163
      %v5165 = vmul.f32 %v4884, 1.442695
      %v5166 = vpow.pop %v5165
      %v5167 = vmul.f32 %v4885, 1.442695
      %v5168 = vpow.pop %v5167
      %v5169 = vmul.f32 %v4886, 1.442695
      %v5170 = vpow.pop %v5169
      %v5171 = vmul.f32 %v4887, 1.442695
      %v5172 = vpow.pop %v5171
      %v5173 = vmul.f32 %v4888, 1.442695
      %v5174 = vpow.pop %v5173
      %v5175 = vmul.f32 %v4889, 1.442695
      %v5176 = vpow.pop %v5175
      %v5177 = vmul.f32 %v4890, 1.442695
      %v5178 = vpow.pop %v5177
      %v5179 = vmul.f32 %v4891, 1.442695
      %v5180 = vpow.pop %v5179
      %v5181 = vmul.f32 %v4892, 1.442695
      %v5182 = vpow.pop %v5181
      %v5183 = vmul.f32 %v4893, 1.442695
      %v5184 = vpow.pop %v5183
      %v5185 = vmul.f32 %v4894, 1.442695
      %v5186 = vpow.pop %v5185
      %v5187 = vmul.f32 %v4895, 1.442695
      %v5188 = vpow.pop %v5187
      %v5189 = vmul.f32 %v4896, 1.442695
      %v5190 = vpow.pop %v5189
      %v5191 = vmul.f32 %v4897, 1.442695
      %v5192 = vpow.pop %v5191
      %v5193 = vmul.f32 %v4898, 1.442695
      %v5194 = vpow.pop %v5193
      %v5195 = vmul.f32 %v4899, 1.442695
      %v5196 = vpow.pop %v5195
      %v5197 = vmul.f32 %v4900, 1.442695
      %v5198 = vpow.pop %v5197
      %v5199 = vmul.f32 %v4901, 1.442695
      %v5200 = vpow.pop %v5199
      %v5201 = vmul.f32 %v4902, 1.442695
      %v5202 = vpow.pop %v5201
      %v5203 = vmul.f32 %v4903, 1.442695
      %v5204 = vpow.pop %v5203
      %v5205 = vmul.f32 %v4904, 1.442695
      %v5206 = vpow.pop %v5205
      %v5207 = vmul.f32 %v4905, 1.442695
      %v5208 = vpow.pop %v5207
      %v5209 = vmul.f32 %v4906, 1.442695
      %v5210 = vpow.pop %v5209
      %v5211 = vmul.f32 %v4907, 1.442695
      %v5212 = vpow.pop %v5211
      %v5213 = vmul.f32 %v4908, 1.442695
      %v5214 = vpow.pop %v5213
      %v5215 = vmul.f32 %v4909, 1.442695
      %v5216 = vpow.pop %v5215
      %v5217 = vmul.f32 %v4910, 1.442695
      %v5218 = vpow.pop %v5217
      %v5219 = vmul.f32 %v4911, 1.442695
      %v5220 = vpow.pop %v5219
      %v5221 = vmul.f32 %v4912, 1.442695
      %v5222 = vpow.pop %v5221
      %v5223 = vmul.f32 %v4913, 1.442695
      %v5224 = vpow.pop %v5223
      %v5225 = vmul.f32 %v4914, 1.442695
      %v5226 = vpow.pop %v5225
      %v5227 = vmul.f32 %v4915, 1.442695
      %v5228 = vpow.pop %v5227
      %v5229 = vmul.f32 %v4916, 1.442695
      %v5230 = vpow.pop %v5229
      %v5231 = vmul.f32 %v4917, 1.442695
      %v5232 = vpow.pop %v5231
      %v5233 = vmul.f32 %v4918, 1.442695
      %v5234 = vpow.pop %v5233
      %v5235 = vmul.f32 %v4919, 1.442695
      %v5236 = vpow.pop %v5235
      %v5237 = vmul.f32 %v4920, 1.442695
      %v5238 = vpow.pop %v5237
      %v5239 = vmul.f32 %v4921, 1.442695
      %v5240 = vpow.pop %v5239
      %v5241 = vmul.f32 %v4922, 1.442695
      %v5242 = vpow.pop %v5241
      %v5243 = vmul.f32 %v4923, 1.442695
      %v5244 = vpow.pop %v5243
      %v5245 = vmul.f32 %v4924, 1.442695
      %v5246 = vpow.pop %v5245
      %v5247 = vmul.f32 %v4925, 1.442695
      %v5248 = vpow.pop %v5247
      %v5249 = vmul.f32 %v4926, 1.442695
      %v5250 = vpow.pop %v5249
      %v5251 = vmul.f32 %v4927, 1.442695
      %v5252 = vpow.pop %v5251
      %v5253 = vmul.f32 %v4928, 1.442695
      %v5254 = vpow.pop %v5253
      %v5255 = vmul.f32 %v4929, 1.442695
      %v5256 = vpow.pop %v5255
      %v5257 = vmul.f32 %v4930, 1.442695
      %v5258 = vpow.pop %v5257
      %v5259 = vmul.f32 %v4931, 1.442695
      %v5260 = vpow.pop %v5259
      %v5261 = vmul.f32 %v4932, 1.442695
      %v5262 = vpow.pop %v5261
      %v5263 = vmul.f32 %v4933, 1.442695
      %v5264 = vpow.pop %v5263
      %v5265 = vmul.f32 %v4934, 1.442695
      %v5266 = vpow.pop %v5265
      %v5267 = vmul.f32 %v4935, 1.442695
      %v5268 = vpow.pop %v5267
      %v5269 = vmul.f32 %v4936, 1.442695
      %v5270 = vpow.pop %v5269
      %v5271 = vmul.f32 %v4937, 1.442695
      %v5272 = vpow.pop %v5271
      %v5273 = vmul.f32 %v4938, 1.442695
      %v5274 = vpow.pop %v5273
      %v5275 = vmul.f32 %v4939, 1.442695
      %v5276 = vpow.pop %v5275
      %v5277 = vmul.f32 %v4940, 1.442695
      %v5278 = vpow.pop %v5277
      %v5279 = vmul.f32 %v4941, 1.442695
      %v5280 = vpow.pop %v5279
      %v5281 = vmul.f32 %v4942, 1.442695
      %v5282 = vpow.pop %v5281
      %v5283 = vmul.f32 %v4943, 1.442695
      %v5284 = vpow.pop %v5283
      %v5285 = vmul.f32 %v4944, 1.442695
      %v5286 = vpow.pop %v5285
      %v5287 = vmul.f32 %v4945, 1.442695
      %v5288 = vpow.pop %v5287
      %v5289 = vmul.f32 %v4946, 1.442695
      %v5290 = vpow.pop %v5289
      %v5291 = vmul.f32 %v4947, 1.442695
      %v5292 = vpow.pop %v5291
      %v5293 = vmul.f32 %v4948, 1.442695
      %v5294 = vpow.pop %v5293
      %v5295 = vmul.f32 %v4949, 1.442695
      %v5296 = vpow.pop %v5295
      %v5297 = vmul.f32 %v4950, 1.442695
      %v5298 = vpow.pop %v5297
      %v5299 = vmul.f32 %v4951, 1.442695
      %v5300 = vpow.pop %v5299
      %v5301 = vmul.f32 %v4952, 1.442695
      %v5302 = vpow.pop %v5301
      %v5303 = vmul.f32 %v4953, 1.442695
      %v5304 = vpow.pop %v5303
      %v5305 = vmul.f32 %v4954, 1.442695
      %v5306 = vpow.pop %v5305
      %v5307 = vmul.f32 %v4955, 1.442695
      %v5308 = vpow.pop %v5307
      %v5309 = vmul.f32 %v4956, 1.442695
      %v5310 = vpow.pop %v5309
      %v5311 = vmul.f32 %v4957, 1.442695
      %v5312 = vpow.pop %v5311
      %v5313 = vmul.f32 %v4958, 1.442695
      %v5314 = vpow.pop %v5313
      %v5315 = vmul.f32 %v4959, 1.442695
      %v5316 = vpow.pop %v5315
      %v5317 = vmul.f32 %v4960, 1.442695
      %v5318 = vpow.pop %v5317
      %v5319 = vmul.f32 %v4961, 1.442695
      %v5320 = vpow.pop %v5319
      %v5321 = vmul.f32 %v4962, 1.442695
      %v5322 = vpow.pop %v5321
      %v5323 = vmul.f32 %v4963, 1.442695
      %v5324 = vpow.pop %v5323
      %v5325 = vmul.f32 %v4964, 1.442695
      %v5326 = vpow.pop %v5325
      %v5327 = vmul.f32 %v4965, 1.442695
      %v5328 = vpow.pop %v5327
      %v5329 = vmul.f32 %v4966, 1.442695
      %v5330 = vpow.pop %v5329
      %v5331 = vmul.f32 %v4967, 1.442695
      %v5332 = vpow.pop %v5331
      %v5333 = vmul.f32 %v4968, 1.442695
      %v5334 = vpow.pop %v5333
      %v5335 = vmul.f32 %v4969, 1.442695
      %v5336 = vpow.pop %v5335
      %v5337 = vmul.f32 %v4970, 1.442695
      %v5338 = vpow.pop %v5337
      %v5339 = vmul.f32 %v4971, 1.442695
      %v5340 = vpow.pop %v5339
      %v5341 = vmul.f32 %v4972, 1.442695
      %v5342 = vpow.pop %v5341
      %v5343 = vmul.f32 %v4973, 1.442695
      %v5344 = vpow.pop %v5343
      %v5345 = vmul.f32 %v4974, 1.442695
      %v5346 = vpow.pop %v5345
      %v5347 = vmul.f32 %v4975, 1.442695
      %v5348 = vpow.pop %v5347
      %v5349 = vmul.f32 %v4976, 1.442695
      %v5350 = vpow.pop %v5349
      %v5351 = vmul.f32 %v4977, 1.442695
      %v5352 = vpow.pop %v5351
      %v5353 = vmul.f32 %v4978, 1.442695
      %v5354 = vpow.pop %v5353
      %v5355 = vmul.f32 %v4979, 1.442695
      %v5356 = vpow.pop %v5355
      %v5357 = vmul.f32 %v4980, 1.442695
      %v5358 = vpow.pop %v5357
      %v5359 = vmul.f32 %v4981, 1.442695
      %v5360 = vpow.pop %v5359
      %v5361 = vmul.f32 %v4982, 1.442695
      %v5362 = vpow.pop %v5361
      %v5363 = vmul.f32 %v4983, 1.442695
      %v5364 = vpow.pop %v5363
      %v5365 = vmul.f32 %v4984, 1.442695
      %v5366 = vpow.pop %v5365
      %v5367 = vmul.f32 %v4985, 1.442695
      %v5368 = vpow.pop %v5367
      %v5369 = vmul.f32 %v4986, 1.442695
      %v5370 = vpow.pop %v5369
      %v5371 = vmul.f32 %v4987, 1.442695
      %v5372 = vpow.pop %v5371
      %v5373 = vmul.f32 %v4988, 1.442695
      %v5374 = vpow.pop %v5373
      %v5375 = vmul.f32 %v4989, 1.442695
      %v5376 = vpow.pop %v5375
      %v5377 = vmul.f32 %v4990, 1.442695
      %v5378 = vpow.pop %v5377
      %v5379 = vmul.f32 %v4991, 1.442695
      %v5380 = vpow.pop %v5379
      %v5381 = vmul.f32 %v4992, 1.442695
      %v5382 = vpow.pop %v5381
      %v5383 = vmul.f32 %v4993, 1.442695
      %v5384 = vpow.pop %v5383
      %v5385 = vmul.f32 %v4994, 1.442695
      %v5386 = vpow.pop %v5385
      %v5387 = vmul.f32 %v4995, 1.442695
      %v5388 = vpow.pop %v5387
      %v5389 = vmul.f32 %v4996, 1.442695
      %v5390 = vpow.pop %v5389
      %v5391 = vmul.f32 %v4997, 1.442695
      %v5392 = vpow.pop %v5391
      %v5393 = vmul.f32 %v4998, 1.442695
      %v5394 = vpow.pop %v5393
      %v5395 = vmul.f32 %v4999, 1.442695
      %v5396 = vpow.pop %v5395
      %v5397 = vmul.f32 %v5000, 1.442695
      %v5398 = vpow.pop %v5397
      %v5399 = vmul.f32 %v5001, 1.442695
      %v5400 = vpow.pop %v5399
      %v5401 = vmul.f32 %v5002, 1.442695
      %v5402 = vpow.pop %v5401
      %v5403 = vmul.f32 %v5003, 1.442695
      %v5404 = vpow.pop %v5403
      %v5405 = vmul.f32 %v5004, 1.442695
      %v5406 = vpow.pop %v5405
      %v5407 = vmul.f32 %v5005, 1.442695
      %v5408 = vpow.pop %v5407
      %v5409 = vmul.f32 %v5006, 1.442695
      %v5410 = vpow.pop %v5409
      %v5411 = vmul.f32 %v5007, 1.442695
      %v5412 = vpow.pop %v5411
      %v5413 = vmul.f32 %v5008, 1.442695
      %v5414 = vpow.pop %v5413
      %v5415 = vmul.f32 %v5009, 1.442695
      %v5416 = vpow.pop %v5415
      %v5417 = vmul.f32 %v5010, 1.442695
      %v5418 = vpow.pop %v5417
      %v5419 = vmul.f32 %v5011, 1.442695
      %v5420 = vpow.pop %v5419
      %v5421 = vmul.f32 %v5012, 1.442695
      %v5422 = vpow.pop %v5421
      %v5423 = vmul.f32 %v5013, 1.442695
      %v5424 = vpow.pop %v5423
      %v5425 = vmul.f32 %v5014, 1.442695
      %v5426 = vpow.pop %v5425
      %v5427 = vmul.f32 %v5015, 1.442695
      %v5428 = vpow.pop %v5427
      %v5429 = vmul.f32 %v5016, 1.442695
      %v5430 = vpow.pop %v5429
      %v5431 = vmul.f32 %v5017, 1.442695
      %v5432 = vpow.pop %v5431
      %v5433 = vmul.f32 %v5018, 1.442695
      %v5434 = vpow.pop %v5433
      %v5435 = vmul.f32 %v5019, 1.442695
      %v5436 = vpow.pop %v5435
      %v5437 = vmul.f32 %v5020, 1.442695
      %v5438 = vpow.pop %v5437
      %v5439 = vmul.f32 %v5021, 1.442695
      %v5440 = vpow.pop %v5439
      %v5441 = vmul.f32 %v5022, 1.442695
      %v5442 = vpow.pop %v5441
      %v5443 = vmul.f32 %v5023, 1.442695
      %v5444 = vpow.pop %v5443
      %v5445 = vmul.f32 %v5024, 1.442695
      %v5446 = vpow.pop %v5445
      %v5447 = vmul.f32 %v5025, 1.442695
      %v5448 = vpow.pop %v5447
      %v5449 = vmul.f32 %v5026, 1.442695
      %v5450 = vpow.pop %v5449
      %v5451 = vmul.f32 %v5027, 1.442695
      %v5452 = vpow.pop %v5451
      %v5453 = vmul.f32 %v5028, 1.442695
      %v5454 = vpow.pop %v5453
      %v5455 = vmul.f32 %v5029, 1.442695
      %v5456 = vpow.pop %v5455
      %v5457 = vmul.f32 %v5030, 1.442695
      %v5458 = vpow.pop %v5457
      %v5459 = vmul.f32 %v5031, 1.442695
      %v5460 = vpow.pop %v5459
      %v5461 = vmul.f32 %v5032, 1.442695
      %v5462 = vpow.pop %v5461
      %v5463 = vmul.f32 %v5033, 1.442695
      %v5464 = vpow.pop %v5463
      %v5465 = vmul.f32 %v5034, 1.442695
      %v5466 = vpow.pop %v5465
      %v5467 = vmul.f32 %v5035, 1.442695
      %v5468 = vpow.pop %v5467
      %v5469 = vmul.f32 %v5036, 1.442695
      %v5470 = vpow.pop %v5469
      %v5471 = vmul.f32 %v5037, 1.442695
      %v5472 = vpow.pop %v5471
      %v5473 = vmul.f32 %v5038, 1.442695
      %v5474 = vpow.pop %v5473
      %v5475 = vmul.f32 %v5039, 1.442695
      %v5476 = vpow.pop %v5475
      %v5477 = vmul.f32 %v5040, 1.442695
      %v5478 = vpow.pop %v5477
      %v5479 = vmul.f32 %v5041, 1.442695
      %v5480 = vpow.pop %v5479
      %v5481 = vmul.f32 %v5042, 1.442695
      %v5482 = vpow.pop %v5481
      %v5483 = vmul.f32 %v5043, 1.442695
      %v5484 = vpow.pop %v5483
      %v5485 = vmul.f32 %v5044, 1.442695
      %v5486 = vpow.pop %v5485
      %v5487 = vmul.f32 %v5045, 1.442695
      %v5488 = vpow.pop %v5487
      %v5489 = vmul.f32 %v5046, 1.442695
      %v5490 = vpow.pop %v5489
      %v5491 = vmul.f32 %v5047, 1.442695
      %v5492 = vpow.pop %v5491
      %v5493 = vmul.f32 %v5048, 1.442695
      %v5494 = vpow.pop %v5493
      %v5495 = vmul.f32 %v5049, 1.442695
      %v5496 = vpow.pop %v5495
      %v5497 = vmul.f32 %v5050, 1.442695
      %v5498 = vpow.pop %v5497
      %v5499 = vadd.f32 %v5052, 1.0
      %v5500 = vadd.f32 %v5054, 1.0
      %v5501 = vadd.f32 %v5056, 1.0
      %v5502 = vadd.f32 %v5058, 1.0
      %v5503 = vadd.f32 %v5060, 1.0
      %v5504 = vadd.f32 %v5062, 1.0
      %v5505 = vadd.f32 %v5064, 1.0
      %v5506 = vadd.f32 %v5066, 1.0
      %v5507 = vadd.f32 %v5068, 1.0
      %v5508 = vadd.f32 %v5070, 1.0
      %v5509 = vadd.f32 %v5072, 1.0
      %v5510 = vadd.f32 %v5074, 1.0
      %v5511 = vadd.f32 %v5076, 1.0
      %v5512 = vadd.f32 %v5078, 1.0
      %v5513 = vadd.f32 %v5080, 1.0
      %v5514 = vadd.f32 %v5082, 1.0
      %v5515 = vadd.f32 %v5084, 1.0
      %v5516 = vadd.f32 %v5086, 1.0
      %v5517 = vadd.f32 %v5088, 1.0
      %v5518 = vadd.f32 %v5090, 1.0
      %v5519 = vadd.f32 %v5092, 1.0
      %v5520 = vadd.f32 %v5094, 1.0
      %v5521 = vadd.f32 %v5096, 1.0
      %v5522 = vadd.f32 %v5098, 1.0
      %v5523 = vadd.f32 %v5100, 1.0
      %v5524 = vadd.f32 %v5102, 1.0
      %v5525 = vadd.f32 %v5104, 1.0
      %v5526 = vadd.f32 %v5106, 1.0
      %v5527 = vadd.f32 %v5108, 1.0
      %v5528 = vadd.f32 %v5110, 1.0
      %v5529 = vadd.f32 %v5112, 1.0
      %v5530 = vadd.f32 %v5114, 1.0
      %v5531 = vadd.f32 %v5116, 1.0
      %v5532 = vadd.f32 %v5118, 1.0
      %v5533 = vadd.f32 %v5120, 1.0
      %v5534 = vadd.f32 %v5122, 1.0
      %v5535 = vadd.f32 %v5124, 1.0
      %v5536 = vadd.f32 %v5126, 1.0
      %v5537 = vadd.f32 %v5128, 1.0
      %v5538 = vadd.f32 %v5130, 1.0
      %v5539 = vadd.f32 %v5132, 1.0
      %v5540 = vadd.f32 %v5134, 1.0
      %v5541 = vadd.f32 %v5136, 1.0
      %v5542 = vadd.f32 %v5138, 1.0
      %v5543 = vadd.f32 %v5140, 1.0
      %v5544 = vadd.f32 %v5142, 1.0
      %v5545 = vadd.f32 %v5144, 1.0
      %v5546 = vadd.f32 %v5146, 1.0
      %v5547 = vadd.f32 %v5148, 1.0
      %v5548 = vadd.f32 %v5150, 1.0
      %v5549 = vadd.f32 %v5152, 1.0
      %v5550 = vadd.f32 %v5154, 1.0
      %v5551 = vadd.f32 %v5156, 1.0
      %v5552 = vadd.f32 %v5158, 1.0
      %v5553 = vadd.f32 %v5160, 1.0
      %v5554 = vadd.f32 %v5162, 1.0
      %v5555 = vadd.f32 %v5164, 1.0
      %v5556 = vadd.f32 %v5166, 1.0
      %v5557 = vadd.f32 %v5168, 1.0
      %v5558 = vadd.f32 %v5170, 1.0
      %v5559 = vadd.f32 %v5172, 1.0
      %v5560 = vadd.f32 %v5174, 1.0
      %v5561 = vadd.f32 %v5176, 1.0
      %v5562 = vadd.f32 %v5178, 1.0
      %v5563 = vadd.f32 %v5180, 1.0
      %v5564 = vadd.f32 %v5182, 1.0
      %v5565 = vadd.f32 %v5184, 1.0
      %v5566 = vadd.f32 %v5186, 1.0
      %v5567 = vadd.f32 %v5188, 1.0
      %v5568 = vadd.f32 %v5190, 1.0
      %v5569 = vadd.f32 %v5192, 1.0
      %v5570 = vadd.f32 %v5194, 1.0
      %v5571 = vadd.f32 %v5196, 1.0
      %v5572 = vadd.f32 %v5198, 1.0
      %v5573 = vadd.f32 %v5200, 1.0
      %v5574 = vadd.f32 %v5202, 1.0
      %v5575 = vadd.f32 %v5204, 1.0
      %v5576 = vadd.f32 %v5206, 1.0
      %v5577 = vadd.f32 %v5208, 1.0
      %v5578 = vadd.f32 %v5210, 1.0
      %v5579 = vadd.f32 %v5212, 1.0
      %v5580 = vadd.f32 %v5214, 1.0
      %v5581 = vadd.f32 %v5216, 1.0
      %v5582 = vadd.f32 %v5218, 1.0
      %v5583 = vadd.f32 %v5220, 1.0
      %v5584 = vadd.f32 %v5222, 1.0
      %v5585 = vadd.f32 %v5224, 1.0
      %v5586 = vadd.f32 %v5226, 1.0
      %v5587 = vadd.f32 %v5228, 1.0
      %v5588 = vadd.f32 %v5230, 1.0
      %v5589 = vadd.f32 %v5232, 1.0
      %v5590 = vadd.f32 %v5234, 1.0
      %v5591 = vadd.f32 %v5236, 1.0
      %v5592 = vadd.f32 %v5238, 1.0
      %v5593 = vadd.f32 %v5240, 1.0
      %v5594 = vadd.f32 %v5242, 1.0
      %v5595 = vadd.f32 %v5244, 1.0
      %v5596 = vadd.f32 %v5246, 1.0
      %v5597 = vadd.f32 %v5248, 1.0
      %v5598 = vadd.f32 %v5250, 1.0
      %v5599 = vadd.f32 %v5252, 1.0
      %v5600 = vadd.f32 %v5254, 1.0
      %v5601 = vadd.f32 %v5256, 1.0
      %v5602 = vadd.f32 %v5258, 1.0
      %v5603 = vadd.f32 %v5260, 1.0
      %v5604 = vadd.f32 %v5262, 1.0
      %v5605 = vadd.f32 %v5264, 1.0
      %v5606 = vadd.f32 %v5266, 1.0
      %v5607 = vadd.f32 %v5268, 1.0
      %v5608 = vadd.f32 %v5270, 1.0
      %v5609 = vadd.f32 %v5272, 1.0
      %v5610 = vadd.f32 %v5274, 1.0
      %v5611 = vadd.f32 %v5276, 1.0
      %v5612 = vadd.f32 %v5278, 1.0
      %v5613 = vadd.f32 %v5280, 1.0
      %v5614 = vadd.f32 %v5282, 1.0
      %v5615 = vadd.f32 %v5284, 1.0
      %v5616 = vadd.f32 %v5286, 1.0
      %v5617 = vadd.f32 %v5288, 1.0
      %v5618 = vadd.f32 %v5290, 1.0
      %v5619 = vadd.f32 %v5292, 1.0
      %v5620 = vadd.f32 %v5294, 1.0
      %v5621 = vadd.f32 %v5296, 1.0
      %v5622 = vadd.f32 %v5298, 1.0
      %v5623 = vadd.f32 %v5300, 1.0
      %v5624 = vadd.f32 %v5302, 1.0
      %v5625 = vadd.f32 %v5304, 1.0
      %v5626 = vadd.f32 %v5306, 1.0
      %v5627 = vadd.f32 %v5308, 1.0
      %v5628 = vadd.f32 %v5310, 1.0
      %v5629 = vadd.f32 %v5312, 1.0
      %v5630 = vadd.f32 %v5314, 1.0
      %v5631 = vadd.f32 %v5316, 1.0
      %v5632 = vadd.f32 %v5318, 1.0
      %v5633 = vadd.f32 %v5320, 1.0
      %v5634 = vadd.f32 %v5322, 1.0
      %v5635 = vadd.f32 %v5324, 1.0
      %v5636 = vadd.f32 %v5326, 1.0
      %v5637 = vadd.f32 %v5328, 1.0
      %v5638 = vadd.f32 %v5330, 1.0
      %v5639 = vadd.f32 %v5332, 1.0
      %v5640 = vadd.f32 %v5334, 1.0
      %v5641 = vadd.f32 %v5336, 1.0
      %v5642 = vadd.f32 %v5338, 1.0
      %v5643 = vadd.f32 %v5340, 1.0
      %v5644 = vadd.f32 %v5342, 1.0
      %v5645 = vadd.f32 %v5344, 1.0
      %v5646 = vadd.f32 %v5346, 1.0
      %v5647 = vadd.f32 %v5348, 1.0
      %v5648 = vadd.f32 %v5350, 1.0
      %v5649 = vadd.f32 %v5352, 1.0
      %v5650 = vadd.f32 %v5354, 1.0
      %v5651 = vadd.f32 %v5356, 1.0
      %v5652 = vadd.f32 %v5358, 1.0
      %v5653 = vadd.f32 %v5360, 1.0
      %v5654 = vadd.f32 %v5362, 1.0
      %v5655 = vadd.f32 %v5364, 1.0
      %v5656 = vadd.f32 %v5366, 1.0
      %v5657 = vadd.f32 %v5368, 1.0
      %v5658 = vadd.f32 %v5370, 1.0
      %v5659 = vadd.f32 %v5372, 1.0
      %v5660 = vadd.f32 %v5374, 1.0
      %v5661 = vadd.f32 %v5376, 1.0
      %v5662 = vadd.f32 %v5378, 1.0
      %v5663 = vadd.f32 %v5380, 1.0
      %v5664 = vadd.f32 %v5382, 1.0
      %v5665 = vadd.f32 %v5384, 1.0
      %v5666 = vadd.f32 %v5386, 1.0
      %v5667 = vadd.f32 %v5388, 1.0
      %v5668 = vadd.f32 %v5390, 1.0
      %v5669 = vadd.f32 %v5392, 1.0
      %v5670 = vadd.f32 %v5394, 1.0
      %v5671 = vadd.f32 %v5396, 1.0
      %v5672 = vadd.f32 %v5398, 1.0
      %v5673 = vadd.f32 %v5400, 1.0
      %v5674 = vadd.f32 %v5402, 1.0
      %v5675 = vadd.f32 %v5404, 1.0
      %v5676 = vadd.f32 %v5406, 1.0
      %v5677 = vadd.f32 %v5408, 1.0
      %v5678 = vadd.f32 %v5410, 1.0
      %v5679 = vadd.f32 %v5412, 1.0
      %v5680 = vadd.f32 %v5414, 1.0
      %v5681 = vadd.f32 %v5416, 1.0
      %v5682 = vadd.f32 %v5418, 1.0
      %v5683 = vadd.f32 %v5420, 1.0
      %v5684 = vadd.f32 %v5422, 1.0
      %v5685 = vadd.f32 %v5424, 1.0
      %v5686 = vadd.f32 %v5426, 1.0
      %v5687 = vadd.f32 %v5428, 1.0
      %v5688 = vadd.f32 %v5430, 1.0
      %v5689 = vadd.f32 %v5432, 1.0
      %v5690 = vadd.f32 %v5434, 1.0
      %v5691 = vadd.f32 %v5436, 1.0
      %v5692 = vadd.f32 %v5438, 1.0
      %v5693 = vadd.f32 %v5440, 1.0
      %v5694 = vadd.f32 %v5442, 1.0
      %v5695 = vadd.f32 %v5444, 1.0
      %v5696 = vadd.f32 %v5446, 1.0
      %v5697 = vadd.f32 %v5448, 1.0
      %v5698 = vadd.f32 %v5450, 1.0
      %v5699 = vadd.f32 %v5452, 1.0
      %v5700 = vadd.f32 %v5454, 1.0
      %v5701 = vadd.f32 %v5456, 1.0
      %v5702 = vadd.f32 %v5458, 1.0
      %v5703 = vadd.f32 %v5460, 1.0
      %v5704 = vadd.f32 %v5462, 1.0
      %v5705 = vadd.f32 %v5464, 1.0
      %v5706 = vadd.f32 %v5466, 1.0
      %v5707 = vadd.f32 %v5468, 1.0
      %v5708 = vadd.f32 %v5470, 1.0
      %v5709 = vadd.f32 %v5472, 1.0
      %v5710 = vadd.f32 %v5474, 1.0
      %v5711 = vadd.f32 %v5476, 1.0
      %v5712 = vadd.f32 %v5478, 1.0
      %v5713 = vadd.f32 %v5480, 1.0
      %v5714 = vadd.f32 %v5482, 1.0
      %v5715 = vadd.f32 %v5484, 1.0
      %v5716 = vadd.f32 %v5486, 1.0
      %v5717 = vadd.f32 %v5488, 1.0
      %v5718 = vadd.f32 %v5490, 1.0
      %v5719 = vadd.f32 %v5492, 1.0
      %v5720 = vadd.f32 %v5494, 1.0
      %v5721 = vadd.f32 %v5496, 1.0
      %v5722 = vadd.f32 %v5498, 1.0
      %v5723 = vrcp.pop %v5499
      %v5724 = vmul.f32 1.0, %v5723
      %v5725 = vrcp.pop %v5500
      %v5726 = vmul.f32 1.0, %v5725
      %v5727 = vrcp.pop %v5501
      %v5728 = vmul.f32 1.0, %v5727
      %v5729 = vrcp.pop %v5502
      %v5730 = vmul.f32 1.0, %v5729
      %v5731 = vrcp.pop %v5503
      %v5732 = vmul.f32 1.0, %v5731
      %v5733 = vrcp.pop %v5504
      %v5734 = vmul.f32 1.0, %v5733
      %v5735 = vrcp.pop %v5505
      %v5736 = vmul.f32 1.0, %v5735
      %v5737 = vrcp.pop %v5506
      %v5738 = vmul.f32 1.0, %v5737
      %v5739 = vrcp.pop %v5507
      %v5740 = vmul.f32 1.0, %v5739
      %v5741 = vrcp.pop %v5508
      %v5742 = vmul.f32 1.0, %v5741
      %v5743 = vrcp.pop %v5509
      %v5744 = vmul.f32 1.0, %v5743
      %v5745 = vrcp.pop %v5510
      %v5746 = vmul.f32 1.0, %v5745
      %v5747 = vrcp.pop %v5511
      %v5748 = vmul.f32 1.0, %v5747
      %v5749 = vrcp.pop %v5512
      %v5750 = vmul.f32 1.0, %v5749
      %v5751 = vrcp.pop %v5513
      %v5752 = vmul.f32 1.0, %v5751
      %v5753 = vrcp.pop %v5514
      %v5754 = vmul.f32 1.0, %v5753
      %v5755 = vrcp.pop %v5515
      %v5756 = vmul.f32 1.0, %v5755
      %v5757 = vrcp.pop %v5516
      %v5758 = vmul.f32 1.0, %v5757
      %v5759 = vrcp.pop %v5517
      %v5760 = vmul.f32 1.0, %v5759
      %v5761 = vrcp.pop %v5518
      %v5762 = vmul.f32 1.0, %v5761
      %v5763 = vrcp.pop %v5519
      %v5764 = vmul.f32 1.0, %v5763
      %v5765 = vrcp.pop %v5520
      %v5766 = vmul.f32 1.0, %v5765
      %v5767 = vrcp.pop %v5521
      %v5768 = vmul.f32 1.0, %v5767
      %v5769 = vrcp.pop %v5522
      %v5770 = vmul.f32 1.0, %v5769
      %v5771 = vrcp.pop %v5523
      %v5772 = vmul.f32 1.0, %v5771
      %v5773 = vrcp.pop %v5524
      %v5774 = vmul.f32 1.0, %v5773
      %v5775 = vrcp.pop %v5525
      %v5776 = vmul.f32 1.0, %v5775
      %v5777 = vrcp.pop %v5526
      %v5778 = vmul.f32 1.0, %v5777
      %v5779 = vrcp.pop %v5527
      %v5780 = vmul.f32 1.0, %v5779
      %v5781 = vrcp.pop %v5528
      %v5782 = vmul.f32 1.0, %v5781
      %v5783 = vrcp.pop %v5529
      %v5784 = vmul.f32 1.0, %v5783
      %v5785 = vrcp.pop %v5530
      %v5786 = vmul.f32 1.0, %v5785
      %v5787 = vrcp.pop %v5531
      %v5788 = vmul.f32 1.0, %v5787
      %v5789 = vrcp.pop %v5532
      %v5790 = vmul.f32 1.0, %v5789
      %v5791 = vrcp.pop %v5533
      %v5792 = vmul.f32 1.0, %v5791
      %v5793 = vrcp.pop %v5534
      %v5794 = vmul.f32 1.0, %v5793
      %v5795 = vrcp.pop %v5535
      %v5796 = vmul.f32 1.0, %v5795
      %v5797 = vrcp.pop %v5536
      %v5798 = vmul.f32 1.0, %v5797
      %v5799 = vrcp.pop %v5537
      %v5800 = vmul.f32 1.0, %v5799
      %v5801 = vrcp.pop %v5538
      %v5802 = vmul.f32 1.0, %v5801
      %v5803 = vrcp.pop %v5539
      %v5804 = vmul.f32 1.0, %v5803
      %v5805 = vrcp.pop %v5540
      %v5806 = vmul.f32 1.0, %v5805
      %v5807 = vrcp.pop %v5541
      %v5808 = vmul.f32 1.0, %v5807
      %v5809 = vrcp.pop %v5542
      %v5810 = vmul.f32 1.0, %v5809
      %v5811 = vrcp.pop %v5543
      %v5812 = vmul.f32 1.0, %v5811
      %v5813 = vrcp.pop %v5544
      %v5814 = vmul.f32 1.0, %v5813
      %v5815 = vrcp.pop %v5545
      %v5816 = vmul.f32 1.0, %v5815
      %v5817 = vrcp.pop %v5546
      %v5818 = vmul.f32 1.0, %v5817
      %v5819 = vrcp.pop %v5547
      %v5820 = vmul.f32 1.0, %v5819
      %v5821 = vrcp.pop %v5548
      %v5822 = vmul.f32 1.0, %v5821
      %v5823 = vrcp.pop %v5549
      %v5824 = vmul.f32 1.0, %v5823
      %v5825 = vrcp.pop %v5550
      %v5826 = vmul.f32 1.0, %v5825
      %v5827 = vrcp.pop %v5551
      %v5828 = vmul.f32 1.0, %v5827
      %v5829 = vrcp.pop %v5552
      %v5830 = vmul.f32 1.0, %v5829
      %v5831 = vrcp.pop %v5553
      %v5832 = vmul.f32 1.0, %v5831
      %v5833 = vrcp.pop %v5554
      %v5834 = vmul.f32 1.0, %v5833
      %v5835 = vrcp.pop %v5555
      %v5836 = vmul.f32 1.0, %v5835
      %v5837 = vrcp.pop %v5556
      %v5838 = vmul.f32 1.0, %v5837
      %v5839 = vrcp.pop %v5557
      %v5840 = vmul.f32 1.0, %v5839
      %v5841 = vrcp.pop %v5558
      %v5842 = vmul.f32 1.0, %v5841
      %v5843 = vrcp.pop %v5559
      %v5844 = vmul.f32 1.0, %v5843
      %v5845 = vrcp.pop %v5560
      %v5846 = vmul.f32 1.0, %v5845
      %v5847 = vrcp.pop %v5561
      %v5848 = vmul.f32 1.0, %v5847
      %v5849 = vrcp.pop %v5562
      %v5850 = vmul.f32 1.0, %v5849
      %v5851 = vrcp.pop %v5563
      %v5852 = vmul.f32 1.0, %v5851
      %v5853 = vrcp.pop %v5564
      %v5854 = vmul.f32 1.0, %v5853
      %v5855 = vrcp.pop %v5565
      %v5856 = vmul.f32 1.0, %v5855
      %v5857 = vrcp.pop %v5566
      %v5858 = vmul.f32 1.0, %v5857
      %v5859 = vrcp.pop %v5567
      %v5860 = vmul.f32 1.0, %v5859
      %v5861 = vrcp.pop %v5568
      %v5862 = vmul.f32 1.0, %v5861
      %v5863 = vrcp.pop %v5569
      %v5864 = vmul.f32 1.0, %v5863
      %v5865 = vrcp.pop %v5570
      %v5866 = vmul.f32 1.0, %v5865
      %v5867 = vrcp.pop %v5571
      %v5868 = vmul.f32 1.0, %v5867
      %v5869 = vrcp.pop %v5572
      %v5870 = vmul.f32 1.0, %v5869
      %v5871 = vrcp.pop %v5573
      %v5872 = vmul.f32 1.0, %v5871
      %v5873 = vrcp.pop %v5574
      %v5874 = vmul.f32 1.0, %v5873
      %v5875 = vrcp.pop %v5575
      %v5876 = vmul.f32 1.0, %v5875
      %v5877 = vrcp.pop %v5576
      %v5878 = vmul.f32 1.0, %v5877
      %v5879 = vrcp.pop %v5577
      %v5880 = vmul.f32 1.0, %v5879
      %v5881 = vrcp.pop %v5578
      %v5882 = vmul.f32 1.0, %v5881
      %v5883 = vrcp.pop %v5579
      %v5884 = vmul.f32 1.0, %v5883
      %v5885 = vrcp.pop %v5580
      %v5886 = vmul.f32 1.0, %v5885
      %v5887 = vrcp.pop %v5581
      %v5888 = vmul.f32 1.0, %v5887
      %v5889 = vrcp.pop %v5582
      %v5890 = vmul.f32 1.0, %v5889
      %v5891 = vrcp.pop %v5583
      %v5892 = vmul.f32 1.0, %v5891
      %v5893 = vrcp.pop %v5584
      %v5894 = vmul.f32 1.0, %v5893
      %v5895 = vrcp.pop %v5585
      %v5896 = vmul.f32 1.0, %v5895
      %v5897 = vrcp.pop %v5586
      %v5898 = vmul.f32 1.0, %v5897
      %v5899 = vrcp.pop %v5587
      %v5900 = vmul.f32 1.0, %v5899
      %v5901 = vrcp.pop %v5588
      %v5902 = vmul.f32 1.0, %v5901
      %v5903 = vrcp.pop %v5589
      %v5904 = vmul.f32 1.0, %v5903
      %v5905 = vrcp.pop %v5590
      %v5906 = vmul.f32 1.0, %v5905
      %v5907 = vrcp.pop %v5591
      %v5908 = vmul.f32 1.0, %v5907
      %v5909 = vrcp.pop %v5592
      %v5910 = vmul.f32 1.0, %v5909
      %v5911 = vrcp.pop %v5593
      %v5912 = vmul.f32 1.0, %v5911
      %v5913 = vrcp.pop %v5594
      %v5914 = vmul.f32 1.0, %v5913
      %v5915 = vrcp.pop %v5595
      %v5916 = vmul.f32 1.0, %v5915
      %v5917 = vrcp.pop %v5596
      %v5918 = vmul.f32 1.0, %v5917
      %v5919 = vrcp.pop %v5597
      %v5920 = vmul.f32 1.0, %v5919
      %v5921 = vrcp.pop %v5598
      %v5922 = vmul.f32 1.0, %v5921
      %v5923 = vrcp.pop %v5599
      %v5924 = vmul.f32 1.0, %v5923
      %v5925 = vrcp.pop %v5600
      %v5926 = vmul.f32 1.0, %v5925
      %v5927 = vrcp.pop %v5601
      %v5928 = vmul.f32 1.0, %v5927
      %v5929 = vrcp.pop %v5602
      %v5930 = vmul.f32 1.0, %v5929
      %v5931 = vrcp.pop %v5603
      %v5932 = vmul.f32 1.0, %v5931
      %v5933 = vrcp.pop %v5604
      %v5934 = vmul.f32 1.0, %v5933
      %v5935 = vrcp.pop %v5605
      %v5936 = vmul.f32 1.0, %v5935
      %v5937 = vrcp.pop %v5606
      %v5938 = vmul.f32 1.0, %v5937
      %v5939 = vrcp.pop %v5607
      %v5940 = vmul.f32 1.0, %v5939
      %v5941 = vrcp.pop %v5608
      %v5942 = vmul.f32 1.0, %v5941
      %v5943 = vrcp.pop %v5609
      %v5944 = vmul.f32 1.0, %v5943
      %v5945 = vrcp.pop %v5610
      %v5946 = vmul.f32 1.0, %v5945
      %v5947 = vrcp.pop %v5611
      %v5948 = vmul.f32 1.0, %v5947
      %v5949 = vrcp.pop %v5612
      %v5950 = vmul.f32 1.0, %v5949
      %v5951 = vrcp.pop %v5613
      %v5952 = vmul.f32 1.0, %v5951
      %v5953 = vrcp.pop %v5614
      %v5954 = vmul.f32 1.0, %v5953
      %v5955 = vrcp.pop %v5615
      %v5956 = vmul.f32 1.0, %v5955
      %v5957 = vrcp.pop %v5616
      %v5958 = vmul.f32 1.0, %v5957
      %v5959 = vrcp.pop %v5617
      %v5960 = vmul.f32 1.0, %v5959
      %v5961 = vrcp.pop %v5618
      %v5962 = vmul.f32 1.0, %v5961
      %v5963 = vrcp.pop %v5619
      %v5964 = vmul.f32 1.0, %v5963
      %v5965 = vrcp.pop %v5620
      %v5966 = vmul.f32 1.0, %v5965
      %v5967 = vrcp.pop %v5621
      %v5968 = vmul.f32 1.0, %v5967
      %v5969 = vrcp.pop %v5622
      %v5970 = vmul.f32 1.0, %v5969
      %v5971 = vrcp.pop %v5623
      %v5972 = vmul.f32 1.0, %v5971
      %v5973 = vrcp.pop %v5624
      %v5974 = vmul.f32 1.0, %v5973
      %v5975 = vrcp.pop %v5625
      %v5976 = vmul.f32 1.0, %v5975
      %v5977 = vrcp.pop %v5626
      %v5978 = vmul.f32 1.0, %v5977
      %v5979 = vrcp.pop %v5627
      %v5980 = vmul.f32 1.0, %v5979
      %v5981 = vrcp.pop %v5628
      %v5982 = vmul.f32 1.0, %v5981
      %v5983 = vrcp.pop %v5629
      %v5984 = vmul.f32 1.0, %v5983
      %v5985 = vrcp.pop %v5630
      %v5986 = vmul.f32 1.0, %v5985
      %v5987 = vrcp.pop %v5631
      %v5988 = vmul.f32 1.0, %v5987
      %v5989 = vrcp.pop %v5632
      %v5990 = vmul.f32 1.0, %v5989
      %v5991 = vrcp.pop %v5633
      %v5992 = vmul.f32 1.0, %v5991
      %v5993 = vrcp.pop %v5634
      %v5994 = vmul.f32 1.0, %v5993
      %v5995 = vrcp.pop %v5635
      %v5996 = vmul.f32 1.0, %v5995
      %v5997 = vrcp.pop %v5636
      %v5998 = vmul.f32 1.0, %v5997
      %v5999 = vrcp.pop %v5637
      %v6000 = vmul.f32 1.0, %v5999
      %v6001 = vrcp.pop %v5638
      %v6002 = vmul.f32 1.0, %v6001
      %v6003 = vrcp.pop %v5639
      %v6004 = vmul.f32 1.0, %v6003
      %v6005 = vrcp.pop %v5640
      %v6006 = vmul.f32 1.0, %v6005
      %v6007 = vrcp.pop %v5641
      %v6008 = vmul.f32 1.0, %v6007
      %v6009 = vrcp.pop %v5642
      %v6010 = vmul.f32 1.0, %v6009
      %v6011 = vrcp.pop %v5643
      %v6012 = vmul.f32 1.0, %v6011
      %v6013 = vrcp.pop %v5644
      %v6014 = vmul.f32 1.0, %v6013
      %v6015 = vrcp.pop %v5645
      %v6016 = vmul.f32 1.0, %v6015
      %v6017 = vrcp.pop %v5646
      %v6018 = vmul.f32 1.0, %v6017
      %v6019 = vrcp.pop %v5647
      %v6020 = vmul.f32 1.0, %v6019
      %v6021 = vrcp.pop %v5648
      %v6022 = vmul.f32 1.0, %v6021
      %v6023 = vrcp.pop %v5649
      %v6024 = vmul.f32 1.0, %v6023
      %v6025 = vrcp.pop %v5650
      %v6026 = vmul.f32 1.0, %v6025
      %v6027 = vrcp.pop %v5651
      %v6028 = vmul.f32 1.0, %v6027
      %v6029 = vrcp.pop %v5652
      %v6030 = vmul.f32 1.0, %v6029
      %v6031 = vrcp.pop %v5653
      %v6032 = vmul.f32 1.0, %v6031
      %v6033 = vrcp.pop %v5654
      %v6034 = vmul.f32 1.0, %v6033
      %v6035 = vrcp.pop %v5655
      %v6036 = vmul.f32 1.0, %v6035
      %v6037 = vrcp.pop %v5656
      %v6038 = vmul.f32 1.0, %v6037
      %v6039 = vrcp.pop %v5657
      %v6040 = vmul.f32 1.0, %v6039
      %v6041 = vrcp.pop %v5658
      %v6042 = vmul.f32 1.0, %v6041
      %v6043 = vrcp.pop %v5659
      %v6044 = vmul.f32 1.0, %v6043
      %v6045 = vrcp.pop %v5660
      %v6046 = vmul.f32 1.0, %v6045
      %v6047 = vrcp.pop %v5661
      %v6048 = vmul.f32 1.0, %v6047
      %v6049 = vrcp.pop %v5662
      %v6050 = vmul.f32 1.0, %v6049
      %v6051 = vrcp.pop %v5663
      %v6052 = vmul.f32 1.0, %v6051
      %v6053 = vrcp.pop %v5664
      %v6054 = vmul.f32 1.0, %v6053
      %v6055 = vrcp.pop %v5665
      %v6056 = vmul.f32 1.0, %v6055
      %v6057 = vrcp.pop %v5666
      %v6058 = vmul.f32 1.0, %v6057
      %v6059 = vrcp.pop %v5667
      %v6060 = vmul.f32 1.0, %v6059
      %v6061 = vrcp.pop %v5668
      %v6062 = vmul.f32 1.0, %v6061
      %v6063 = vrcp.pop %v5669
      %v6064 = vmul.f32 1.0, %v6063
      %v6065 = vrcp.pop %v5670
      %v6066 = vmul.f32 1.0, %v6065
      %v6067 = vrcp.pop %v5671
      %v6068 = vmul.f32 1.0, %v6067
      %v6069 = vrcp.pop %v5672
      %v6070 = vmul.f32 1.0, %v6069
      %v6071 = vrcp.pop %v5673
      %v6072 = vmul.f32 1.0, %v6071
      %v6073 = vrcp.pop %v5674
      %v6074 = vmul.f32 1.0, %v6073
      %v6075 = vrcp.pop %v5675
      %v6076 = vmul.f32 1.0, %v6075
      %v6077 = vrcp.pop %v5676
      %v6078 = vmul.f32 1.0, %v6077
      %v6079 = vrcp.pop %v5677
      %v6080 = vmul.f32 1.0, %v6079
      %v6081 = vrcp.pop %v5678
      %v6082 = vmul.f32 1.0, %v6081
      %v6083 = vrcp.pop %v5679
      %v6084 = vmul.f32 1.0, %v6083
      %v6085 = vrcp.pop %v5680
      %v6086 = vmul.f32 1.0, %v6085
      %v6087 = vrcp.pop %v5681
      %v6088 = vmul.f32 1.0, %v6087
      %v6089 = vrcp.pop %v5682
      %v6090 = vmul.f32 1.0, %v6089
      %v6091 = vrcp.pop %v5683
      %v6092 = vmul.f32 1.0, %v6091
      %v6093 = vrcp.pop %v5684
      %v6094 = vmul.f32 1.0, %v6093
      %v6095 = vrcp.pop %v5685
      %v6096 = vmul.f32 1.0, %v6095
      %v6097 = vrcp.pop %v5686
      %v6098 = vmul.f32 1.0, %v6097
      %v6099 = vrcp.pop %v5687
      %v6100 = vmul.f32 1.0, %v6099
      %v6101 = vrcp.pop %v5688
      %v6102 = vmul.f32 1.0, %v6101
      %v6103 = vrcp.pop %v5689
      %v6104 = vmul.f32 1.0, %v6103
      %v6105 = vrcp.pop %v5690
      %v6106 = vmul.f32 1.0, %v6105
      %v6107 = vrcp.pop %v5691
      %v6108 = vmul.f32 1.0, %v6107
      %v6109 = vrcp.pop %v5692
      %v6110 = vmul.f32 1.0, %v6109
      %v6111 = vrcp.pop %v5693
      %v6112 = vmul.f32 1.0, %v6111
      %v6113 = vrcp.pop %v5694
      %v6114 = vmul.f32 1.0, %v6113
      %v6115 = vrcp.pop %v5695
      %v6116 = vmul.f32 1.0, %v6115
      %v6117 = vrcp.pop %v5696
      %v6118 = vmul.f32 1.0, %v6117
      %v6119 = vrcp.pop %v5697
      %v6120 = vmul.f32 1.0, %v6119
      %v6121 = vrcp.pop %v5698
      %v6122 = vmul.f32 1.0, %v6121
      %v6123 = vrcp.pop %v5699
      %v6124 = vmul.f32 1.0, %v6123
      %v6125 = vrcp.pop %v5700
      %v6126 = vmul.f32 1.0, %v6125
      %v6127 = vrcp.pop %v5701
      %v6128 = vmul.f32 1.0, %v6127
      %v6129 = vrcp.pop %v5702
      %v6130 = vmul.f32 1.0, %v6129
      %v6131 = vrcp.pop %v5703
      %v6132 = vmul.f32 1.0, %v6131
      %v6133 = vrcp.pop %v5704
      %v6134 = vmul.f32 1.0, %v6133
      %v6135 = vrcp.pop %v5705
      %v6136 = vmul.f32 1.0, %v6135
      %v6137 = vrcp.pop %v5706
      %v6138 = vmul.f32 1.0, %v6137
      %v6139 = vrcp.pop %v5707
      %v6140 = vmul.f32 1.0, %v6139
      %v6141 = vrcp.pop %v5708
      %v6142 = vmul.f32 1.0, %v6141
      %v6143 = vrcp.pop %v5709
      %v6144 = vmul.f32 1.0, %v6143
      %v6145 = vrcp.pop %v5710
      %v6146 = vmul.f32 1.0, %v6145
      %v6147 = vrcp.pop %v5711
      %v6148 = vmul.f32 1.0, %v6147
      %v6149 = vrcp.pop %v5712
      %v6150 = vmul.f32 1.0, %v6149
      %v6151 = vrcp.pop %v5713
      %v6152 = vmul.f32 1.0, %v6151
      %v6153 = vrcp.pop %v5714
      %v6154 = vmul.f32 1.0, %v6153
      %v6155 = vrcp.pop %v5715
      %v6156 = vmul.f32 1.0, %v6155
      %v6157 = vrcp.pop %v5716
      %v6158 = vmul.f32 1.0, %v6157
      %v6159 = vrcp.pop %v5717
      %v6160 = vmul.f32 1.0, %v6159
      %v6161 = vrcp.pop %v5718
      %v6162 = vmul.f32 1.0, %v6161
      %v6163 = vrcp.pop %v5719
      %v6164 = vmul.f32 1.0, %v6163
      %v6165 = vrcp.pop %v5720
      %v6166 = vmul.f32 1.0, %v6165
      %v6167 = vrcp.pop %v5721
      %v6168 = vmul.f32 1.0, %v6167
      %v6169 = vrcp.pop %v5722
      %v6170 = vmul.f32 1.0, %v6169
      %6171 = vst [vmem:[%s555] sm:$0xff] %v5724
      %6172 = vst [vmem:[%s555 + $0x8] sm:$0xff] %v5726
      %6173 = vst [vmem:[%s555 + $0x10] sm:$0xff] %v5728
      %6174 = vst [vmem:[%s555 + $0x18] sm:$0xff] %v5730
      %6175 = vst [vmem:[%s555 + $0x20] sm:$0xff] %v5732
      %6176 = vst [vmem:[%s555 + $0x28] sm:$0xff] %v5734
      %6177 = vst [vmem:[%s555 + $0x30] sm:$0xff] %v5736
      %6178 = vst [vmem:[%s555 + $0x38] sm:$0xff] %v5738
      %6179 = vst [vmem:[%s555 + $0x40] sm:$0xff] %v5740
      %6180 = vst [vmem:[%s555 + $0x48] sm:$0xff] %v5742
      %6181 = vst [vmem:[%s555 + $0x50] sm:$0xff] %v5744
      %6182 = vst [vmem:[%s555 + $0x58] sm:$0xff] %v5746
      %6183 = vst [vmem:[%s555 + $0x60] sm:$0xff] %v5748
      %6184 = vst [vmem:[%s555 + $0x68] sm:$0xff] %v5750
      %6185 = vst [vmem:[%s555 + $0x70] sm:$0xff] %v5752
      %6186 = vst [vmem:[%s555 + $0x78] sm:$0xff] %v5754
      %6187 = vst [vmem:[%s555 + $0x80] sm:$0xff] %v5756
      %6188 = vst [vmem:[%s555 + $0x88] sm:$0xff] %v5758
      %6189 = vst [vmem:[%s555 + $0x90] sm:$0xff] %v5760
      %6190 = vst [vmem:[%s555 + $0x98] sm:$0xff] %v5762
      %6191 = vst [vmem:[%s555 + $0xa0] sm:$0xff] %v5764
      %6192 = vst [vmem:[%s555 + $0xa8] sm:$0xff] %v5766
      %6193 = vst [vmem:[%s555 + $0xb0] sm:$0xff] %v5768
      %6194 = vst [vmem:[%s555 + $0xb8] sm:$0xff] %v5770
      %6195 = vst [vmem:[%s555 + $0xc0] sm:$0xff] %v5772
      %6196 = vst [vmem:[%s555 + $0xc8] sm:$0xff] %v5774
      %6197 = vst [vmem:[%s555 + $0xd0] sm:$0xff] %v5776
      %6198 = vst [vmem:[%s555 + $0xd8] sm:$0xff] %v5778
      %6199 = vst [vmem:[%s555 + $0xe0] sm:$0xff] %v5780
      %6200 = vst [vmem:[%s555 + $0xe8] sm:$0xff] %v5782
      %6201 = vst [vmem:[%s555 + $0xf0] sm:$0xff] %v5784
      %6202 = vst [vmem:[%s555 + $0xf8] sm:$0xff] %v5786
      %6203 = vst [vmem:[%s555 + $0x100] sm:$0xff] %v5788
      %6204 = vst [vmem:[%s555 + $0x108] sm:$0xff] %v5790
      %6205 = vst [vmem:[%s555 + $0x110] sm:$0xff] %v5792
      %6206 = vst [vmem:[%s555 + $0x118] sm:$0xff] %v5794
      %6207 = vst [vmem:[%s555 + $0x120] sm:$0xff] %v5796
      %6208 = vst [vmem:[%s555 + $0x128] sm:$0xff] %v5798
      %6209 = vst [vmem:[%s555 + $0x130] sm:$0xff] %v5800
      %6210 = vst [vmem:[%s555 + $0x138] sm:$0xff] %v5802
      %6211 = vst [vmem:[%s555 + $0x140] sm:$0xff] %v5804
      %6212 = vst [vmem:[%s555 + $0x148] sm:$0xff] %v5806
      %6213 = vst [vmem:[%s555 + $0x150] sm:$0xff] %v5808
      %6214 = vst [vmem:[%s555 + $0x158] sm:$0xff] %v5810
      %6215 = vst [vmem:[%s555 + $0x160] sm:$0xff] %v5812
      %6216 = vst [vmem:[%s555 + $0x168] sm:$0xff] %v5814
      %6217 = vst [vmem:[%s555 + $0x170] sm:$0xff] %v5816
      %6218 = vst [vmem:[%s555 + $0x178] sm:$0xff] %v5818
      %6219 = vst [vmem:[%s555 + $0x180] sm:$0xff] %v5820
      %6220 = vst [vmem:[%s555 + $0x188] sm:$0xff] %v5822
      %6221 = vst [vmem:[%s555 + $0x190] sm:$0xff] %v5824
      %6222 = vst [vmem:[%s555 + $0x198] sm:$0xff] %v5826
      %6223 = vst [vmem:[%s555 + $0x1a0] sm:$0xff] %v5828
      %6224 = vst [vmem:[%s555 + $0x1a8] sm:$0xff] %v5830
      %6225 = vst [vmem:[%s555 + $0x1b0] sm:$0xff] %v5832
      %6226 = vst [vmem:[%s555 + $0x1b8] sm:$0xff] %v5834
      %6227 = vst [vmem:[%s555 + $0x1c0] sm:$0xff] %v5836
      %6228 = vst [vmem:[%s555 + $0x1c8] sm:$0xff] %v5838
      %6229 = vst [vmem:[%s555 + $0x1d0] sm:$0xff] %v5840
      %6230 = vst [vmem:[%s555 + $0x1d8] sm:$0xff] %v5842
      %6231 = vst [vmem:[%s555 + $0x1e0] sm:$0xff] %v5844
      %6232 = vst [vmem:[%s555 + $0x1e8] sm:$0xff] %v5846
      %6233 = vst [vmem:[%s555 + $0x1f0] sm:$0xff] %v5848
      %6234 = vst [vmem:[%s555 + $0x1f8] sm:$0xff] %v5850
      %6235 = vst [vmem:[%s555 + $0x200] sm:$0xff] %v5852
      %6236 = vst [vmem:[%s555 + $0x208] sm:$0xff] %v5854
      %6237 = vst [vmem:[%s555 + $0x210] sm:$0xff] %v5856
      %6238 = vst [vmem:[%s555 + $0x218] sm:$0xff] %v5858
      %6239 = vst [vmem:[%s555 + $0x220] sm:$0xff] %v5860
      %6240 = vst [vmem:[%s555 + $0x228] sm:$0xff] %v5862
      %6241 = vst [vmem:[%s555 + $0x230] sm:$0xff] %v5864
      %6242 = vst [vmem:[%s555 + $0x238] sm:$0xff] %v5866
      %6243 = vst [vmem:[%s555 + $0x240] sm:$0xff] %v5868
      %6244 = vst [vmem:[%s555 + $0x248] sm:$0xff] %v5870
      %6245 = vst [vmem:[%s555 + $0x250] sm:$0xff] %v5872
      %6246 = vst [vmem:[%s555 + $0x258] sm:$0xff] %v5874
      %6247 = vst [vmem:[%s555 + $0x260] sm:$0xff] %v5876
      %6248 = vst [vmem:[%s555 + $0x268] sm:$0xff] %v5878
      %6249 = vst [vmem:[%s555 + $0x270] sm:$0xff] %v5880
      %6250 = vst [vmem:[%s555 + $0x278] sm:$0xff] %v5882
      %6251 = vst [vmem:[%s555 + $0x280] sm:$0xff] %v5884
      %6252 = vst [vmem:[%s555 + $0x288] sm:$0xff] %v5886
      %6253 = vst [vmem:[%s555 + $0x290] sm:$0xff] %v5888
      %6254 = vst [vmem:[%s555 + $0x298] sm:$0xff] %v5890
      %6255 = vst [vmem:[%s555 + $0x2a0] sm:$0xff] %v5892
      %6256 = vst [vmem:[%s555 + $0x2a8] sm:$0xff] %v5894
      %6257 = vst [vmem:[%s555 + $0x2b0] sm:$0xff] %v5896
      %6258 = vst [vmem:[%s555 + $0x2b8] sm:$0xff] %v5898
      %6259 = vst [vmem:[%s555 + $0x2c0] sm:$0xff] %v5900
      %6260 = vst [vmem:[%s555 + $0x2c8] sm:$0xff] %v5902
      %6261 = vst [vmem:[%s555 + $0x2d0] sm:$0xff] %v5904
      %6262 = vst [vmem:[%s555 + $0x2d8] sm:$0xff] %v5906
      %6263 = vst [vmem:[%s555 + $0x2e0] sm:$0xff] %v5908
      %6264 = vst [vmem:[%s555 + $0x2e8] sm:$0xff] %v5910
      %6265 = vst [vmem:[%s555 + $0x2f0] sm:$0xff] %v5912
      %6266 = vst [vmem:[%s555 + $0x2f8] sm:$0xff] %v5914
      %6267 = vst [vmem:[%s555 + $0x300] sm:$0xff] %v5916
      %6268 = vst [vmem:[%s555 + $0x308] sm:$0xff] %v5918
      %6269 = vst [vmem:[%s555 + $0x310] sm:$0xff] %v5920
      %6270 = vst [vmem:[%s555 + $0x318] sm:$0xff] %v5922
      %6271 = vst [vmem:[%s555 + $0x320] sm:$0xff] %v5924
      %6272 = vst [vmem:[%s555 + $0x328] sm:$0xff] %v5926
      %6273 = vst [vmem:[%s555 + $0x330] sm:$0xff] %v5928
      %6274 = vst [vmem:[%s555 + $0x338] sm:$0xff] %v5930
      %6275 = vst [vmem:[%s555 + $0x340] sm:$0xff] %v5932
      %6276 = vst [vmem:[%s555 + $0x348] sm:$0xff] %v5934
      %6277 = vst [vmem:[%s555 + $0x350] sm:$0xff] %v5936
      %6278 = vst [vmem:[%s555 + $0x358] sm:$0xff] %v5938
      %6279 = vst [vmem:[%s555 + $0x360] sm:$0xff] %v5940
      %6280 = vst [vmem:[%s555 + $0x368] sm:$0xff] %v5942
      %6281 = vst [vmem:[%s555 + $0x370] sm:$0xff] %v5944
      %6282 = vst [vmem:[%s555 + $0x378] sm:$0xff] %v5946
      %6283 = vst [vmem:[%s555 + $0x380] sm:$0xff] %v5948
      %6284 = vst [vmem:[%s555 + $0x388] sm:$0xff] %v5950
      %6285 = vst [vmem:[%s555 + $0x390] sm:$0xff] %v5952
      %6286 = vst [vmem:[%s555 + $0x398] sm:$0xff] %v5954
      %6287 = vst [vmem:[%s555 + $0x3a0] sm:$0xff] %v5956
      %6288 = vst [vmem:[%s555 + $0x3a8] sm:$0xff] %v5958
      %6289 = vst [vmem:[%s555 + $0x3b0] sm:$0xff] %v5960
      %6290 = vst [vmem:[%s555 + $0x3b8] sm:$0xff] %v5962
      %6291 = vst [vmem:[%s555 + $0x3c0] sm:$0xff] %v5964
      %6292 = vst [vmem:[%s555 + $0x3c8] sm:$0xff] %v5966
      %6293 = vst [vmem:[%s555 + $0x3d0] sm:$0xff] %v5968
      %6294 = vst [vmem:[%s555 + $0x3d8] sm:$0xff] %v5970
      %6295 = vst [vmem:[%s555 + $0x3e0] sm:$0xff] %v5972
      %6296 = vst [vmem:[%s555 + $0x3e8] sm:$0xff] %v5974
      %6297 = vst [vmem:[%s555 + $0x3f0] sm:$0xff] %v5976
      %6298 = vst [vmem:[%s555 + $0x3f8] sm:$0xff] %v5978
      %6299 = vst [vmem:[%s555 + $0x400] sm:$0xff] %v5980
      %6300 = vst [vmem:[%s555 + $0x408] sm:$0xff] %v5982
      %6301 = vst [vmem:[%s555 + $0x410] sm:$0xff] %v5984
      %6302 = vst [vmem:[%s555 + $0x418] sm:$0xff] %v5986
      %6303 = vst [vmem:[%s555 + $0x420] sm:$0xff] %v5988
      %6304 = vst [vmem:[%s555 + $0x428] sm:$0xff] %v5990
      %6305 = vst [vmem:[%s555 + $0x430] sm:$0xff] %v5992
      %6306 = vst [vmem:[%s555 + $0x438] sm:$0xff] %v5994
      %6307 = vst [vmem:[%s555 + $0x440] sm:$0xff] %v5996
      %6308 = vst [vmem:[%s555 + $0x448] sm:$0xff] %v5998
      %6309 = vst [vmem:[%s555 + $0x450] sm:$0xff] %v6000
      %6310 = vst [vmem:[%s555 + $0x458] sm:$0xff] %v6002
      %6311 = vst [vmem:[%s555 + $0x460] sm:$0xff] %v6004
      %6312 = vst [vmem:[%s555 + $0x468] sm:$0xff] %v6006
      %6313 = vst [vmem:[%s555 + $0x470] sm:$0xff] %v6008
      %6314 = vst [vmem:[%s555 + $0x478] sm:$0xff] %v6010
      %6315 = vst [vmem:[%s555 + $0x480] sm:$0xff] %v6012
      %6316 = vst [vmem:[%s555 + $0x488] sm:$0xff] %v6014
      %6317 = vst [vmem:[%s555 + $0x490] sm:$0xff] %v6016
      %6318 = vst [vmem:[%s555 + $0x498] sm:$0xff] %v6018
      %6319 = vst [vmem:[%s555 + $0x4a0] sm:$0xff] %v6020
      %6320 = vst [vmem:[%s555 + $0x4a8] sm:$0xff] %v6022
      %6321 = vst [vmem:[%s555 + $0x4b0] sm:$0xff] %v6024
      %6322 = vst [vmem:[%s555 + $0x4b8] sm:$0xff] %v6026
      %6323 = vst [vmem:[%s555 + $0x4c0] sm:$0xff] %v6028
      %6324 = vst [vmem:[%s555 + $0x4c8] sm:$0xff] %v6030
      %6325 = vst [vmem:[%s555 + $0x4d0] sm:$0xff] %v6032
      %6326 = vst [vmem:[%s555 + $0x4d8] sm:$0xff] %v6034
      %6327 = vst [vmem:[%s555 + $0x4e0] sm:$0xff] %v6036
      %6328 = vst [vmem:[%s555 + $0x4e8] sm:$0xff] %v6038
      %6329 = vst [vmem:[%s555 + $0x4f0] sm:$0xff] %v6040
      %6330 = vst [vmem:[%s555 + $0x4f8] sm:$0xff] %v6042
      %6331 = vst [vmem:[%s555 + $0x500] sm:$0xff] %v6044
      %6332 = vst [vmem:[%s555 + $0x508] sm:$0xff] %v6046
      %6333 = vst [vmem:[%s555 + $0x510] sm:$0xff] %v6048
      %6334 = vst [vmem:[%s555 + $0x518] sm:$0xff] %v6050
      %6335 = vst [vmem:[%s555 + $0x520] sm:$0xff] %v6052
      %6336 = vst [vmem:[%s555 + $0x528] sm:$0xff] %v6054
      %6337 = vst [vmem:[%s555 + $0x530] sm:$0xff] %v6056
      %6338 = vst [vmem:[%s555 + $0x538] sm:$0xff] %v6058
      %6339 = vst [vmem:[%s555 + $0x540] sm:$0xff] %v6060
      %6340 = vst [vmem:[%s555 + $0x548] sm:$0xff] %v6062
      %6341 = vst [vmem:[%s555 + $0x550] sm:$0xff] %v6064
      %6342 = vst [vmem:[%s555 + $0x558] sm:$0xff] %v6066
      %6343 = vst [vmem:[%s555 + $0x560] sm:$0xff] %v6068
      %6344 = vst [vmem:[%s555 + $0x568] sm:$0xff] %v6070
      %6345 = vst [vmem:[%s555 + $0x570] sm:$0xff] %v6072
      %6346 = vst [vmem:[%s555 + $0x578] sm:$0xff] %v6074
      %6347 = vst [vmem:[%s555 + $0x580] sm:$0xff] %v6076
      %6348 = vst [vmem:[%s555 + $0x588] sm:$0xff] %v6078
      %6349 = vst [vmem:[%s555 + $0x590] sm:$0xff] %v6080
      %6350 = vst [vmem:[%s555 + $0x598] sm:$0xff] %v6082
      %6351 = vst [vmem:[%s555 + $0x5a0] sm:$0xff] %v6084
      %6352 = vst [vmem:[%s555 + $0x5a8] sm:$0xff] %v6086
      %6353 = vst [vmem:[%s555 + $0x5b0] sm:$0xff] %v6088
      %6354 = vst [vmem:[%s555 + $0x5b8] sm:$0xff] %v6090
      %6355 = vst [vmem:[%s555 + $0x5c0] sm:$0xff] %v6092
      %6356 = vst [vmem:[%s555 + $0x5c8] sm:$0xff] %v6094
      %6357 = vst [vmem:[%s555 + $0x5d0] sm:$0xff] %v6096
      %6358 = vst [vmem:[%s555 + $0x5d8] sm:$0xff] %v6098
      %6359 = vst [vmem:[%s555 + $0x5e0] sm:$0xff] %v6100
      %6360 = vst [vmem:[%s555 + $0x5e8] sm:$0xff] %v6102
      %6361 = vst [vmem:[%s555 + $0x5f0] sm:$0xff] %v6104
      %6362 = vst [vmem:[%s555 + $0x5f8] sm:$0xff] %v6106
      %6363 = vst [vmem:[%s555 + $0x600] sm:$0xff] %v6108
      %6364 = vst [vmem:[%s555 + $0x608] sm:$0xff] %v6110
      %6365 = vst [vmem:[%s555 + $0x610] sm:$0xff] %v6112
      %6366 = vst [vmem:[%s555 + $0x618] sm:$0xff] %v6114
      %6367 = vst [vmem:[%s555 + $0x620] sm:$0xff] %v6116
      %6368 = vst [vmem:[%s555 + $0x628] sm:$0xff] %v6118
      %6369 = vst [vmem:[%s555 + $0x630] sm:$0xff] %v6120
      %6370 = vst [vmem:[%s555 + $0x638] sm:$0xff] %v6122
      %6371 = vst [vmem:[%s555 + $0x640] sm:$0xff] %v6124
      %6372 = vst [vmem:[%s555 + $0x648] sm:$0xff] %v6126
      %6373 = vst [vmem:[%s555 + $0x650] sm:$0xff] %v6128
      %6374 = vst [vmem:[%s555 + $0x658] sm:$0xff] %v6130
      %6375 = vst [vmem:[%s555 + $0x660] sm:$0xff] %v6132
      %6376 = vst [vmem:[%s555 + $0x668] sm:$0xff] %v6134
      %6377 = vst [vmem:[%s555 + $0x670] sm:$0xff] %v6136
      %6378 = vst [vmem:[%s555 + $0x678] sm:$0xff] %v6138
      %6379 = vst [vmem:[%s555 + $0x680] sm:$0xff] %v6140
      %6380 = vst [vmem:[%s555 + $0x688] sm:$0xff] %v6142
      %6381 = vst [vmem:[%s555 + $0x690] sm:$0xff] %v6144
      %6382 = vst [vmem:[%s555 + $0x698] sm:$0xff] %v6146
      %6383 = vst [vmem:[%s555 + $0x6a0] sm:$0xff] %v6148
      %6384 = vst [vmem:[%s555 + $0x6a8] sm:$0xff] %v6150
      %6385 = vst [vmem:[%s555 + $0x6b0] sm:$0xff] %v6152
      %6386 = vst [vmem:[%s555 + $0x6b8] sm:$0xff] %v6154
      %6387 = vst [vmem:[%s555 + $0x6c0] sm:$0xff] %v6156
      %6388 = vst [vmem:[%s555 + $0x6c8] sm:$0xff] %v6158
      %6389 = vst [vmem:[%s555 + $0x6d0] sm:$0xff] %v6160
      %6390 = vst [vmem:[%s555 + $0x6d8] sm:$0xff] %v6162
      %6391 = vst [vmem:[%s555 + $0x6e0] sm:$0xff] %v6164
      %6392 = vst [vmem:[%s555 + $0x6e8] sm:$0xff] %v6166
      %6393 = vst [vmem:[%s555 + $0x6f0] sm:$0xff] %v6168
      %6394 = vst [vmem:[%s555 + $0x6f8] sm:$0xff] %v6170
      %s6395 = smul.u32 32, %s28
      %p6396 = scmp.lt.s32.totalorder %s6395, 63
      %s6397 = scalar_select %p6396, %s6395, 63
      %s6398 = smul.addr %s6397, 7
      %s6399 = smul.addr %s6398, 8
      %s6400 = scalar_lea.vmem %s17, %s6399
      // Predicated region
      $region89: #{autoencoder_forward.1} parent=87 // pred_check
        %p6401 = pneg %p408
      $region90: #{autoencoder_forward.1} parent=87 // pred_check_branch
        %6403 = sbr.rel (%p6401) target = $region92
      $region91: #{autoencoder_forward.1} parent=87 // pred_region
        %s6404 = smul.u32 32, %s28
      $region92: #{autoencoder_forward.1} parent=87 // pred_fallthru
        _
    $region88: #{autoencoder_forward.1} parent=5 // pred_fallthru
      _
    %p6405 = scmp.le.s32.totalorder 2, %s23
    // Predicated region
    $region93: #{autoencoder_forward.1} parent=5 // pred_check
      %p6406 = pneg %p6405
    $region94: #{autoencoder_forward.1} parent=5 // pred_check_branch
      %6408 = sbr.rel (%p6406) target = $region96
    $region95: #{autoencoder_forward.1} parent=5 // pred_region
      %s6409 = ssub.s32 %s23, 2
      // Predicated region
      $region97: #{autoencoder_forward.1} parent=95 // pred_check
        %p6410 = pneg %p414
      $region98: #{autoencoder_forward.1} parent=95 // pred_check_branch
        %6412 = sbr.rel (%p6410) target = $region100
      $region99: #{autoencoder_forward.1} parent=95 // pred_region
        %s6413 = smul.u32 32, %s29
        %p6414 = scmp.lt.s32.totalorder %s6413, 63
        %s6415 = scalar_select %p6414, %s6413, 63
        %s6416 = smul.addr %s6415, 7
        %s6417 = smul.addr %s6416, 8
        %s6418 = scalar_lea.vmem %s17, %s6417
      $region100: #{autoencoder_forward.1} parent=95 // pred_fallthru
        _
    $region96: #{autoencoder_forward.1} parent=5 // pred_fallthru
      _
  $region6: #{autoencoder_forward.1} parent=0 // loop_footer
    %s27 = sadd.s32 1, %s23
  $region7: #{autoencoder_forward.1} parent=0 // loop_footer_branch
    %22 = sbr.rel target = $region3
  $region8: #{autoencoder_forward.1} parent=0 // loop_exit
    _

</llo_original>
